<compile_context>
chip_gen: v5e
topology: v5e:2x2
jax: 0.10.0
libtpu: 0.0.40
codegen_flags: <defaults>
</compile_context>

<pallas_src>
import math

import jax
import jax.numpy as jnp
from jax.experimental import pallas as pl
from jax.experimental.pallas import tpu as pltpu


def _round_up(x, m):
    return ((x + m - 1) // m) * m


def _make_kernel(num_heads, head_dim, embed_dim, bt, lq, lkv, cdtype):
    E = embed_dim
    rq = bt * lq
    rk = bt * lkv
    f32 = jnp.float32
    aligned_heads = (head_dim % 128 == 0)

    def kernel(qe_ref, kv_ref, mask_ref,
               wqs_ref, wq_ref, wk_ref, wv_ref, wo_ref, evec_ref,
               w1_ref, b1_ref, w2_ref, wexp_ref, bexp_ref,
               out_ref):
        xf = qe_ref[...]                    # (rq, Qd_pad) f32, residual basis
        kvf = kv_ref[...]                   # (rk, Kd_pad) f32

        # Additive attention mask built in-kernel from the tiny per-key padding row:
        # no (rq, rk) f32 mask is DMA'd from HBM.
        pad_add = mask_ref[0:1, :]          # (1, rk): 0.0 valid / -1e30 padded key
        if bt > 1:
            rb = jax.lax.broadcasted_iota(jnp.int32, (rq, rk), 0) // lq
            cb = jax.lax.broadcasted_iota(jnp.int32, (rq, rk), 1) // lkv
            add_mask = jnp.where(rb == cb, f32(0.0), f32(-1e30)) + pad_add
        else:
            add_mask = pad_add              # broadcasts over the query rows

        # Packed (1, E) vectors (all f32).
        bqs, bq, bk, bv, bo = (evec_ref[i:i + 1, :] for i in range(5))
        ln1w, ln1b, b2, ln2w, ln2b = (evec_ref[i:i + 1, :] for i in range(5, 10))

        xc = xf.astype(cdtype)
        kvc = kvf.astype(cdtype)

        # Projections (MXU, f32 accumulation). q_shrink + 1/sqrt(head_dim) are folded
        # into wq/bq offline; no zero-padded 2E contractions anywhere.
        qres = jnp.dot(xc, wqs_ref[...], preferred_element_type=f32) + bqs    # (rq, E)
        qh = jnp.dot(xc, wq_ref[...], preferred_element_type=f32) + bq        # (rq, E)
        kh = jnp.dot(kvc, wk_ref[...], preferred_element_type=f32) + bk       # (rk, E)
        vh = jnp.dot(kvc, wv_ref[...], preferred_element_type=f32) + bv       # (rk, E)

        dims = (((1,), (1,)), ((), ()))

        if aligned_heads:
            # head_dim is lane-aligned: per-head views are free 128-aligned slices.
            khc, vhc = kh.astype(cdtype), vh.astype(cdtype)
            chunks = []
            for h in range(num_heads):
                sl = slice(h * head_dim, (h + 1) * head_dim)
                s = jax.lax.dot_general(qh[:, sl].astype(cdtype), khc[:, sl], dims,
                                        preferred_element_type=f32) + add_mask
                m = jnp.max(s, axis=-1, keepdims=True)
                p = jnp.exp(s - m)
                inv = pl.reciprocal(jnp.sum(p, axis=-1, keepdims=True), approx=True)
                chunks.append(jnp.dot(p.astype(cdtype), vhc[:, sl],
                                      preferred_element_type=f32) * inv)
            attn = jnp.concatenate(chunks, axis=-1)                            # (rq, E)
        else:
            # Small / unaligned head_dim: per-head lane masks, applied to the smaller
            # operand; softmax normalization deferred until after the PV matmul.
            lane = jax.lax.broadcasted_iota(jnp.int32, (1, E), 1)
            attn = jnp.zeros((rq, E), f32)
            if rq <= rk:
                khc, vhc = kh.astype(cdtype), vh.astype(cdtype)
            for h in range(num_heads):                       # static loop, few heads
                lo = h * head_dim
                hsel = ((lane >= lo) & (lane < lo + head_dim)).astype(f32)     # (1, E)
                if rq <= rk:
                    s = jax.lax.dot_general((qh * hsel).astype(cdtype), khc, dims,
                                            preferred_element_type=f32) + add_mask
                else:
                    s = jax.lax.dot_general(qh.astype(cdtype),
                                            (kh * hsel).astype(cdtype), dims,
                                            preferred_element_type=f32) + add_mask
                m = jnp.max(s, axis=-1, keepdims=True)
                p = jnp.exp(s - m)                                             # f32
                inv = pl.reciprocal(jnp.sum(p, axis=-1, keepdims=True), approx=True)
                if rq <= rk:
                    # Mask the (rq, E) dot output (smaller than vh) and fold in 1/denom.
                    attn = attn + jnp.dot(p.astype(cdtype), vhc,
                                          preferred_element_type=f32) * (hsel * inv)
                else:
                    attn = attn + jnp.dot(p.astype(cdtype), (vh * hsel).astype(cdtype),
                                          preferred_element_type=f32) * inv

        attn = jnp.dot(attn.astype(cdtype), wo_ref[...],
                       preferred_element_type=f32) + bo                        # (rq, E)

        def layernorm(z, w, b):
            mu = jnp.mean(z, axis=-1, keepdims=True)
            c = z - mu
            var = jnp.mean(c * c, axis=-1, keepdims=True)
            return c * jax.lax.rsqrt(var + 1e-5) * w + b

        h1 = layernorm(qres + attn, ln1w, ln1b)
        hid = jnp.maximum(jnp.dot(h1.astype(cdtype), w1_ref[...],
                                  preferred_element_type=f32) + b1_ref[...], 0.0)
        mlp = jnp.dot(hid.astype(cdtype), w2_ref[...], preferred_element_type=f32) + b2
        h2 = layernorm(h1 + mlp, ln2w, ln2b)
        # gate already folded into wexp/bexp; Qd was padded to a multiple of 128 in the
        # wrapper, so this residual add + store is lane-dense (no masked vst).
        out_ref[...] = (jnp.dot(h2.astype(cdtype), wexp_ref[...],
                                preferred_element_type=f32) + bexp_ref[...] + xf)

    return kernel


def _choose_bt(B, Lq, Lkv, target_rows=128):
    """How many sequences to pack block-diagonally per grid step.

    Packing only pays off while Bt*Lq is small (score/exp work grows as Bt^2), and Bt is
    capped so that G = B // Bt >= 2 whenever B >= 2 (shards the 'parallel' axis across
    both v7x TensorCores; a no-op on v5e/v6e).
    """
    def ok(bt):
        if B % bt:
            return False
        if bt == B:
            return True                       # blocks equal full dims, always legal
        return (bt * Lq) % 8 == 0 and (bt * Lkv) % 8 == 0

    candidates = [d for d in range(1, B + 1) if ok(d)]
    bt = candidates[-1]
    for d in candidates:
        if d * Lq >= min(target_rows, B * Lq):
            bt = d
            break
    if B >= 2:
        two_step = [d for d in candidates if B // d >= 2]
        if two_step:
            bt = min(bt, max(two_step))
    return bt


def _pack_params(params, num_heads, qd_pad, kd_pad, matmul_dtype):
    """Offline weight folding/packing (affine-exact); cacheable per parameter set."""
    E = params["wq"].shape[0]
    head_dim = E // num_heads
    scale = 1.0 / math.sqrt(head_dim)

    # Fold q_shrink and the 1/sqrt(head_dim) score scale into the MHA q projection,
    # and the gate into q_expand.
    wq_f = scale * (params["wqs"] @ params["wq"])                    # (Qd, E)
    bq_f = scale * (params["bqs"] @ params["wq"] + params["bq"])     # (1, E)
    gate = params["gate"][0, 0]

    def pad_rows(w, rows):
        return jnp.pad(w, ((0, rows - w.shape[0]), (0, 0)))

    def pad_cols(w, cols):
        return jnp.pad(w, ((0, 0), (0, cols - w.shape[1])))

    cd = matmul_dtype
    return {
        "wqs": pad_rows(params["wqs"], qd_pad).astype(cd),           # (Qd_pad, E)
        "wq": pad_rows(wq_f, qd_pad).astype(cd),                     # (Qd_pad, E)
        "wk": pad_rows(params["wk"], kd_pad).astype(cd),             # (Kd_pad, E)
        "wv": pad_rows(params["wv"], kd_pad).astype(cd),             # (Kd_pad, E)
        "wo": params["wo"].astype(cd),                               # (E, E)
        "evec": jnp.concatenate(                                     # (10, E), f32
            [params["bqs"], bq_f, params["bk"], params["bv"], params["bo"],
             params["ln1w"], params["ln1b"], params["b2"],
             params["ln2w"], params["ln2b"]], axis=0).astype(jnp.float32),
        "w1": params["w1"].astype(cd),                               # (E, 4E)
        "b1": params["b1"].astype(jnp.float32),                      # (1, 4E)
        "w2": params["w2"].astype(cd),                               # (4E, E)
        "wexp": (gate * pad_cols(params["wexp"], qd_pad)).astype(cd),    # (E, Qd_pad)
        "bexp": (gate * pad_cols(params["bexp"], qd_pad)).astype(jnp.float32),
    }


_PACKED_ORDER = ["wqs", "wq", "wk", "wv", "wo", "evec", "w1", "b1", "w2", "wexp", "bexp"]


def _const_spec(arr, pipeline_mode):
    nd = arr.ndim
    idx = lambda g, _nd=nd: (0,) * _nd
    if pipeline_mode is None:
        return pl.BlockSpec(arr.shape, idx)
    return pl.BlockSpec(arr.shape, idx, pipeline_mode=pipeline_mode)


def cross_attention_layer(query_embeds, key_value_embeds, key_padding_mask, params,
                          num_heads, batch_block=None, matmul_dtype=jnp.bfloat16):
    B, Lq, Qd = query_embeds.shape
    _, Lkv, Kd = key_value_embeds.shape
    E = params["wq"].shape[0]
    head_dim = E // num_heads

    if batch_block is not None:
        Bt = batch_block
        if B % Bt or (Bt < B and ((Bt * Lq) % 8 or (Bt * Lkv) % 8)):
            Bt = B
    else:
        Bt = _choose_bt(B, Lq, Lkv)
    G = B // Bt
    Rq, Rk = Bt * Lq, Bt * Lkv

    # Lane-dense I/O: pad the query/key feature dims to multiples of 128 (zero rows are
    # added to the matching projection weights, so the math is unchanged).
    Qd_pad = _round_up(Qd, 128)
    Kd_pad = _round_up(Kd, 128)
    qe2 = jnp.pad(query_embeds.reshape(B * Lq, Qd).astype(jnp.float32),
                  ((0, 0), (0, Qd_pad - Qd)))
    kv2 = jnp.pad(key_value_embeds.reshape(B * Lkv, Kd).astype(jnp.float32),
                  ((0, 0), (0, Kd_pad - Kd)))

    # Tiny additive padding-mask rows; the full (Rq, Rk) mask is rebuilt in-kernel.
    # NOTE: rows whose keys are all padded produce a uniform softmax (matches the
    # PyTorch reference's behaviour).
    pad_rows = jnp.where(key_padding_mask.reshape(G, 1, Rk),
                         jnp.float32(-1e30), jnp.float32(0.0))
    pad_rows = jnp.broadcast_to(pad_rows, (G, 8, Rk)).reshape(G * 8, Rk)

    packed = _pack_params(params, num_heads, Qd_pad, Kd_pad, matmul_dtype)
    weight_args = [packed[k] for k in _PACKED_ORDER]

    kernel = _make_kernel(num_heads, head_dim, E, Bt, Lq, Lkv, matmul_dtype)
    act_specs = [
        pl.BlockSpec((Rq, Qd_pad), lambda g: (g, 0)),
        pl.BlockSpec((Rk, Kd_pad), lambda g: (g, 0)),
        pl.BlockSpec((8, Rk), lambda g: (g, 0)),
    ]
    cparams = pltpu.CompilerParams(
        dimension_semantics=("parallel",),
        vmem_limit_bytes=32 * 1024 * 1024,   # raises v5e's 16 MiB default; safe everywhere
    )
    out_shape = jax.ShapeDtypeStruct((B * Lq, Qd_pad), jnp.float32)

    # TODO(synk): for long sequences (large Lq/Lkv) add a K/V 'arbitrary' grid axis with an
    # online softmax and a query-row 'parallel' axis to bound VMEM; out of scope here.
    def run(single_buffer_weights):
        mode = pl.Buffered(1) if single_buffer_weights else None
        in_specs = act_specs + [_const_spec(a, mode) for a in weight_args]
        return pl.pallas_call(
            kernel,
            out_shape=out_shape,
            grid=(G,),
            in_specs=in_specs,
            out_specs=pl.BlockSpec((Rq, Qd_pad), lambda g: (g, 0)),
            compiler_params=cparams,
        )(qe2, kv2, pad_rows, *weight_args)

    try:
        out2 = run(True)       # single-buffer the grid-invariant weights (saves VMEM)
    except Exception:          # fall back if this jax build rejects Buffered(1)
        out2 = run(False)

    return out2[:, :Qd].reshape(B, Lq, Qd)


def init_params(key, embed_dim, num_heads, q_dim, kv_dim):
    keys = jax.random.split(key, 8)

    def lin(k, fan_in, fan_out):
        bound = 1.0 / math.sqrt(fan_in)
        kw, kb = jax.random.split(k)
        w = jax.random.uniform(kw, (fan_in, fan_out), jnp.float32, -bound, bound)
        b = jax.random.uniform(kb, (1, fan_out), jnp.float32, -bound, bound)
        return w, b

    def xavier(k, fan_in, fan_out):
        bound = math.sqrt(6.0 / (fan_in + fan_out))
        return jax.random.uniform(k, (fan_in, fan_out), jnp.float32, -bound, bound)

    p = {}
    p["wqs"], p["bqs"] = lin(keys[0], q_dim, embed_dim)              # q_shrink
    p["wq"] = xavier(keys[1], embed_dim, embed_dim)                  # MHA projections
    p["wk"] = xavier(keys[2], kv_dim, embed_dim)
    p["wv"] = xavier(keys[3], kv_dim, embed_dim)
    p["bq"] = jnp.zeros((1, embed_dim), jnp.float32)
    p["bk"] = jnp.zeros((1, embed_dim), jnp.float32)
    p["bv"] = jnp.zeros((1, embed_dim), jnp.float32)
    p["wo"], _ = lin(keys[4], embed_dim, embed_dim)                  # MHA out-proj
    p["bo"] = jnp.zeros((1, embed_dim), jnp.float32)
    p["ln1w"] = jnp.ones((1, embed_dim), jnp.float32)
    p["ln1b"] = jnp.zeros((1, embed_dim), jnp.float32)
    p["w1"], p["b1"] = lin(keys[5], embed_dim, 4 * embed_dim)        # MLP
    p["w2"], p["b2"] = lin(keys[6], 4 * embed_dim, embed_dim)
    p["ln2w"] = jnp.ones((1, embed_dim), jnp.float32)
    p["ln2b"] = jnp.zeros((1, embed_dim), jnp.float32)
    p["wexp"], p["bexp"] = lin(keys[7], embed_dim, q_dim)            # q_expand
    # Module __init__ sets gate = zeros(1); use a nonzero value so the attention path
    # actually affects the tested output.
    p["gate"] = jnp.full((1, 1), 0.1, jnp.float32)
    return p


def reference(qe, kv, mask_bool, params, num_heads):
    """Pure-JAX f32 reference mirroring the PyTorch forward."""
    E = params["wq"].shape[0]
    Dh = E // num_heads
    B, Lq, _ = qe.shape
    Lkv = kv.shape[1]
    q = qe @ params["wqs"] + params["bqs"]
    qh = (q @ params["wq"] + params["bq"]).reshape(B, Lq, num_heads, Dh).transpose(0, 2, 1, 3)
    kh = (kv @ params["wk"] + params["bk"]).reshape(B, Lkv, num_heads, Dh).transpose(0, 2, 1, 3)
    vh = (kv @ params["wv"] + params["bv"]).reshape(B, Lkv, num_heads, Dh).transpose(0, 2, 1, 3)
    s = jnp.einsum("bhqd,bhkd->bhqk", qh, kh) / math.sqrt(Dh)
    s = s + jnp.where(mask_bool[:, None, None, :], -1e30, 0.0)
    p = jax.nn.softmax(s, axis=-1)
    attn = jnp.einsum("bhqk,bhkd->bhqd", p, vh).transpose(0, 2, 1, 3).reshape(B, Lq, E)
    attn = attn @ params["wo"] + params["bo"]

    def ln(z, w, b):
        mu = z.mean(-1, keepdims=True)
        var = ((z - mu) ** 2).mean(-1, keepdims=True)
        return (z - mu) / jnp.sqrt(var + 1e-5) * w + b

    h1 = ln(q + attn, params["ln1w"], params["ln1b"])
    mlp = jnp.maximum(h1 @ params["w1"] + params["b1"], 0.0) @ params["w2"] + params["b2"]
    h2 = ln(h1 + mlp, params["ln2w"], params["ln2b"])
    qexp = h2 @ params["wexp"] + params["bexp"]
    return params["gate"][0, 0] * qexp + qe


if __name__ == "__main__":
    embed_dim, num_heads, q_dim, kv_dim = 32, 4, 48, 40
    B, Lq, Lkv = 2, 8, 16

    key = jax.random.PRNGKey(0)
    k_param, k_q, k_kv = jax.random.split(key, 3)
    params = init_params(k_param, embed_dim, num_heads, q_dim, kv_dim)

    query_embeds = jax.random.normal(k_q, (B, Lq, q_dim), jnp.float32)
    key_value_embeds = jax.random.normal(k_kv, (B, Lkv, kv_dim), jnp.float32)
    key_padding_mask = jnp.zeros((B, Lkv), dtype=bool).at[1, -4:].set(True)

    out = cross_attention_layer(query_embeds, key_value_embeds, key_padding_mask,
                                params, num_heads)
    out = jax.block_until_ready(out)

    ref = reference(query_embeds, key_value_embeds, key_padding_mask, params, num_heads)
    assert out.shape == (B, Lq, q_dim)
    max_err = float(jnp.max(jnp.abs(out - ref)))
    assert jnp.allclose(out, ref, atol=1e-2, rtol=1e-2), max_err
    print("KERNEL_OK")
</pallas_src>

<mosaic_0001>
module attributes {stable_mosaic.version = 11 : i64} {
  func.func @kernel(%arg0: i32, %arg1: memref<8x128xf32, #tpu.memory_space<vmem>>, %arg2: memref<16x128xf32, #tpu.memory_space<vmem>>, %arg3: memref<8x16xf32, #tpu.memory_space<vmem>>, %arg4: memref<128x32xbf16, #tpu.memory_space<vmem>>, %arg5: memref<128x32xbf16, #tpu.memory_space<vmem>>, %arg6: memref<128x32xbf16, #tpu.memory_space<vmem>>, %arg7: memref<128x32xbf16, #tpu.memory_space<vmem>>, %arg8: memref<32x32xbf16, #tpu.memory_space<vmem>>, %arg9: memref<10x32xf32, #tpu.memory_space<vmem>>, %arg10: memref<32x128xbf16, #tpu.memory_space<vmem>>, %arg11: memref<1x128xf32, #tpu.memory_space<vmem>>, %arg12: memref<128x32xbf16, #tpu.memory_space<vmem>>, %arg13: memref<32x128xbf16, #tpu.memory_space<vmem>>, %arg14: memref<1x128xf32, #tpu.memory_space<vmem>>, %arg15: memref<8x128xf32, #tpu.memory_space<vmem>>) attributes {dimension_semantics = [#tpu.dimension_semantics<parallel>], iteration_bounds = array<i64: 2>, scalar_prefetch = 0 : i64, scratch_operands = 0 : i64, tpu.core_type = #tpu.core_type<tc>, window_params = [{transform_indices = @transform_0, window_bounds = array<i64: 8, 128>}, {transform_indices = @transform_1, window_bounds = array<i64: 16, 128>}, {transform_indices = @transform_2, window_bounds = array<i64: 8, 16>}, {pipeline_mode = #tpu.pipeline_mode<synchronous>, transform_indices = @transform_3, window_bounds = array<i64: 128, 32>}, {pipeline_mode = #tpu.pipeline_mode<synchronous>, transform_indices = @transform_4, window_bounds = array<i64: 128, 32>}, {pipeline_mode = #tpu.pipeline_mode<synchronous>, transform_indices = @transform_5, window_bounds = array<i64: 128, 32>}, {pipeline_mode = #tpu.pipeline_mode<synchronous>, transform_indices = @transform_6, window_bounds = array<i64: 128, 32>}, {pipeline_mode = #tpu.pipeline_mode<synchronous>, transform_indices = @transform_7, window_bounds = array<i64: 32, 32>}, {pipeline_mode = #tpu.pipeline_mode<synchronous>, transform_indices = @transform_8, window_bounds = array<i64: 10, 32>}, {pipeline_mode = #tpu.pipeline_mode<synchronous>, transform_indices = @transform_9, window_bounds = array<i64: 32, 128>}, {pipeline_mode = #tpu.pipeline_mode<synchronous>, transform_indices = @transform_10, window_bounds = array<i64: 1, 128>}, {pipeline_mode = #tpu.pipeline_mode<synchronous>, transform_indices = @transform_11, window_bounds = array<i64: 128, 32>}, {pipeline_mode = #tpu.pipeline_mode<synchronous>, transform_indices = @transform_12, window_bounds = array<i64: 32, 128>}, {pipeline_mode = #tpu.pipeline_mode<synchronous>, transform_indices = @transform_13, window_bounds = array<i64: 1, 128>}, {transform_indices = @transform_14, window_bounds = array<i64: 8, 128>}]} {
    %c0 = arith.constant 0 : index
    %c0_0 = arith.constant 0 : index
    %0 = vector.load %arg1[%c0, %c0_0] : memref<8x128xf32, #tpu.memory_space<vmem>>, vector<8x128xf32>
    %c0_1 = arith.constant 0 : index
    %c0_2 = arith.constant 0 : index
    %1 = vector.load %arg2[%c0_1, %c0_2] : memref<16x128xf32, #tpu.memory_space<vmem>>, vector<16x128xf32>
    %c0_3 = arith.constant 0 : index
    %c0_4 = arith.constant 0 : index
    %2 = vector.load %arg3[%c0_3, %c0_4] : memref<8x16xf32, #tpu.memory_space<vmem>>, vector<1x16xf32>
    %c0_5 = arith.constant 0 : index
    %c0_6 = arith.constant 0 : index
    %3 = vector.load %arg9[%c0_5, %c0_6] : memref<10x32xf32, #tpu.memory_space<vmem>>, vector<1x32xf32>
    %c1 = arith.constant 1 : index
    %c0_7 = arith.constant 0 : index
    %4 = vector.load %arg9[%c1, %c0_7] : memref<10x32xf32, #tpu.memory_space<vmem>>, vector<1x32xf32>
    %c2 = arith.constant 2 : index
    %c0_8 = arith.constant 0 : index
    %5 = vector.load %arg9[%c2, %c0_8] : memref<10x32xf32, #tpu.memory_space<vmem>>, vector<1x32xf32>
    %c3 = arith.constant 3 : index
    %c0_9 = arith.constant 0 : index
    %6 = vector.load %arg9[%c3, %c0_9] : memref<10x32xf32, #tpu.memory_space<vmem>>, vector<1x32xf32>
    %c4 = arith.constant 4 : index
    %c0_10 = arith.constant 0 : index
    %7 = vector.load %arg9[%c4, %c0_10] : memref<10x32xf32, #tpu.memory_space<vmem>>, vector<1x32xf32>
    %c5 = arith.constant 5 : index
    %c0_11 = arith.constant 0 : index
    %8 = vector.load %arg9[%c5, %c0_11] : memref<10x32xf32, #tpu.memory_space<vmem>>, vector<1x32xf32>
    %c6 = arith.constant 6 : index
    %c0_12 = arith.constant 0 : index
    %9 = vector.load %arg9[%c6, %c0_12] : memref<10x32xf32, #tpu.memory_space<vmem>>, vector<1x32xf32>
    %c7 = arith.constant 7 : index
    %c0_13 = arith.constant 0 : index
    %10 = vector.load %arg9[%c7, %c0_13] : memref<10x32xf32, #tpu.memory_space<vmem>>, vector<1x32xf32>
    %c8 = arith.constant 8 : index
    %c0_14 = arith.constant 0 : index
    %11 = vector.load %arg9[%c8, %c0_14] : memref<10x32xf32, #tpu.memory_space<vmem>>, vector<1x32xf32>
    %c9 = arith.constant 9 : index
    %c0_15 = arith.constant 0 : index
    %12 = vector.load %arg9[%c9, %c0_15] : memref<10x32xf32, #tpu.memory_space<vmem>>, vector<1x32xf32>
    %13 = arith.truncf %0 : vector<8x128xf32> to vector<8x128xbf16>
    %14 = arith.truncf %1 : vector<16x128xf32> to vector<16x128xbf16>
    %c0_16 = arith.constant 0 : index
    %c0_17 = arith.constant 0 : index
    %15 = vector.load %arg4[%c0_16, %c0_17] : memref<128x32xbf16, #tpu.memory_space<vmem>>, vector<128x32xbf16>
    %cst = arith.constant dense<0.000000e+00> : vector<8x32xf32>
    %16 = tpu.matmul %13, %15, %cst {dimension_numbers = #tpu.dot_dimension_numbers<[1], [0], [0], [1], [0, 0, 1, 1], [], []>} : vector<8x128xbf16>, vector<128x32xbf16>, vector<8x32xf32> -> vector<8x32xf32>
    %17 = vector.broadcast %3 : vector<1x32xf32> to vector<8x32xf32>
    %18 = arith.addf %16, %17 : vector<8x32xf32>
    %c0_18 = arith.constant 0 : index
    %c0_19 = arith.constant 0 : index
    %19 = vector.load %arg5[%c0_18, %c0_19] : memref<128x32xbf16, #tpu.memory_space<vmem>>, vector<128x32xbf16>
    %cst_20 = arith.constant dense<0.000000e+00> : vector<8x32xf32>
    %20 = tpu.matmul %13, %19, %cst_20 {dimension_numbers = #tpu.dot_dimension_numbers<[1], [0], [0], [1], [0, 0, 1, 1], [], []>} : vector<8x128xbf16>, vector<128x32xbf16>, vector<8x32xf32> -> vector<8x32xf32>
    %21 = vector.broadcast %4 : vector<1x32xf32> to vector<8x32xf32>
    %22 = arith.addf %20, %21 : vector<8x32xf32>
    %c0_21 = arith.constant 0 : index
    %c0_22 = arith.constant 0 : index
    %23 = vector.load %arg6[%c0_21, %c0_22] : memref<128x32xbf16, #tpu.memory_space<vmem>>, vector<128x32xbf16>
    %cst_23 = arith.constant dense<0.000000e+00> : vector<16x32xf32>
    %24 = tpu.matmul %14, %23, %cst_23 {dimension_numbers = #tpu.dot_dimension_numbers<[1], [0], [0], [1], [0, 0, 1, 1], [], []>} : vector<16x128xbf16>, vector<128x32xbf16>, vector<16x32xf32> -> vector<16x32xf32>
    %25 = vector.broadcast %5 : vector<1x32xf32> to vector<16x32xf32>
    %26 = arith.addf %24, %25 : vector<16x32xf32>
    %c0_24 = arith.constant 0 : index
    %c0_25 = arith.constant 0 : index
    %27 = vector.load %arg7[%c0_24, %c0_25] : memref<128x32xbf16, #tpu.memory_space<vmem>>, vector<128x32xbf16>
    %cst_26 = arith.constant dense<0.000000e+00> : vector<16x32xf32>
    %28 = tpu.matmul %14, %27, %cst_26 {dimension_numbers = #tpu.dot_dimension_numbers<[1], [0], [0], [1], [0, 0, 1, 1], [], []>} : vector<16x128xbf16>, vector<128x32xbf16>, vector<16x32xf32> -> vector<16x32xf32>
    %29 = vector.broadcast %6 : vector<1x32xf32> to vector<16x32xf32>
    %30 = arith.addf %28, %29 : vector<16x32xf32>
    %31 = tpu.iota {dimensions = array<i32: 1>} : vector<1x32xi32>
    %cst_27 = arith.constant 0.000000e+00 : f32
    %32 = vector.broadcast %cst_27 : f32 to vector<8x32xf32>
    %33 = arith.truncf %26 : vector<16x32xf32> to vector<16x32xbf16>
    %34 = arith.truncf %30 : vector<16x32xf32> to vector<16x32xbf16>
    %c0_i32 = arith.constant 0 : i32
    %35 = vector.broadcast %c0_i32 : i32 to vector<1x32xi32>
    %36 = arith.cmpi sge, %31, %35 : vector<1x32xi32>
    %c8_i32 = arith.constant 8 : i32
    %37 = vector.broadcast %c8_i32 : i32 to vector<1x32xi32>
    %38 = arith.cmpi slt, %31, %37 : vector<1x32xi32>
    %39 = arith.andi %36, %38 : vector<1x32xi1>
    %40 = arith.extui %39 : vector<1x32xi1> to vector<1x32xi32>
    %41 = arith.sitofp %40 : vector<1x32xi32> to vector<1x32xf32>
    %42 = vector.broadcast %41 : vector<1x32xf32> to vector<8x32xf32>
    %43 = arith.mulf %22, %42 : vector<8x32xf32>
    %44 = arith.truncf %43 : vector<8x32xf32> to vector<8x32xbf16>
    %cst_28 = arith.constant dense<0.000000e+00> : vector<8x16xf32>
    %45 = tpu.matmul %44, %33, %cst_28 {dimension_numbers = #tpu.dot_dimension_numbers<[1], [1], [0], [0], [0, 0, 1, 0], [], []>} : vector<8x32xbf16>, vector<16x32xbf16>, vector<8x16xf32> -> vector<8x16xf32>
    %46 = vector.broadcast %2 : vector<1x16xf32> to vector<8x16xf32>
    %47 = arith.addf %45, %46 : vector<8x16xf32>
    %cst_29 = arith.constant dense<0xFF800000> : vector<8xf32>
    %48 = vector.multi_reduction <maximumf>, %47, %cst_29 [1] : vector<8x16xf32> to vector<8xf32>
    %49 = vector.shape_cast %48 : vector<8xf32> to vector<8x1xf32>
    %50 = vector.broadcast %49 : vector<8x1xf32> to vector<8x16xf32>
    %51 = arith.subf %47, %50 : vector<8x16xf32>
    %52 = math.exp %51 : vector<8x16xf32>
    %cst_30 = arith.constant dense<0.000000e+00> : vector<8xf32>
    %53 = vector.multi_reduction <add>, %52, %cst_30 [1] : vector<8x16xf32> to vector<8xf32>
    %54 = vector.shape_cast %53 : vector<8xf32> to vector<8x1xf32>
    %55 = tpu.reciprocal %54 {approx = true} : vector<8x1xf32> -> vector<8x1xf32>
    %56 = arith.truncf %52 : vector<8x16xf32> to vector<8x16xbf16>
    %cst_31 = arith.constant dense<0.000000e+00> : vector<8x32xf32>
    %57 = tpu.matmul %56, %34, %cst_31 {dimension_numbers = #tpu.dot_dimension_numbers<[1], [0], [0], [1], [0, 0, 1, 1], [], []>} : vector<8x16xbf16>, vector<16x32xbf16>, vector<8x32xf32> -> vector<8x32xf32>
    %58 = vector.broadcast %41 : vector<1x32xf32> to vector<8x32xf32>
    %59 = vector.broadcast %55 : vector<8x1xf32> to vector<8x32xf32>
    %60 = arith.mulf %58, %59 : vector<8x32xf32>
    %61 = arith.mulf %57, %60 : vector<8x32xf32>
    %62 = arith.addf %32, %61 : vector<8x32xf32>
    %c8_i32_32 = arith.constant 8 : i32
    %63 = vector.broadcast %c8_i32_32 : i32 to vector<1x32xi32>
    %64 = arith.cmpi sge, %31, %63 : vector<1x32xi32>
    %c16_i32 = arith.constant 16 : i32
    %65 = vector.broadcast %c16_i32 : i32 to vector<1x32xi32>
    %66 = arith.cmpi slt, %31, %65 : vector<1x32xi32>
    %67 = arith.andi %64, %66 : vector<1x32xi1>
    %68 = arith.extui %67 : vector<1x32xi1> to vector<1x32xi32>
    %69 = arith.sitofp %68 : vector<1x32xi32> to vector<1x32xf32>
    %70 = vector.broadcast %69 : vector<1x32xf32> to vector<8x32xf32>
    %71 = arith.mulf %22, %70 : vector<8x32xf32>
    %72 = arith.truncf %71 : vector<8x32xf32> to vector<8x32xbf16>
    %cst_33 = arith.constant dense<0.000000e+00> : vector<8x16xf32>
    %73 = tpu.matmul %72, %33, %cst_33 {dimension_numbers = #tpu.dot_dimension_numbers<[1], [1], [0], [0], [0, 0, 1, 0], [], []>} : vector<8x32xbf16>, vector<16x32xbf16>, vector<8x16xf32> -> vector<8x16xf32>
    %74 = vector.broadcast %2 : vector<1x16xf32> to vector<8x16xf32>
    %75 = arith.addf %73, %74 : vector<8x16xf32>
    %cst_34 = arith.constant dense<0xFF800000> : vector<8xf32>
    %76 = vector.multi_reduction <maximumf>, %75, %cst_34 [1] : vector<8x16xf32> to vector<8xf32>
    %77 = vector.shape_cast %76 : vector<8xf32> to vector<8x1xf32>
    %78 = vector.broadcast %77 : vector<8x1xf32> to vector<8x16xf32>
    %79 = arith.subf %75, %78 : vector<8x16xf32>
    %80 = math.exp %79 : vector<8x16xf32>
    %cst_35 = arith.constant dense<0.000000e+00> : vector<8xf32>
    %81 = vector.multi_reduction <add>, %80, %cst_35 [1] : vector<8x16xf32> to vector<8xf32>
    %82 = vector.shape_cast %81 : vector<8xf32> to vector<8x1xf32>
    %83 = tpu.reciprocal %82 {approx = true} : vector<8x1xf32> -> vector<8x1xf32>
    %84 = arith.truncf %80 : vector<8x16xf32> to vector<8x16xbf16>
    %cst_36 = arith.constant dense<0.000000e+00> : vector<8x32xf32>
    %85 = tpu.matmul %84, %34, %cst_36 {dimension_numbers = #tpu.dot_dimension_numbers<[1], [0], [0], [1], [0, 0, 1, 1], [], []>} : vector<8x16xbf16>, vector<16x32xbf16>, vector<8x32xf32> -> vector<8x32xf32>
    %86 = vector.broadcast %69 : vector<1x32xf32> to vector<8x32xf32>
    %87 = vector.broadcast %83 : vector<8x1xf32> to vector<8x32xf32>
    %88 = arith.mulf %86, %87 : vector<8x32xf32>
    %89 = arith.mulf %85, %88 : vector<8x32xf32>
    %90 = arith.addf %62, %89 : vector<8x32xf32>
    %c16_i32_37 = arith.constant 16 : i32
    %91 = vector.broadcast %c16_i32_37 : i32 to vector<1x32xi32>
    %92 = arith.cmpi sge, %31, %91 : vector<1x32xi32>
    %c24_i32 = arith.constant 24 : i32
    %93 = vector.broadcast %c24_i32 : i32 to vector<1x32xi32>
    %94 = arith.cmpi slt, %31, %93 : vector<1x32xi32>
    %95 = arith.andi %92, %94 : vector<1x32xi1>
    %96 = arith.extui %95 : vector<1x32xi1> to vector<1x32xi32>
    %97 = arith.sitofp %96 : vector<1x32xi32> to vector<1x32xf32>
    %98 = vector.broadcast %97 : vector<1x32xf32> to vector<8x32xf32>
    %99 = arith.mulf %22, %98 : vector<8x32xf32>
    %100 = arith.truncf %99 : vector<8x32xf32> to vector<8x32xbf16>
    %cst_38 = arith.constant dense<0.000000e+00> : vector<8x16xf32>
    %101 = tpu.matmul %100, %33, %cst_38 {dimension_numbers = #tpu.dot_dimension_numbers<[1], [1], [0], [0], [0, 0, 1, 0], [], []>} : vector<8x32xbf16>, vector<16x32xbf16>, vector<8x16xf32> -> vector<8x16xf32>
    %102 = vector.broadcast %2 : vector<1x16xf32> to vector<8x16xf32>
    %103 = arith.addf %101, %102 : vector<8x16xf32>
    %cst_39 = arith.constant dense<0xFF800000> : vector<8xf32>
    %104 = vector.multi_reduction <maximumf>, %103, %cst_39 [1] : vector<8x16xf32> to vector<8xf32>
    %105 = vector.shape_cast %104 : vector<8xf32> to vector<8x1xf32>
    %106 = vector.broadcast %105 : vector<8x1xf32> to vector<8x16xf32>
    %107 = arith.subf %103, %106 : vector<8x16xf32>
    %108 = math.exp %107 : vector<8x16xf32>
    %cst_40 = arith.constant dense<0.000000e+00> : vector<8xf32>
    %109 = vector.multi_reduction <add>, %108, %cst_40 [1] : vector<8x16xf32> to vector<8xf32>
    %110 = vector.shape_cast %109 : vector<8xf32> to vector<8x1xf32>
    %111 = tpu.reciprocal %110 {approx = true} : vector<8x1xf32> -> vector<8x1xf32>
    %112 = arith.truncf %108 : vector<8x16xf32> to vector<8x16xbf16>
    %cst_41 = arith.constant dense<0.000000e+00> : vector<8x32xf32>
    %113 = tpu.matmul %112, %34, %cst_41 {dimension_numbers = #tpu.dot_dimension_numbers<[1], [0], [0], [1], [0, 0, 1, 1], [], []>} : vector<8x16xbf16>, vector<16x32xbf16>, vector<8x32xf32> -> vector<8x32xf32>
    %114 = vector.broadcast %97 : vector<1x32xf32> to vector<8x32xf32>
    %115 = vector.broadcast %111 : vector<8x1xf32> to vector<8x32xf32>
    %116 = arith.mulf %114, %115 : vector<8x32xf32>
    %117 = arith.mulf %113, %116 : vector<8x32xf32>
    %118 = arith.addf %90, %117 : vector<8x32xf32>
    %c24_i32_42 = arith.constant 24 : i32
    %119 = vector.broadcast %c24_i32_42 : i32 to vector<1x32xi32>
    %120 = arith.cmpi sge, %31, %119 : vector<1x32xi32>
    %c32_i32 = arith.constant 32 : i32
    %121 = vector.broadcast %c32_i32 : i32 to vector<1x32xi32>
    %122 = arith.cmpi slt, %31, %121 : vector<1x32xi32>
    %123 = arith.andi %120, %122 : vector<1x32xi1>
    %124 = arith.extui %123 : vector<1x32xi1> to vector<1x32xi32>
    %125 = arith.sitofp %124 : vector<1x32xi32> to vector<1x32xf32>
    %126 = vector.broadcast %125 : vector<1x32xf32> to vector<8x32xf32>
    %127 = arith.mulf %22, %126 : vector<8x32xf32>
    %128 = arith.truncf %127 : vector<8x32xf32> to vector<8x32xbf16>
    %cst_43 = arith.constant dense<0.000000e+00> : vector<8x16xf32>
    %129 = tpu.matmul %128, %33, %cst_43 {dimension_numbers = #tpu.dot_dimension_numbers<[1], [1], [0], [0], [0, 0, 1, 0], [], []>} : vector<8x32xbf16>, vector<16x32xbf16>, vector<8x16xf32> -> vector<8x16xf32>
    %130 = vector.broadcast %2 : vector<1x16xf32> to vector<8x16xf32>
    %131 = arith.addf %129, %130 : vector<8x16xf32>
    %cst_44 = arith.constant dense<0xFF800000> : vector<8xf32>
    %132 = vector.multi_reduction <maximumf>, %131, %cst_44 [1] : vector<8x16xf32> to vector<8xf32>
    %133 = vector.shape_cast %132 : vector<8xf32> to vector<8x1xf32>
    %134 = vector.broadcast %133 : vector<8x1xf32> to vector<8x16xf32>
    %135 = arith.subf %131, %134 : vector<8x16xf32>
    %136 = math.exp %135 : vector<8x16xf32>
    %cst_45 = arith.constant dense<0.000000e+00> : vector<8xf32>
    %137 = vector.multi_reduction <add>, %136, %cst_45 [1] : vector<8x16xf32> to vector<8xf32>
    %138 = vector.shape_cast %137 : vector<8xf32> to vector<8x1xf32>
    %139 = tpu.reciprocal %138 {approx = true} : vector<8x1xf32> -> vector<8x1xf32>
    %140 = arith.truncf %136 : vector<8x16xf32> to vector<8x16xbf16>
    %cst_46 = arith.constant dense<0.000000e+00> : vector<8x32xf32>
    %141 = tpu.matmul %140, %34, %cst_46 {dimension_numbers = #tpu.dot_dimension_numbers<[1], [0], [0], [1], [0, 0, 1, 1], [], []>} : vector<8x16xbf16>, vector<16x32xbf16>, vector<8x32xf32> -> vector<8x32xf32>
    %142 = vector.broadcast %125 : vector<1x32xf32> to vector<8x32xf32>
    %143 = vector.broadcast %139 : vector<8x1xf32> to vector<8x32xf32>
    %144 = arith.mulf %142, %143 : vector<8x32xf32>
    %145 = arith.mulf %141, %144 : vector<8x32xf32>
    %146 = arith.addf %118, %145 : vector<8x32xf32>
    %147 = arith.truncf %146 : vector<8x32xf32> to vector<8x32xbf16>
    %c0_47 = arith.constant 0 : index
    %c0_48 = arith.constant 0 : index
    %148 = vector.load %arg8[%c0_47, %c0_48] : memref<32x32xbf16, #tpu.memory_space<vmem>>, vector<32x32xbf16>
    %cst_49 = arith.constant dense<0.000000e+00> : vector<8x32xf32>
    %149 = tpu.matmul %147, %148, %cst_49 {dimension_numbers = #tpu.dot_dimension_numbers<[1], [0], [0], [1], [0, 0, 1, 1], [], []>} : vector<8x32xbf16>, vector<32x32xbf16>, vector<8x32xf32> -> vector<8x32xf32>
    %150 = vector.broadcast %7 : vector<1x32xf32> to vector<8x32xf32>
    %151 = arith.addf %149, %150 : vector<8x32xf32>
    %152 = arith.addf %18, %151 : vector<8x32xf32>
    %cst_50 = arith.constant dense<0.000000e+00> : vector<8xf32>
    %153 = vector.multi_reduction <add>, %152, %cst_50 [1] : vector<8x32xf32> to vector<8xf32>
    %154 = vector.shape_cast %153 : vector<8xf32> to vector<8x1xf32>
    %cst_51 = arith.constant 3.200000e+01 : f32
    %155 = vector.broadcast %cst_51 : f32 to vector<8x1xf32>
    %156 = arith.divf %154, %155 : vector<8x1xf32>
    %157 = vector.broadcast %156 : vector<8x1xf32> to vector<8x32xf32>
    %158 = arith.subf %152, %157 : vector<8x32xf32>
    %159 = arith.mulf %158, %158 : vector<8x32xf32>
    %cst_52 = arith.constant dense<0.000000e+00> : vector<8xf32>
    %160 = vector.multi_reduction <add>, %159, %cst_52 [1] : vector<8x32xf32> to vector<8xf32>
    %161 = vector.shape_cast %160 : vector<8xf32> to vector<8x1xf32>
    %cst_53 = arith.constant 3.200000e+01 : f32
    %162 = vector.broadcast %cst_53 : f32 to vector<8x1xf32>
    %163 = arith.divf %161, %162 : vector<8x1xf32>
    %cst_54 = arith.constant 9.99999974E-6 : f32
    %164 = vector.broadcast %cst_54 : f32 to vector<8x1xf32>
    %165 = arith.addf %163, %164 : vector<8x1xf32>
    %166 = math.rsqrt %165 : vector<8x1xf32>
    %167 = vector.broadcast %166 : vector<8x1xf32> to vector<8x32xf32>
    %168 = arith.mulf %158, %167 : vector<8x32xf32>
    %169 = vector.broadcast %8 : vector<1x32xf32> to vector<8x32xf32>
    %170 = arith.mulf %168, %169 : vector<8x32xf32>
    %171 = vector.broadcast %9 : vector<1x32xf32> to vector<8x32xf32>
    %172 = arith.addf %170, %171 : vector<8x32xf32>
    %173 = arith.truncf %172 : vector<8x32xf32> to vector<8x32xbf16>
    %c0_55 = arith.constant 0 : index
    %c0_56 = arith.constant 0 : index
    %174 = vector.load %arg10[%c0_55, %c0_56] : memref<32x128xbf16, #tpu.memory_space<vmem>>, vector<32x128xbf16>
    %cst_57 = arith.constant dense<0.000000e+00> : vector<8x128xf32>
    %175 = tpu.matmul %173, %174, %cst_57 {dimension_numbers = #tpu.dot_dimension_numbers<[1], [0], [0], [1], [0, 0, 1, 1], [], []>} : vector<8x32xbf16>, vector<32x128xbf16>, vector<8x128xf32> -> vector<8x128xf32>
    %c0_58 = arith.constant 0 : index
    %c0_59 = arith.constant 0 : index
    %176 = vector.load %arg11[%c0_58, %c0_59] : memref<1x128xf32, #tpu.memory_space<vmem>>, vector<1x128xf32>
    %177 = vector.broadcast %176 : vector<1x128xf32> to vector<8x128xf32>
    %178 = arith.addf %175, %177 : vector<8x128xf32>
    %cst_60 = arith.constant 0.000000e+00 : f32
    %179 = vector.broadcast %cst_60 : f32 to vector<8x128xf32>
    %180 = arith.maximumf %178, %179 : vector<8x128xf32>
    %181 = arith.truncf %180 : vector<8x128xf32> to vector<8x128xbf16>
    %c0_61 = arith.constant 0 : index
    %c0_62 = arith.constant 0 : index
    %182 = vector.load %arg12[%c0_61, %c0_62] : memref<128x32xbf16, #tpu.memory_space<vmem>>, vector<128x32xbf16>
    %cst_63 = arith.constant dense<0.000000e+00> : vector<8x32xf32>
    %183 = tpu.matmul %181, %182, %cst_63 {dimension_numbers = #tpu.dot_dimension_numbers<[1], [0], [0], [1], [0, 0, 1, 1], [], []>} : vector<8x128xbf16>, vector<128x32xbf16>, vector<8x32xf32> -> vector<8x32xf32>
    %184 = vector.broadcast %10 : vector<1x32xf32> to vector<8x32xf32>
    %185 = arith.addf %183, %184 : vector<8x32xf32>
    %186 = arith.addf %172, %185 : vector<8x32xf32>
    %cst_64 = arith.constant dense<0.000000e+00> : vector<8xf32>
    %187 = vector.multi_reduction <add>, %186, %cst_64 [1] : vector<8x32xf32> to vector<8xf32>
    %188 = vector.shape_cast %187 : vector<8xf32> to vector<8x1xf32>
    %cst_65 = arith.constant 3.200000e+01 : f32
    %189 = vector.broadcast %cst_65 : f32 to vector<8x1xf32>
    %190 = arith.divf %188, %189 : vector<8x1xf32>
    %191 = vector.broadcast %190 : vector<8x1xf32> to vector<8x32xf32>
    %192 = arith.subf %186, %191 : vector<8x32xf32>
    %193 = arith.mulf %192, %192 : vector<8x32xf32>
    %cst_66 = arith.constant dense<0.000000e+00> : vector<8xf32>
    %194 = vector.multi_reduction <add>, %193, %cst_66 [1] : vector<8x32xf32> to vector<8xf32>
    %195 = vector.shape_cast %194 : vector<8xf32> to vector<8x1xf32>
    %cst_67 = arith.constant 3.200000e+01 : f32
    %196 = vector.broadcast %cst_67 : f32 to vector<8x1xf32>
    %197 = arith.divf %195, %196 : vector<8x1xf32>
    %cst_68 = arith.constant 9.99999974E-6 : f32
    %198 = vector.broadcast %cst_68 : f32 to vector<8x1xf32>
    %199 = arith.addf %197, %198 : vector<8x1xf32>
    %200 = math.rsqrt %199 : vector<8x1xf32>
    %201 = vector.broadcast %200 : vector<8x1xf32> to vector<8x32xf32>
    %202 = arith.mulf %192, %201 : vector<8x32xf32>
    %203 = vector.broadcast %11 : vector<1x32xf32> to vector<8x32xf32>
    %204 = arith.mulf %202, %203 : vector<8x32xf32>
    %205 = vector.broadcast %12 : vector<1x32xf32> to vector<8x32xf32>
    %206 = arith.addf %204, %205 : vector<8x32xf32>
    %207 = arith.truncf %206 : vector<8x32xf32> to vector<8x32xbf16>
    %c0_69 = arith.constant 0 : index
    %c0_70 = arith.constant 0 : index
    %208 = vector.load %arg13[%c0_69, %c0_70] : memref<32x128xbf16, #tpu.memory_space<vmem>>, vector<32x128xbf16>
    %cst_71 = arith.constant dense<0.000000e+00> : vector<8x128xf32>
    %209 = tpu.matmul %207, %208, %cst_71 {dimension_numbers = #tpu.dot_dimension_numbers<[1], [0], [0], [1], [0, 0, 1, 1], [], []>} : vector<8x32xbf16>, vector<32x128xbf16>, vector<8x128xf32> -> vector<8x128xf32>
    %c0_72 = arith.constant 0 : index
    %c0_73 = arith.constant 0 : index
    %210 = vector.load %arg14[%c0_72, %c0_73] : memref<1x128xf32, #tpu.memory_space<vmem>>, vector<1x128xf32>
    %211 = vector.broadcast %210 : vector<1x128xf32> to vector<8x128xf32>
    %212 = arith.addf %209, %211 : vector<8x128xf32>
    %213 = arith.addf %212, %0 : vector<8x128xf32>
    %c0_74 = arith.constant 0 : index
    %c0_75 = arith.constant 0 : index
    %214 = vector.load %arg15[%c0_74, %c0_75] : memref<8x128xf32, #tpu.memory_space<vmem>>, vector<8x128xf32>
    tpu.vector_store %arg15[%c0_74, %c0_75], %213 {strides = array<i32>} : memref<8x128xf32, #tpu.memory_space<vmem>>, vector<8x128xf32>,
    return
  }
  func.func @transform_0(%arg0: i32) -> (i32, i32) {
    %c0_i32 = arith.constant 0 : i32
    %c0_i32_0 = arith.constant 0 : i32
    return %arg0, %c0_i32 : i32, i32
  }
  func.func @transform_1(%arg0: i32) -> (i32, i32) {
    %c0_i32 = arith.constant 0 : i32
    %c0_i32_0 = arith.constant 0 : i32
    return %arg0, %c0_i32 : i32, i32
  }
  func.func @transform_2(%arg0: i32) -> (i32, i32) {
    %c0_i32 = arith.constant 0 : i32
    %c0_i32_0 = arith.constant 0 : i32
    return %arg0, %c0_i32 : i32, i32
  }
  func.func @transform_3(%arg0: i32) -> (i32, i32) {
    %c0_i32 = arith.constant 0 : i32
    %c0_i32_0 = arith.constant 0 : i32
    %c0_i32_1 = arith.constant 0 : i32
    return %c0_i32, %c0_i32_0 : i32, i32
  }
  func.func @transform_4(%arg0: i32) -> (i32, i32) {
    %c0_i32 = arith.constant 0 : i32
    %c0_i32_0 = arith.constant 0 : i32
    %c0_i32_1 = arith.constant 0 : i32
    return %c0_i32, %c0_i32_0 : i32, i32
  }
  func.func @transform_5(%arg0: i32) -> (i32, i32) {
    %c0_i32 = arith.constant 0 : i32
    %c0_i32_0 = arith.constant 0 : i32
    %c0_i32_1 = arith.constant 0 : i32
    return %c0_i32, %c0_i32_0 : i32, i32
  }
  func.func @transform_6(%arg0: i32) -> (i32, i32) {
    %c0_i32 = arith.constant 0 : i32
    %c0_i32_0 = arith.constant 0 : i32
    %c0_i32_1 = arith.constant 0 : i32
    return %c0_i32, %c0_i32_0 : i32, i32
  }
  func.func @transform_7(%arg0: i32) -> (i32, i32) {
    %c0_i32 = arith.constant 0 : i32
    %c0_i32_0 = arith.constant 0 : i32
    %c0_i32_1 = arith.constant 0 : i32
    return %c0_i32, %c0_i32_0 : i32, i32
  }
  func.func @transform_8(%arg0: i32) -> (i32, i32) {
    %c0_i32 = arith.constant 0 : i32
    %c0_i32_0 = arith.constant 0 : i32
    %c0_i32_1 = arith.constant 0 : i32
    return %c0_i32, %c0_i32_0 : i32, i32
  }
  func.func @transform_9(%arg0: i32) -> (i32, i32) {
    %c0_i32 = arith.constant 0 : i32
    %c0_i32_0 = arith.constant 0 : i32
    %c0_i32_1 = arith.constant 0 : i32
    return %c0_i32, %c0_i32_0 : i32, i32
  }
  func.func @transform_10(%arg0: i32) -> (i32, i32) {
    %c0_i32 = arith.constant 0 : i32
    %c0_i32_0 = arith.constant 0 : i32
    %c0_i32_1 = arith.constant 0 : i32
    return %c0_i32, %c0_i32_0 : i32, i32
  }
  func.func @transform_11(%arg0: i32) -> (i32, i32) {
    %c0_i32 = arith.constant 0 : i32
    %c0_i32_0 = arith.constant 0 : i32
    %c0_i32_1 = arith.constant 0 : i32
    return %c0_i32, %c0_i32_0 : i32, i32
  }
  func.func @transform_12(%arg0: i32) -> (i32, i32) {
    %c0_i32 = arith.constant 0 : i32
    %c0_i32_0 = arith.constant 0 : i32
    %c0_i32_1 = arith.constant 0 : i32
    return %c0_i32, %c0_i32_0 : i32, i32
  }
  func.func @transform_13(%arg0: i32) -> (i32, i32) {
    %c0_i32 = arith.constant 0 : i32
    %c0_i32_0 = arith.constant 0 : i32
    %c0_i32_1 = arith.constant 0 : i32
    return %c0_i32, %c0_i32_0 : i32, i32
  }
  func.func @transform_14(%arg0: i32) -> (i32, i32) {
    %c0_i32 = arith.constant 0 : i32
    %c0_i32_0 = arith.constant 0 : i32
    return %arg0, %c0_i32 : i32, i32
  }
}

module attributes {stable_mosaic.version = 11 : i64} {
  func.func @kernel(%arg0: i32, %arg1: memref<8x128xf32, #tpu.memory_space<vmem>>, %arg2: memref<16x128xf32, #tpu.memory_space<vmem>>, %arg3: memref<8x16xf32, #tpu.memory_space<vmem>>, %arg4: memref<128x32xbf16, #tpu.memory_space<vmem>>, %arg5: memref<128x32xbf16, #tpu.memory_space<vmem>>, %arg6: memref<128x32xbf16, #tpu.memory_space<vmem>>, %arg7: memref<128x32xbf16, #tpu.memory_space<vmem>>, %arg8: memref<32x32xbf16, #tpu.memory_space<vmem>>, %arg9: memref<10x32xf32, #tpu.memory_space<vmem>>, %arg10: memref<32x128xbf16, #tpu.memory_space<vmem>>, %arg11: memref<1x128xf32, #tpu.memory_space<vmem>>, %arg12: memref<128x32xbf16, #tpu.memory_space<vmem>>, %arg13: memref<32x128xbf16, #tpu.memory_space<vmem>>, %arg14: memref<1x128xf32, #tpu.memory_space<vmem>>, %arg15: memref<8x128xf32, #tpu.memory_space<vmem>>) attributes {dimension_semantics = [#tpu.dimension_semantics<parallel>], iteration_bounds = array<i64: 2>, scalar_prefetch = 0 : i64, scratch_operands = 0 : i64, tpu.core_type = #tpu.core_type<tc>, window_params = [{transform_indices = @transform_0, window_bounds = array<i64: 8, 128>}, {transform_indices = @transform_1, window_bounds = array<i64: 16, 128>}, {transform_indices = @transform_2, window_bounds = array<i64: 8, 16>}, {pipeline_mode = #tpu.pipeline_mode<synchronous>, transform_indices = @transform_3, window_bounds = array<i64: 128, 32>}, {pipeline_mode = #tpu.pipeline_mode<synchronous>, transform_indices = @transform_4, window_bounds = array<i64: 128, 32>}, {pipeline_mode = #tpu.pipeline_mode<synchronous>, transform_indices = @transform_5, window_bounds = array<i64: 128, 32>}, {pipeline_mode = #tpu.pipeline_mode<synchronous>, transform_indices = @transform_6, window_bounds = array<i64: 128, 32>}, {pipeline_mode = #tpu.pipeline_mode<synchronous>, transform_indices = @transform_7, window_bounds = array<i64: 32, 32>}, {pipeline_mode = #tpu.pipeline_mode<synchronous>, transform_indices = @transform_8, window_bounds = array<i64: 10, 32>}, {pipeline_mode = #tpu.pipeline_mode<synchronous>, transform_indices = @transform_9, window_bounds = array<i64: 32, 128>}, {pipeline_mode = #tpu.pipeline_mode<synchronous>, transform_indices = @transform_10, window_bounds = array<i64: 1, 128>}, {pipeline_mode = #tpu.pipeline_mode<synchronous>, transform_indices = @transform_11, window_bounds = array<i64: 128, 32>}, {pipeline_mode = #tpu.pipeline_mode<synchronous>, transform_indices = @transform_12, window_bounds = array<i64: 32, 128>}, {pipeline_mode = #tpu.pipeline_mode<synchronous>, transform_indices = @transform_13, window_bounds = array<i64: 1, 128>}, {transform_indices = @transform_14, window_bounds = array<i64: 8, 128>}]} {
    %c0 = arith.constant 0 : index
    %c0_0 = arith.constant 0 : index
    %0 = vector.load %arg1[%c0, %c0_0] : memref<8x128xf32, #tpu.memory_space<vmem>>, vector<8x128xf32>
    %c0_1 = arith.constant 0 : index
    %c0_2 = arith.constant 0 : index
    %1 = vector.load %arg2[%c0_1, %c0_2] : memref<16x128xf32, #tpu.memory_space<vmem>>, vector<16x128xf32>
    %c0_3 = arith.constant 0 : index
    %c0_4 = arith.constant 0 : index
    %2 = vector.load %arg3[%c0_3, %c0_4] : memref<8x16xf32, #tpu.memory_space<vmem>>, vector<1x16xf32>
    %c0_5 = arith.constant 0 : index
    %c0_6 = arith.constant 0 : index
    %3 = vector.load %arg9[%c0_5, %c0_6] : memref<10x32xf32, #tpu.memory_space<vmem>>, vector<1x32xf32>
    %c1 = arith.constant 1 : index
    %c0_7 = arith.constant 0 : index
    %4 = vector.load %arg9[%c1, %c0_7] : memref<10x32xf32, #tpu.memory_space<vmem>>, vector<1x32xf32>
    %c2 = arith.constant 2 : index
    %c0_8 = arith.constant 0 : index
    %5 = vector.load %arg9[%c2, %c0_8] : memref<10x32xf32, #tpu.memory_space<vmem>>, vector<1x32xf32>
    %c3 = arith.constant 3 : index
    %c0_9 = arith.constant 0 : index
    %6 = vector.load %arg9[%c3, %c0_9] : memref<10x32xf32, #tpu.memory_space<vmem>>, vector<1x32xf32>
    %c4 = arith.constant 4 : index
    %c0_10 = arith.constant 0 : index
    %7 = vector.load %arg9[%c4, %c0_10] : memref<10x32xf32, #tpu.memory_space<vmem>>, vector<1x32xf32>
    %c5 = arith.constant 5 : index
    %c0_11 = arith.constant 0 : index
    %8 = vector.load %arg9[%c5, %c0_11] : memref<10x32xf32, #tpu.memory_space<vmem>>, vector<1x32xf32>
    %c6 = arith.constant 6 : index
    %c0_12 = arith.constant 0 : index
    %9 = vector.load %arg9[%c6, %c0_12] : memref<10x32xf32, #tpu.memory_space<vmem>>, vector<1x32xf32>
    %c7 = arith.constant 7 : index
    %c0_13 = arith.constant 0 : index
    %10 = vector.load %arg9[%c7, %c0_13] : memref<10x32xf32, #tpu.memory_space<vmem>>, vector<1x32xf32>
    %c8 = arith.constant 8 : index
    %c0_14 = arith.constant 0 : index
    %11 = vector.load %arg9[%c8, %c0_14] : memref<10x32xf32, #tpu.memory_space<vmem>>, vector<1x32xf32>
    %c9 = arith.constant 9 : index
    %c0_15 = arith.constant 0 : index
    %12 = vector.load %arg9[%c9, %c0_15] : memref<10x32xf32, #tpu.memory_space<vmem>>, vector<1x32xf32>
    %13 = arith.truncf %0 : vector<8x128xf32> to vector<8x128xbf16>
    %14 = arith.truncf %1 : vector<16x128xf32> to vector<16x128xbf16>
    %c0_16 = arith.constant 0 : index
    %c0_17 = arith.constant 0 : index
    %15 = vector.load %arg4[%c0_16, %c0_17] : memref<128x32xbf16, #tpu.memory_space<vmem>>, vector<128x32xbf16>
    %cst = arith.constant dense<0.000000e+00> : vector<8x32xf32>
    %16 = tpu.matmul %13, %15, %cst {dimension_numbers = #tpu.dot_dimension_numbers<[1], [0], [0], [1], [0, 0, 1, 1], [], []>} : vector<8x128xbf16>, vector<128x32xbf16>, vector<8x32xf32> -> vector<8x32xf32>
    %17 = vector.broadcast %3 : vector<1x32xf32> to vector<8x32xf32>
    %18 = arith.addf %16, %17 : vector<8x32xf32>
    %c0_18 = arith.constant 0 : index
    %c0_19 = arith.constant 0 : index
    %19 = vector.load %arg5[%c0_18, %c0_19] : memref<128x32xbf16, #tpu.memory_space<vmem>>, vector<128x32xbf16>
    %cst_20 = arith.constant dense<0.000000e+00> : vector<8x32xf32>
    %20 = tpu.matmul %13, %19, %cst_20 {dimension_numbers = #tpu.dot_dimension_numbers<[1], [0], [0], [1], [0, 0, 1, 1], [], []>} : vector<8x128xbf16>, vector<128x32xbf16>, vector<8x32xf32> -> vector<8x32xf32>
    %21 = vector.broadcast %4 : vector<1x32xf32> to vector<8x32xf32>
    %22 = arith.addf %20, %21 : vector<8x32xf32>
    %c0_21 = arith.constant 0 : index
    %c0_22 = arith.constant 0 : index
    %23 = vector.load %arg6[%c0_21, %c0_22] : memref<128x32xbf16, #tpu.memory_space<vmem>>, vector<128x32xbf16>
    %cst_23 = arith.constant dense<0.000000e+00> : vector<16x32xf32>
    %24 = tpu.matmul %14, %23, %cst_23 {dimension_numbers = #tpu.dot_dimension_numbers<[1], [0], [0], [1], [0, 0, 1, 1], [], []>} : vector<16x128xbf16>, vector<128x32xbf16>, vector<16x32xf32> -> vector<16x32xf32>
    %25 = vector.broadcast %5 : vector<1x32xf32> to vector<16x32xf32>
    %26 = arith.addf %24, %25 : vector<16x32xf32>
    %c0_24 = arith.constant 0 : index
    %c0_25 = arith.constant 0 : index
    %27 = vector.load %arg7[%c0_24, %c0_25] : memref<128x32xbf16, #tpu.memory_space<vmem>>, vector<128x32xbf16>
    %cst_26 = arith.constant dense<0.000000e+00> : vector<16x32xf32>
    %28 = tpu.matmul %14, %27, %cst_26 {dimension_numbers = #tpu.dot_dimension_numbers<[1], [0], [0], [1], [0, 0, 1, 1], [], []>} : vector<16x128xbf16>, vector<128x32xbf16>, vector<16x32xf32> -> vector<16x32xf32>
    %29 = vector.broadcast %6 : vector<1x32xf32> to vector<16x32xf32>
    %30 = arith.addf %28, %29 : vector<16x32xf32>
    %31 = tpu.iota {dimensions = array<i32: 1>} : vector<1x32xi32>
    %cst_27 = arith.constant 0.000000e+00 : f32
    %32 = vector.broadcast %cst_27 : f32 to vector<8x32xf32>
    %33 = arith.truncf %26 : vector<16x32xf32> to vector<16x32xbf16>
    %34 = arith.truncf %30 : vector<16x32xf32> to vector<16x32xbf16>
    %c0_i32 = arith.constant 0 : i32
    %35 = vector.broadcast %c0_i32 : i32 to vector<1x32xi32>
    %36 = arith.cmpi sge, %31, %35 : vector<1x32xi32>
    %c8_i32 = arith.constant 8 : i32
    %37 = vector.broadcast %c8_i32 : i32 to vector<1x32xi32>
    %38 = arith.cmpi slt, %31, %37 : vector<1x32xi32>
    %39 = arith.andi %36, %38 : vector<1x32xi1>
    %40 = arith.extui %39 : vector<1x32xi1> to vector<1x32xi32>
    %41 = arith.sitofp %40 : vector<1x32xi32> to vector<1x32xf32>
    %42 = vector.broadcast %41 : vector<1x32xf32> to vector<8x32xf32>
    %43 = arith.mulf %22, %42 : vector<8x32xf32>
    %44 = arith.truncf %43 : vector<8x32xf32> to vector<8x32xbf16>
    %cst_28 = arith.constant dense<0.000000e+00> : vector<8x16xf32>
    %45 = tpu.matmul %44, %33, %cst_28 {dimension_numbers = #tpu.dot_dimension_numbers<[1], [1], [0], [0], [0, 0, 1, 0], [], []>} : vector<8x32xbf16>, vector<16x32xbf16>, vector<8x16xf32> -> vector<8x16xf32>
    %46 = vector.broadcast %2 : vector<1x16xf32> to vector<8x16xf32>
    %47 = arith.addf %45, %46 : vector<8x16xf32>
    %cst_29 = arith.constant dense<0xFF800000> : vector<8xf32>
    %48 = vector.multi_reduction <maximumf>, %47, %cst_29 [1] : vector<8x16xf32> to vector<8xf32>
    %49 = vector.shape_cast %48 : vector<8xf32> to vector<8x1xf32>
    %50 = vector.broadcast %49 : vector<8x1xf32> to vector<8x16xf32>
    %51 = arith.subf %47, %50 : vector<8x16xf32>
    %52 = math.exp %51 : vector<8x16xf32>
    %cst_30 = arith.constant dense<0.000000e+00> : vector<8xf32>
    %53 = vector.multi_reduction <add>, %52, %cst_30 [1] : vector<8x16xf32> to vector<8xf32>
    %54 = vector.shape_cast %53 : vector<8xf32> to vector<8x1xf32>
    %55 = tpu.reciprocal %54 {approx = true} : vector<8x1xf32> -> vector<8x1xf32>
    %56 = arith.truncf %52 : vector<8x16xf32> to vector<8x16xbf16>
    %cst_31 = arith.constant dense<0.000000e+00> : vector<8x32xf32>
    %57 = tpu.matmul %56, %34, %cst_31 {dimension_numbers = #tpu.dot_dimension_numbers<[1], [0], [0], [1], [0, 0, 1, 1], [], []>} : vector<8x16xbf16>, vector<16x32xbf16>, vector<8x32xf32> -> vector<8x32xf32>
    %58 = vector.broadcast %41 : vector<1x32xf32> to vector<8x32xf32>
    %59 = vector.broadcast %55 : vector<8x1xf32> to vector<8x32xf32>
    %60 = arith.mulf %58, %59 : vector<8x32xf32>
    %61 = arith.mulf %57, %60 : vector<8x32xf32>
    %62 = arith.addf %32, %61 : vector<8x32xf32>
    %c8_i32_32 = arith.constant 8 : i32
    %63 = vector.broadcast %c8_i32_32 : i32 to vector<1x32xi32>
    %64 = arith.cmpi sge, %31, %63 : vector<1x32xi32>
    %c16_i32 = arith.constant 16 : i32
    %65 = vector.broadcast %c16_i32 : i32 to vector<1x32xi32>
    %66 = arith.cmpi slt, %31, %65 : vector<1x32xi32>
    %67 = arith.andi %64, %66 : vector<1x32xi1>
    %68 = arith.extui %67 : vector<1x32xi1> to vector<1x32xi32>
    %69 = arith.sitofp %68 : vector<1x32xi32> to vector<1x32xf32>
    %70 = vector.broadcast %69 : vector<1x32xf32> to vector<8x32xf32>
    %71 = arith.mulf %22, %70 : vector<8x32xf32>
    %72 = arith.truncf %71 : vector<8x32xf32> to vector<8x32xbf16>
    %cst_33 = arith.constant dense<0.000000e+00> : vector<8x16xf32>
    %73 = tpu.matmul %72, %33, %cst_33 {dimension_numbers = #tpu.dot_dimension_numbers<[1], [1], [0], [0], [0, 0, 1, 0], [], []>} : vector<8x32xbf16>, vector<16x32xbf16>, vector<8x16xf32> -> vector<8x16xf32>
    %74 = vector.broadcast %2 : vector<1x16xf32> to vector<8x16xf32>
    %75 = arith.addf %73, %74 : vector<8x16xf32>
    %cst_34 = arith.constant dense<0xFF800000> : vector<8xf32>
    %76 = vector.multi_reduction <maximumf>, %75, %cst_34 [1] : vector<8x16xf32> to vector<8xf32>
    %77 = vector.shape_cast %76 : vector<8xf32> to vector<8x1xf32>
    %78 = vector.broadcast %77 : vector<8x1xf32> to vector<8x16xf32>
    %79 = arith.subf %75, %78 : vector<8x16xf32>
    %80 = math.exp %79 : vector<8x16xf32>
    %cst_35 = arith.constant dense<0.000000e+00> : vector<8xf32>
    %81 = vector.multi_reduction <add>, %80, %cst_35 [1] : vector<8x16xf32> to vector<8xf32>
    %82 = vector.shape_cast %81 : vector<8xf32> to vector<8x1xf32>
    %83 = tpu.reciprocal %82 {approx = true} : vector<8x1xf32> -> vector<8x1xf32>
    %84 = arith.truncf %80 : vector<8x16xf32> to vector<8x16xbf16>
    %cst_36 = arith.constant dense<0.000000e+00> : vector<8x32xf32>
    %85 = tpu.matmul %84, %34, %cst_36 {dimension_numbers = #tpu.dot_dimension_numbers<[1], [0], [0], [1], [0, 0, 1, 1], [], []>} : vector<8x16xbf16>, vector<16x32xbf16>, vector<8x32xf32> -> vector<8x32xf32>
    %86 = vector.broadcast %69 : vector<1x32xf32> to vector<8x32xf32>
    %87 = vector.broadcast %83 : vector<8x1xf32> to vector<8x32xf32>
    %88 = arith.mulf %86, %87 : vector<8x32xf32>
    %89 = arith.mulf %85, %88 : vector<8x32xf32>
    %90 = arith.addf %62, %89 : vector<8x32xf32>
    %c16_i32_37 = arith.constant 16 : i32
    %91 = vector.broadcast %c16_i32_37 : i32 to vector<1x32xi32>
    %92 = arith.cmpi sge, %31, %91 : vector<1x32xi32>
    %c24_i32 = arith.constant 24 : i32
    %93 = vector.broadcast %c24_i32 : i32 to vector<1x32xi32>
    %94 = arith.cmpi slt, %31, %93 : vector<1x32xi32>
    %95 = arith.andi %92, %94 : vector<1x32xi1>
    %96 = arith.extui %95 : vector<1x32xi1> to vector<1x32xi32>
    %97 = arith.sitofp %96 : vector<1x32xi32> to vector<1x32xf32>
    %98 = vector.broadcast %97 : vector<1x32xf32> to vector<8x32xf32>
    %99 = arith.mulf %22, %98 : vector<8x32xf32>
    %100 = arith.truncf %99 : vector<8x32xf32> to vector<8x32xbf16>
    %cst_38 = arith.constant dense<0.000000e+00> : vector<8x16xf32>
    %101 = tpu.matmul %100, %33, %cst_38 {dimension_numbers = #tpu.dot_dimension_numbers<[1], [1], [0], [0], [0, 0, 1, 0], [], []>} : vector<8x32xbf16>, vector<16x32xbf16>, vector<8x16xf32> -> vector<8x16xf32>
    %102 = vector.broadcast %2 : vector<1x16xf32> to vector<8x16xf32>
    %103 = arith.addf %101, %102 : vector<8x16xf32>
    %cst_39 = arith.constant dense<0xFF800000> : vector<8xf32>
    %104 = vector.multi_reduction <maximumf>, %103, %cst_39 [1] : vector<8x16xf32> to vector<8xf32>
    %105 = vector.shape_cast %104 : vector<8xf32> to vector<8x1xf32>
    %106 = vector.broadcast %105 : vector<8x1xf32> to vector<8x16xf32>
    %107 = arith.subf %103, %106 : vector<8x16xf32>
    %108 = math.exp %107 : vector<8x16xf32>
    %cst_40 = arith.constant dense<0.000000e+00> : vector<8xf32>
    %109 = vector.multi_reduction <add>, %108, %cst_40 [1] : vector<8x16xf32> to vector<8xf32>
    %110 = vector.shape_cast %109 : vector<8xf32> to vector<8x1xf32>
    %111 = tpu.reciprocal %110 {approx = true} : vector<8x1xf32> -> vector<8x1xf32>
    %112 = arith.truncf %108 : vector<8x16xf32> to vector<8x16xbf16>
    %cst_41 = arith.constant dense<0.000000e+00> : vector<8x32xf32>
    %113 = tpu.matmul %112, %34, %cst_41 {dimension_numbers = #tpu.dot_dimension_numbers<[1], [0], [0], [1], [0, 0, 1, 1], [], []>} : vector<8x16xbf16>, vector<16x32xbf16>, vector<8x32xf32> -> vector<8x32xf32>
    %114 = vector.broadcast %97 : vector<1x32xf32> to vector<8x32xf32>
    %115 = vector.broadcast %111 : vector<8x1xf32> to vector<8x32xf32>
    %116 = arith.mulf %114, %115 : vector<8x32xf32>
    %117 = arith.mulf %113, %116 : vector<8x32xf32>
    %118 = arith.addf %90, %117 : vector<8x32xf32>
    %c24_i32_42 = arith.constant 24 : i32
    %119 = vector.broadcast %c24_i32_42 : i32 to vector<1x32xi32>
    %120 = arith.cmpi sge, %31, %119 : vector<1x32xi32>
    %c32_i32 = arith.constant 32 : i32
    %121 = vector.broadcast %c32_i32 : i32 to vector<1x32xi32>
    %122 = arith.cmpi slt, %31, %121 : vector<1x32xi32>
    %123 = arith.andi %120, %122 : vector<1x32xi1>
    %124 = arith.extui %123 : vector<1x32xi1> to vector<1x32xi32>
    %125 = arith.sitofp %124 : vector<1x32xi32> to vector<1x32xf32>
    %126 = vector.broadcast %125 : vector<1x32xf32> to vector<8x32xf32>
    %127 = arith.mulf %22, %126 : vector<8x32xf32>
    %128 = arith.truncf %127 : vector<8x32xf32> to vector<8x32xbf16>
    %cst_43 = arith.constant dense<0.000000e+00> : vector<8x16xf32>
    %129 = tpu.matmul %128, %33, %cst_43 {dimension_numbers = #tpu.dot_dimension_numbers<[1], [1], [0], [0], [0, 0, 1, 0], [], []>} : vector<8x32xbf16>, vector<16x32xbf16>, vector<8x16xf32> -> vector<8x16xf32>
    %130 = vector.broadcast %2 : vector<1x16xf32> to vector<8x16xf32>
    %131 = arith.addf %129, %130 : vector<8x16xf32>
    %cst_44 = arith.constant dense<0xFF800000> : vector<8xf32>
    %132 = vector.multi_reduction <maximumf>, %131, %cst_44 [1] : vector<8x16xf32> to vector<8xf32>
    %133 = vector.shape_cast %132 : vector<8xf32> to vector<8x1xf32>
    %134 = vector.broadcast %133 : vector<8x1xf32> to vector<8x16xf32>
    %135 = arith.subf %131, %134 : vector<8x16xf32>
    %136 = math.exp %135 : vector<8x16xf32>
    %cst_45 = arith.constant dense<0.000000e+00> : vector<8xf32>
    %137 = vector.multi_reduction <add>, %136, %cst_45 [1] : vector<8x16xf32> to vector<8xf32>
    %138 = vector.shape_cast %137 : vector<8xf32> to vector<8x1xf32>
    %139 = tpu.reciprocal %138 {approx = true} : vector<8x1xf32> -> vector<8x1xf32>
    %140 = arith.truncf %136 : vector<8x16xf32> to vector<8x16xbf16>
    %cst_46 = arith.constant dense<0.000000e+00> : vector<8x32xf32>
    %141 = tpu.matmul %140, %34, %cst_46 {dimension_numbers = #tpu.dot_dimension_numbers<[1], [0], [0], [1], [0, 0, 1, 1], [], []>} : vector<8x16xbf16>, vector<16x32xbf16>, vector<8x32xf32> -> vector<8x32xf32>
    %142 = vector.broadcast %125 : vector<1x32xf32> to vector<8x32xf32>
    %143 = vector.broadcast %139 : vector<8x1xf32> to vector<8x32xf32>
    %144 = arith.mulf %142, %143 : vector<8x32xf32>
    %145 = arith.mulf %141, %144 : vector<8x32xf32>
    %146 = arith.addf %118, %145 : vector<8x32xf32>
    %147 = arith.truncf %146 : vector<8x32xf32> to vector<8x32xbf16>
    %c0_47 = arith.constant 0 : index
    %c0_48 = arith.constant 0 : index
    %148 = vector.load %arg8[%c0_47, %c0_48] : memref<32x32xbf16, #tpu.memory_space<vmem>>, vector<32x32xbf16>
    %cst_49 = arith.constant dense<0.000000e+00> : vector<8x32xf32>
    %149 = tpu.matmul %147, %148, %cst_49 {dimension_numbers = #tpu.dot_dimension_numbers<[1], [0], [0], [1], [0, 0, 1, 1], [], []>} : vector<8x32xbf16>, vector<32x32xbf16>, vector<8x32xf32> -> vector<8x32xf32>
    %150 = vector.broadcast %7 : vector<1x32xf32> to vector<8x32xf32>
    %151 = arith.addf %149, %150 : vector<8x32xf32>
    %152 = arith.addf %18, %151 : vector<8x32xf32>
    %cst_50 = arith.constant dense<0.000000e+00> : vector<8xf32>
    %153 = vector.multi_reduction <add>, %152, %cst_50 [1] : vector<8x32xf32> to vector<8xf32>
    %154 = vector.shape_cast %153 : vector<8xf32> to vector<8x1xf32>
    %cst_51 = arith.constant 3.200000e+01 : f32
    %155 = vector.broadcast %cst_51 : f32 to vector<8x1xf32>
    %156 = arith.divf %154, %155 : vector<8x1xf32>
    %157 = vector.broadcast %156 : vector<8x1xf32> to vector<8x32xf32>
    %158 = arith.subf %152, %157 : vector<8x32xf32>
    %159 = arith.mulf %158, %158 : vector<8x32xf32>
    %cst_52 = arith.constant dense<0.000000e+00> : vector<8xf32>
    %160 = vector.multi_reduction <add>, %159, %cst_52 [1] : vector<8x32xf32> to vector<8xf32>
    %161 = vector.shape_cast %160 : vector<8xf32> to vector<8x1xf32>
    %cst_53 = arith.constant 3.200000e+01 : f32
    %162 = vector.broadcast %cst_53 : f32 to vector<8x1xf32>
    %163 = arith.divf %161, %162 : vector<8x1xf32>
    %cst_54 = arith.constant 9.99999974E-6 : f32
    %164 = vector.broadcast %cst_54 : f32 to vector<8x1xf32>
    %165 = arith.addf %163, %164 : vector<8x1xf32>
    %166 = math.rsqrt %165 : vector<8x1xf32>
    %167 = vector.broadcast %166 : vector<8x1xf32> to vector<8x32xf32>
    %168 = arith.mulf %158, %167 : vector<8x32xf32>
    %169 = vector.broadcast %8 : vector<1x32xf32> to vector<8x32xf32>
    %170 = arith.mulf %168, %169 : vector<8x32xf32>
    %171 = vector.broadcast %9 : vector<1x32xf32> to vector<8x32xf32>
    %172 = arith.addf %170, %171 : vector<8x32xf32>
    %173 = arith.truncf %172 : vector<8x32xf32> to vector<8x32xbf16>
    %c0_55 = arith.constant 0 : index
    %c0_56 = arith.constant 0 : index
    %174 = vector.load %arg10[%c0_55, %c0_56] : memref<32x128xbf16, #tpu.memory_space<vmem>>, vector<32x128xbf16>
    %cst_57 = arith.constant dense<0.000000e+00> : vector<8x128xf32>
    %175 = tpu.matmul %173, %174, %cst_57 {dimension_numbers = #tpu.dot_dimension_numbers<[1], [0], [0], [1], [0, 0, 1, 1], [], []>} : vector<8x32xbf16>, vector<32x128xbf16>, vector<8x128xf32> -> vector<8x128xf32>
    %c0_58 = arith.constant 0 : index
    %c0_59 = arith.constant 0 : index
    %176 = vector.load %arg11[%c0_58, %c0_59] : memref<1x128xf32, #tpu.memory_space<vmem>>, vector<1x128xf32>
    %177 = vector.broadcast %176 : vector<1x128xf32> to vector<8x128xf32>
    %178 = arith.addf %175, %177 : vector<8x128xf32>
    %cst_60 = arith.constant 0.000000e+00 : f32
    %179 = vector.broadcast %cst_60 : f32 to vector<8x128xf32>
    %180 = arith.maximumf %178, %179 : vector<8x128xf32>
    %181 = arith.truncf %180 : vector<8x128xf32> to vector<8x128xbf16>
    %c0_61 = arith.constant 0 : index
    %c0_62 = arith.constant 0 : index
    %182 = vector.load %arg12[%c0_61, %c0_62] : memref<128x32xbf16, #tpu.memory_space<vmem>>, vector<128x32xbf16>
    %cst_63 = arith.constant dense<0.000000e+00> : vector<8x32xf32>
    %183 = tpu.matmul %181, %182, %cst_63 {dimension_numbers = #tpu.dot_dimension_numbers<[1], [0], [0], [1], [0, 0, 1, 1], [], []>} : vector<8x128xbf16>, vector<128x32xbf16>, vector<8x32xf32> -> vector<8x32xf32>
    %184 = vector.broadcast %10 : vector<1x32xf32> to vector<8x32xf32>
    %185 = arith.addf %183, %184 : vector<8x32xf32>
    %186 = arith.addf %172, %185 : vector<8x32xf32>
    %cst_64 = arith.constant dense<0.000000e+00> : vector<8xf32>
    %187 = vector.multi_reduction <add>, %186, %cst_64 [1] : vector<8x32xf32> to vector<8xf32>
    %188 = vector.shape_cast %187 : vector<8xf32> to vector<8x1xf32>
    %cst_65 = arith.constant 3.200000e+01 : f32
    %189 = vector.broadcast %cst_65 : f32 to vector<8x1xf32>
    %190 = arith.divf %188, %189 : vector<8x1xf32>
    %191 = vector.broadcast %190 : vector<8x1xf32> to vector<8x32xf32>
    %192 = arith.subf %186, %191 : vector<8x32xf32>
    %193 = arith.mulf %192, %192 : vector<8x32xf32>
    %cst_66 = arith.constant dense<0.000000e+00> : vector<8xf32>
    %194 = vector.multi_reduction <add>, %193, %cst_66 [1] : vector<8x32xf32> to vector<8xf32>
    %195 = vector.shape_cast %194 : vector<8xf32> to vector<8x1xf32>
    %cst_67 = arith.constant 3.200000e+01 : f32
    %196 = vector.broadcast %cst_67 : f32 to vector<8x1xf32>
    %197 = arith.divf %195, %196 : vector<8x1xf32>
    %cst_68 = arith.constant 9.99999974E-6 : f32
    %198 = vector.broadcast %cst_68 : f32 to vector<8x1xf32>
    %199 = arith.addf %197, %198 : vector<8x1xf32>
    %200 = math.rsqrt %199 : vector<8x1xf32>
    %201 = vector.broadcast %200 : vector<8x1xf32> to vector<8x32xf32>
    %202 = arith.mulf %192, %201 : vector<8x32xf32>
    %203 = vector.broadcast %11 : vector<1x32xf32> to vector<8x32xf32>
    %204 = arith.mulf %202, %203 : vector<8x32xf32>
    %205 = vector.broadcast %12 : vector<1x32xf32> to vector<8x32xf32>
    %206 = arith.addf %204, %205 : vector<8x32xf32>
    %207 = arith.truncf %206 : vector<8x32xf32> to vector<8x32xbf16>
    %c0_69 = arith.constant 0 : index
    %c0_70 = arith.constant 0 : index
    %208 = vector.load %arg13[%c0_69, %c0_70] : memref<32x128xbf16, #tpu.memory_space<vmem>>, vector<32x128xbf16>
    %cst_71 = arith.constant dense<0.000000e+00> : vector<8x128xf32>
    %209 = tpu.matmul %207, %208, %cst_71 {dimension_numbers = #tpu.dot_dimension_numbers<[1], [0], [0], [1], [0, 0, 1, 1], [], []>} : vector<8x32xbf16>, vector<32x128xbf16>, vector<8x128xf32> -> vector<8x128xf32>
    %c0_72 = arith.constant 0 : index
    %c0_73 = arith.constant 0 : index
    %210 = vector.load %arg14[%c0_72, %c0_73] : memref<1x128xf32, #tpu.memory_space<vmem>>, vector<1x128xf32>
    %211 = vector.broadcast %210 : vector<1x128xf32> to vector<8x128xf32>
    %212 = arith.addf %209, %211 : vector<8x128xf32>
    %213 = arith.addf %212, %0 : vector<8x128xf32>
    %c0_74 = arith.constant 0 : index
    %c0_75 = arith.constant 0 : index
    %214 = vector.load %arg15[%c0_74, %c0_75] : memref<8x128xf32, #tpu.memory_space<vmem>>, vector<8x128xf32>
    tpu.vector_store %arg15[%c0_74, %c0_75], %213 {strides = array<i32>} : memref<8x128xf32, #tpu.memory_space<vmem>>, vector<8x128xf32>,
    return
  }
  func.func @transform_0(%arg0: i32) -> (i32, i32) {
    %c0_i32 = arith.constant 0 : i32
    %c0_i32_0 = arith.constant 0 : i32
    return %arg0, %c0_i32 : i32, i32
  }
  func.func @transform_1(%arg0: i32) -> (i32, i32) {
    %c0_i32 = arith.constant 0 : i32
    %c0_i32_0 = arith.constant 0 : i32
    return %arg0, %c0_i32 : i32, i32
  }
  func.func @transform_2(%arg0: i32) -> (i32, i32) {
    %c0_i32 = arith.constant 0 : i32
    %c0_i32_0 = arith.constant 0 : i32
    return %arg0, %c0_i32 : i32, i32
  }
  func.func @transform_3(%arg0: i32) -> (i32, i32) {
    %c0_i32 = arith.constant 0 : i32
    %c0_i32_0 = arith.constant 0 : i32
    %c0_i32_1 = arith.constant 0 : i32
    return %c0_i32, %c0_i32_0 : i32, i32
  }
  func.func @transform_4(%arg0: i32) -> (i32, i32) {
    %c0_i32 = arith.constant 0 : i32
    %c0_i32_0 = arith.constant 0 : i32
    %c0_i32_1 = arith.constant 0 : i32
    return %c0_i32, %c0_i32_0 : i32, i32
  }
  func.func @transform_5(%arg0: i32) -> (i32, i32) {
    %c0_i32 = arith.constant 0 : i32
    %c0_i32_0 = arith.constant 0 : i32
    %c0_i32_1 = arith.constant 0 : i32
    return %c0_i32, %c0_i32_0 : i32, i32
  }
  func.func @transform_6(%arg0: i32) -> (i32, i32) {
    %c0_i32 = arith.constant 0 : i32
    %c0_i32_0 = arith.constant 0 : i32
    %c0_i32_1 = arith.constant 0 : i32
    return %c0_i32, %c0_i32_0 : i32, i32
  }
  func.func @transform_7(%arg0: i32) -> (i32, i32) {
    %c0_i32 = arith.constant 0 : i32
    %c0_i32_0 = arith.constant 0 : i32
    %c0_i32_1 = arith.constant 0 : i32
    return %c0_i32, %c0_i32_0 : i32, i32
  }
  func.func @transform_8(%arg0: i32) -> (i32, i32) {
    %c0_i32 = arith.constant 0 : i32
    %c0_i32_0 = arith.constant 0 : i32
    %c0_i32_1 = arith.constant 0 : i32
    return %c0_i32, %c0_i32_0 : i32, i32
  }
  func.func @transform_9(%arg0: i32) -> (i32, i32) {
    %c0_i32 = arith.constant 0 : i32
    %c0_i32_0 = arith.constant 0 : i32
    %c0_i32_1 = arith.constant 0 : i32
    return %c0_i32, %c0_i32_0 : i32, i32
  }
  func.func @transform_10(%arg0: i32) -> (i32, i32) {
    %c0_i32 = arith.constant 0 : i32
    %c0_i32_0 = arith.constant 0 : i32
    %c0_i32_1 = arith.constant 0 : i32
    return %c0_i32, %c0_i32_0 : i32, i32
  }
  func.func @transform_11(%arg0: i32) -> (i32, i32) {
    %c0_i32 = arith.constant 0 : i32
    %c0_i32_0 = arith.constant 0 : i32
    %c0_i32_1 = arith.constant 0 : i32
    return %c0_i32, %c0_i32_0 : i32, i32
  }
  func.func @transform_12(%arg0: i32) -> (i32, i32) {
    %c0_i32 = arith.constant 0 : i32
    %c0_i32_0 = arith.constant 0 : i32
    %c0_i32_1 = arith.constant 0 : i32
    return %c0_i32, %c0_i32_0 : i32, i32
  }
  func.func @transform_13(%arg0: i32) -> (i32, i32) {
    %c0_i32 = arith.constant 0 : i32
    %c0_i32_0 = arith.constant 0 : i32
    %c0_i32_1 = arith.constant 0 : i32
    return %c0_i32, %c0_i32_0 : i32, i32
  }
  func.func @transform_14(%arg0: i32) -> (i32, i32) {
    %c0_i32 = arith.constant 0 : i32
    %c0_i32_0 = arith.constant 0 : i32
    return %arg0, %c0_i32 : i32, i32
  }
}

</mosaic_0001>

<llo_original>
// kernel: tpu_custom_call.1
$region0: #{tpu_custom_call.1}
  #allocation0 [shape = 'u32[]', space=smem, size = 0x4, offset = 0x4, fixed_abs, tag = 'smem constant byte address 0x4 - core index']
  #allocation1 [shape = 'u32[72,128]{1,0:T(1,128)}', space=vmem, size = 0x9000, scoped, tag = 'internal scratch']
  %s0 = inlined_call_operand.vmem [shape: f32[16,128], index: 0, kind: input, shape index: {}]
  %s1 = inlined_call_operand.vmem [shape: f32[32,128], index: 1, kind: input, shape index: {}]
  %s2 = inlined_call_operand.vmem [shape: f32[16,16], index: 2, kind: input, shape index: {}]
  %s3 = inlined_call_operand.vmem [shape: bf16[128,32], index: 3, kind: input, shape index: {}]
  %s4 = inlined_call_operand.vmem [shape: bf16[128,32], index: 4, kind: input, shape index: {}]
  %s5 = inlined_call_operand.vmem [shape: bf16[128,32], index: 5, kind: input, shape index: {}]
  %s6 = inlined_call_operand.vmem [shape: bf16[128,32], index: 6, kind: input, shape index: {}]
  %s7 = inlined_call_operand.vmem [shape: bf16[32,32], index: 7, kind: input, shape index: {}]
  %s8 = inlined_call_operand.vmem [shape: f32[10,32], index: 8, kind: input, shape index: {}]
  %s9 = inlined_call_operand.vmem [shape: bf16[32,128], index: 9, kind: input, shape index: {}]
  %s10 = inlined_call_operand.vmem [shape: f32[1,128], index: 10, kind: input, shape index: {}]
  %s11 = inlined_call_operand.vmem [shape: bf16[128,32], index: 11, kind: input, shape index: {}]
  %s12 = inlined_call_operand.vmem [shape: bf16[32,128], index: 12, kind: input, shape index: {}]
  %s13 = inlined_call_operand.vmem [shape: f32[1,128], index: 13, kind: input, shape index: {}]
  %s14 = inlined_call_operand.hbm [shape: f32[16,128], index: 14, kind: output, shape index: {}]
  %s15 = sld [smem:[#allocation0]]
  $region89: #{tpu_custom_call.1} parent=0
    _
  %s17 = ssub.s32 1, %s15
  %s18 = scalar_select 0, %s17, %s15
  $region1: #{tpu_custom_call.1} parent=0
    #allocation2 [shape = 'u8[8192]{0}', space=vmem, size = 0x2000, scoped, tag = 'output window, operand 0']
    #allocation3 [shape = 's32[2]{0}', space=sflag, size = 0x8, scoped, tag = 'scoped memory for tpu_custom_call.1']
    %19 = vsyncpa [#allocation3], 0
    %s20 = scalar_lea.sflag [#allocation3], 1
    %21 = vsyncpa %s20, 0
    loop: start=0, step=1, limit=4
    $region2: #{tpu_custom_call.1} parent=1 // loop_pre_header
      _
    $region3: #{tpu_custom_call.1} parent=1 // loop_header
      %s23 = sphi 0, %s27
      %p24 = scmp.ge.s32.totalorder %s23, 4
      %s33 = sphi 0, %s35
      %s36 = sphi 0, %s33
      %s37 = sphi 0, %s36
      %s53 = sphi 0, %s37
      %s59 = sphi 0, %s61
      %s62 = sphi 0, %s59
      %s63 = sphi 0, %s62
      %s79 = sphi 0, %s63
      %s85 = sphi 0, %s87
      %s88 = sphi 0, %s85
      %s89 = sphi 0, %s88
      %s105 = sphi 0, %s89
      %s109 = sphi 0, %s109
      %s111 = sphi 0, %s109
      %s112 = sphi 0, %s111
      %s126 = sphi 0, %s112
      %s130 = sphi 0, %s130
      %s132 = sphi 0, %s130
      %s133 = sphi 0, %s132
      %s147 = sphi 0, %s133
      %s151 = sphi 0, %s151
      %s153 = sphi 0, %s151
      %s154 = sphi 0, %s153
      %s168 = sphi 0, %s154
      %s172 = sphi 0, %s172
      %s174 = sphi 0, %s172
      %s175 = sphi 0, %s174
      %s189 = sphi 0, %s175
      %s193 = sphi 0, %s193
      %s195 = sphi 0, %s193
      %s196 = sphi 0, %s195
      %s210 = sphi 0, %s196
      %s214 = sphi 0, %s214
      %s216 = sphi 0, %s214
      %s217 = sphi 0, %s216
      %s231 = sphi 0, %s217
      %s235 = sphi 0, %s235
      %s237 = sphi 0, %s235
      %s238 = sphi 0, %s237
      %s252 = sphi 0, %s238
      %s256 = sphi 0, %s256
      %s258 = sphi 0, %s256
      %s259 = sphi 0, %s258
      %s273 = sphi 0, %s259
      %s277 = sphi 0, %s277
      %s279 = sphi 0, %s277
      %s280 = sphi 0, %s279
      %s294 = sphi 0, %s280
      %s298 = sphi 0, %s298
      %s300 = sphi 0, %s298
      %s301 = sphi 0, %s300
      %s315 = sphi 0, %s301
      %s319 = sphi 0, %s319
      %s321 = sphi 0, %s319
      %s322 = sphi 0, %s321
      %s336 = sphi 0, %s322
      %s342 = sphi 0, %s344
      %s345 = sphi 0, %s342
      %s346 = sphi 0, %s345
      %s362 = sphi 0, %s346
    $region4: #{tpu_custom_call.1} parent=1 // loop_header_branch
      %26 = sbr.rel (%p24) target = $region8
    $region5: #{tpu_custom_call.1} parent=1 // loop_body
      %s28 = ssub.s32 %s23, 1
      %s29 = ssub.s32 %s23, 2
      %s30 = sadd.s32 %s23, 1
      %s31 = ssub.s32 %s23, %s30
      %p32 = scmp.eq.s32.totalorder %s31, 0
      %s34 = sadd.s32 %s33, 1
      %s35 = scalar_select %p32, %s33, %s34
      %p38 = pneg %p32
      %p39 = scmp.eq.s32.totalorder %s23, 1
      %p40 = por %p38, %p39
      %p41 = scmp.ne.s32.totalorder %s33, %s36
      %p42 = scmp.eq.s32.totalorder %s23, 0
      %p43 = por %p41, %p42
      %p44 = scmp.ne.s32.totalorder %s33, %s36
      %p45 = scmp.eq.s32.totalorder %s28, 1
      %p46 = por %p44, %p45
      %p47 = scmp.ne.s32.totalorder %s36, %s37
      %p48 = scmp.eq.s32.totalorder %s28, 0
      %p49 = por %p47, %p48
      %p50 = scmp.ne.s32.totalorder %s36, %s37
      %p51 = scmp.eq.s32.totalorder %s29, 1
      %p52 = por %p50, %p51
      %p54 = scmp.ne.s32.totalorder %s37, %s53
      %p55 = scmp.eq.s32.totalorder %s29, 0
      %p56 = por %p54, %p55
      %s57 = ssub.s32 %s23, %s30
      %p58 = scmp.eq.s32.totalorder %s57, 0
      %s60 = sadd.s32 %s59, 1
      %s61 = scalar_select %p58, %s59, %s60
      %p64 = pneg %p58
      %p65 = scmp.eq.s32.totalorder %s23, 1
      %p66 = por %p64, %p65
      %p67 = scmp.ne.s32.totalorder %s59, %s62
      %p68 = scmp.eq.s32.totalorder %s23, 0
      %p69 = por %p67, %p68
      %p70 = scmp.ne.s32.totalorder %s59, %s62
      %p71 = scmp.eq.s32.totalorder %s28, 1
      %p72 = por %p70, %p71
      %p73 = scmp.ne.s32.totalorder %s62, %s63
      %p74 = scmp.eq.s32.totalorder %s28, 0
      %p75 = por %p73, %p74
      %p76 = scmp.ne.s32.totalorder %s62, %s63
      %p77 = scmp.eq.s32.totalorder %s29, 1
      %p78 = por %p76, %p77
      %p80 = scmp.ne.s32.totalorder %s63, %s79
      %p81 = scmp.eq.s32.totalorder %s29, 0
      %p82 = por %p80, %p81
      %s83 = ssub.s32 %s23, %s30
      %p84 = scmp.eq.s32.totalorder %s83, 0
      %s86 = sadd.s32 %s85, 1
      %s87 = scalar_select %p84, %s85, %s86
      %p90 = pneg %p84
      %p91 = scmp.eq.s32.totalorder %s23, 1
      %p92 = por %p90, %p91
      %p93 = scmp.ne.s32.totalorder %s85, %s88
      %p94 = scmp.eq.s32.totalorder %s23, 0
      %p95 = por %p93, %p94
      %p96 = scmp.ne.s32.totalorder %s85, %s88
      %p97 = scmp.eq.s32.totalorder %s28, 1
      %p98 = por %p96, %p97
      %p99 = scmp.ne.s32.totalorder %s88, %s89
      %p100 = scmp.eq.s32.totalorder %s28, 0
      %p101 = por %p99, %p100
      %p102 = scmp.ne.s32.totalorder %s88, %s89
      %p103 = scmp.eq.s32.totalorder %s29, 1
      %p104 = por %p102, %p103
      %p106 = scmp.ne.s32.totalorder %s89, %s105
      %p107 = scmp.eq.s32.totalorder %s29, 0
      %p108 = por %p106, %p107
      %s110 = sadd.s32 %s109, 1
      %p113 = scmp.eq.s32.totalorder %s23, 1
      %p114 = scmp.ne.s32.totalorder %s109, %s111
      %p115 = scmp.eq.s32.totalorder %s23, 0
      %p116 = por %p114, %p115
      %p117 = scmp.ne.s32.totalorder %s109, %s111
      %p118 = scmp.eq.s32.totalorder %s28, 1
      %p119 = por %p117, %p118
      %p120 = scmp.ne.s32.totalorder %s111, %s112
      %p121 = scmp.eq.s32.totalorder %s28, 0
      %p122 = por %p120, %p121
      %p123 = scmp.ne.s32.totalorder %s111, %s112
      %p124 = scmp.eq.s32.totalorder %s29, 1
      %p125 = por %p123, %p124
      %p127 = scmp.ne.s32.totalorder %s112, %s126
      %p128 = scmp.eq.s32.totalorder %s29, 0
      %p129 = por %p127, %p128
      %s131 = sadd.s32 %s130, 1
      %p134 = scmp.eq.s32.totalorder %s23, 1
      %p135 = scmp.ne.s32.totalorder %s130, %s132
      %p136 = scmp.eq.s32.totalorder %s23, 0
      %p137 = por %p135, %p136
      %p138 = scmp.ne.s32.totalorder %s130, %s132
      %p139 = scmp.eq.s32.totalorder %s28, 1
      %p140 = por %p138, %p139
      %p141 = scmp.ne.s32.totalorder %s132, %s133
      %p142 = scmp.eq.s32.totalorder %s28, 0
      %p143 = por %p141, %p142
      %p144 = scmp.ne.s32.totalorder %s132, %s133
      %p145 = scmp.eq.s32.totalorder %s29, 1
      %p146 = por %p144, %p145
      %p148 = scmp.ne.s32.totalorder %s133, %s147
      %p149 = scmp.eq.s32.totalorder %s29, 0
      %p150 = por %p148, %p149
      %s152 = sadd.s32 %s151, 1
      %p155 = scmp.eq.s32.totalorder %s23, 1
      %p156 = scmp.ne.s32.totalorder %s151, %s153
      %p157 = scmp.eq.s32.totalorder %s23, 0
      %p158 = por %p156, %p157
      %p159 = scmp.ne.s32.totalorder %s151, %s153
      %p160 = scmp.eq.s32.totalorder %s28, 1
      %p161 = por %p159, %p160
      %p162 = scmp.ne.s32.totalorder %s153, %s154
      %p163 = scmp.eq.s32.totalorder %s28, 0
      %p164 = por %p162, %p163
      %p165 = scmp.ne.s32.totalorder %s153, %s154
      %p166 = scmp.eq.s32.totalorder %s29, 1
      %p167 = por %p165, %p166
      %p169 = scmp.ne.s32.totalorder %s154, %s168
      %p170 = scmp.eq.s32.totalorder %s29, 0
      %p171 = por %p169, %p170
      %s173 = sadd.s32 %s172, 1
      %p176 = scmp.eq.s32.totalorder %s23, 1
      %p177 = scmp.ne.s32.totalorder %s172, %s174
      %p178 = scmp.eq.s32.totalorder %s23, 0
      %p179 = por %p177, %p178
      %p180 = scmp.ne.s32.totalorder %s172, %s174
      %p181 = scmp.eq.s32.totalorder %s28, 1
      %p182 = por %p180, %p181
      %p183 = scmp.ne.s32.totalorder %s174, %s175
      %p184 = scmp.eq.s32.totalorder %s28, 0
      %p185 = por %p183, %p184
      %p186 = scmp.ne.s32.totalorder %s174, %s175
      %p187 = scmp.eq.s32.totalorder %s29, 1
      %p188 = por %p186, %p187
      %p190 = scmp.ne.s32.totalorder %s175, %s189
      %p191 = scmp.eq.s32.totalorder %s29, 0
      %p192 = por %p190, %p191
      %s194 = sadd.s32 %s193, 1
      %p197 = scmp.eq.s32.totalorder %s23, 1
      %p198 = scmp.ne.s32.totalorder %s193, %s195
      %p199 = scmp.eq.s32.totalorder %s23, 0
      %p200 = por %p198, %p199
      %p201 = scmp.ne.s32.totalorder %s193, %s195
      %p202 = scmp.eq.s32.totalorder %s28, 1
      %p203 = por %p201, %p202
      %p204 = scmp.ne.s32.totalorder %s195, %s196
      %p205 = scmp.eq.s32.totalorder %s28, 0
      %p206 = por %p204, %p205
      %p207 = scmp.ne.s32.totalorder %s195, %s196
      %p208 = scmp.eq.s32.totalorder %s29, 1
      %p209 = por %p207, %p208
      %p211 = scmp.ne.s32.totalorder %s196, %s210
      %p212 = scmp.eq.s32.totalorder %s29, 0
      %p213 = por %p211, %p212
      %s215 = sadd.s32 %s214, 1
      %p218 = scmp.eq.s32.totalorder %s23, 1
      %p219 = scmp.ne.s32.totalorder %s214, %s216
      %p220 = scmp.eq.s32.totalorder %s23, 0
      %p221 = por %p219, %p220
      %p222 = scmp.ne.s32.totalorder %s214, %s216
      %p223 = scmp.eq.s32.totalorder %s28, 1
      %p224 = por %p222, %p223
      %p225 = scmp.ne.s32.totalorder %s216, %s217
      %p226 = scmp.eq.s32.totalorder %s28, 0
      %p227 = por %p225, %p226
      %p228 = scmp.ne.s32.totalorder %s216, %s217
      %p229 = scmp.eq.s32.totalorder %s29, 1
      %p230 = por %p228, %p229
      %p232 = scmp.ne.s32.totalorder %s217, %s231
      %p233 = scmp.eq.s32.totalorder %s29, 0
      %p234 = por %p232, %p233
      %s236 = sadd.s32 %s235, 1
      %p239 = scmp.eq.s32.totalorder %s23, 1
      %p240 = scmp.ne.s32.totalorder %s235, %s237
      %p241 = scmp.eq.s32.totalorder %s23, 0
      %p242 = por %p240, %p241
      %p243 = scmp.ne.s32.totalorder %s235, %s237
      %p244 = scmp.eq.s32.totalorder %s28, 1
      %p245 = por %p243, %p244
      %p246 = scmp.ne.s32.totalorder %s237, %s238
      %p247 = scmp.eq.s32.totalorder %s28, 0
      %p248 = por %p246, %p247
      %p249 = scmp.ne.s32.totalorder %s237, %s238
      %p250 = scmp.eq.s32.totalorder %s29, 1
      %p251 = por %p249, %p250
      %p253 = scmp.ne.s32.totalorder %s238, %s252
      %p254 = scmp.eq.s32.totalorder %s29, 0
      %p255 = por %p253, %p254
      %s257 = sadd.s32 %s256, 1
      %p260 = scmp.eq.s32.totalorder %s23, 1
      %p261 = scmp.ne.s32.totalorder %s256, %s258
      %p262 = scmp.eq.s32.totalorder %s23, 0
      %p263 = por %p261, %p262
      %p264 = scmp.ne.s32.totalorder %s256, %s258
      %p265 = scmp.eq.s32.totalorder %s28, 1
      %p266 = por %p264, %p265
      %p267 = scmp.ne.s32.totalorder %s258, %s259
      %p268 = scmp.eq.s32.totalorder %s28, 0
      %p269 = por %p267, %p268
      %p270 = scmp.ne.s32.totalorder %s258, %s259
      %p271 = scmp.eq.s32.totalorder %s29, 1
      %p272 = por %p270, %p271
      %p274 = scmp.ne.s32.totalorder %s259, %s273
      %p275 = scmp.eq.s32.totalorder %s29, 0
      %p276 = por %p274, %p275
      %s278 = sadd.s32 %s277, 1
      %p281 = scmp.eq.s32.totalorder %s23, 1
      %p282 = scmp.ne.s32.totalorder %s277, %s279
      %p283 = scmp.eq.s32.totalorder %s23, 0
      %p284 = por %p282, %p283
      %p285 = scmp.ne.s32.totalorder %s277, %s279
      %p286 = scmp.eq.s32.totalorder %s28, 1
      %p287 = por %p285, %p286
      %p288 = scmp.ne.s32.totalorder %s279, %s280
      %p289 = scmp.eq.s32.totalorder %s28, 0
      %p290 = por %p288, %p289
      %p291 = scmp.ne.s32.totalorder %s279, %s280
      %p292 = scmp.eq.s32.totalorder %s29, 1
      %p293 = por %p291, %p292
      %p295 = scmp.ne.s32.totalorder %s280, %s294
      %p296 = scmp.eq.s32.totalorder %s29, 0
      %p297 = por %p295, %p296
      %s299 = sadd.s32 %s298, 1
      %p302 = scmp.eq.s32.totalorder %s23, 1
      %p303 = scmp.ne.s32.totalorder %s298, %s300
      %p304 = scmp.eq.s32.totalorder %s23, 0
      %p305 = por %p303, %p304
      %p306 = scmp.ne.s32.totalorder %s298, %s300
      %p307 = scmp.eq.s32.totalorder %s28, 1
      %p308 = por %p306, %p307
      %p309 = scmp.ne.s32.totalorder %s300, %s301
      %p310 = scmp.eq.s32.totalorder %s28, 0
      %p311 = por %p309, %p310
      %p312 = scmp.ne.s32.totalorder %s300, %s301
      %p313 = scmp.eq.s32.totalorder %s29, 1
      %p314 = por %p312, %p313
      %p316 = scmp.ne.s32.totalorder %s301, %s315
      %p317 = scmp.eq.s32.totalorder %s29, 0
      %p318 = por %p316, %p317
      %s320 = sadd.s32 %s319, 1
      %p323 = scmp.eq.s32.totalorder %s23, 1
      %p324 = scmp.ne.s32.totalorder %s319, %s321
      %p325 = scmp.eq.s32.totalorder %s23, 0
      %p326 = por %p324, %p325
      %p327 = scmp.ne.s32.totalorder %s319, %s321
      %p328 = scmp.eq.s32.totalorder %s28, 1
      %p329 = por %p327, %p328
      %p330 = scmp.ne.s32.totalorder %s321, %s322
      %p331 = scmp.eq.s32.totalorder %s28, 0
      %p332 = por %p330, %p331
      %p333 = scmp.ne.s32.totalorder %s321, %s322
      %p334 = scmp.eq.s32.totalorder %s29, 1
      %p335 = por %p333, %p334
      %p337 = scmp.ne.s32.totalorder %s322, %s336
      %p338 = scmp.eq.s32.totalorder %s29, 0
      %p339 = por %p337, %p338
      %s340 = ssub.s32 %s23, %s30
      %p341 = scmp.eq.s32.totalorder %s340, 0
      %s343 = sadd.s32 %s342, 1
      %s344 = scalar_select %p341, %s342, %s343
      %p347 = pneg %p341
      %p348 = scmp.eq.s32.totalorder %s23, 1
      %p349 = por %p347, %p348
      %p350 = scmp.ne.s32.totalorder %s342, %s345
      %p351 = scmp.eq.s32.totalorder %s23, 0
      %p352 = por %p350, %p351
      %p353 = scmp.ne.s32.totalorder %s342, %s345
      %p354 = scmp.eq.s32.totalorder %s28, 1
      %p355 = por %p353, %p354
      %p356 = scmp.ne.s32.totalorder %s345, %s346
      %p357 = scmp.eq.s32.totalorder %s28, 0
      %p358 = por %p356, %p357
      %p359 = scmp.ne.s32.totalorder %s345, %s346
      %p360 = scmp.eq.s32.totalorder %s29, 1
      %p361 = por %p359, %p360
      %p363 = scmp.ne.s32.totalorder %s346, %s362
      %p364 = scmp.eq.s32.totalorder %s29, 0
      %p365 = por %p363, %p364
      %p366 = scmp.le.s32.totalorder 1, %s23
      %p367 = scmp.lt.s32.totalorder %s23, 3
      %p368 = pnand %p366, %p367
      %p369 = pneg %p368
      // Predicated region
      $region9: #{tpu_custom_call.1} parent=5 // pred_check
        _
      $region10: #{tpu_custom_call.1} parent=5 // pred_check_branch
        %371 = sbr.rel (%p368) target = $region12
      $region11: #{tpu_custom_call.1} parent=5 // pred_region
        %s372 = ssub.s32 %s23, 1
        // Predicated region
        $region13: #{tpu_custom_call.1} parent=11 // pred_check
          %p373 = pneg %p122
        $region14: #{tpu_custom_call.1} parent=11 // pred_check_branch
          %375 = sbr.rel (%p373) target = $region16
        $region15: #{tpu_custom_call.1} parent=11 // pred_region
          _
        $region16: #{tpu_custom_call.1} parent=11 // pred_fallthru
          _
        // Predicated region
        $region17: #{tpu_custom_call.1} parent=11 // pred_check
          %p376 = pneg %p143
        $region18: #{tpu_custom_call.1} parent=11 // pred_check_branch
          %378 = sbr.rel (%p376) target = $region20
        $region19: #{tpu_custom_call.1} parent=11 // pred_region
          _
        $region20: #{tpu_custom_call.1} parent=11 // pred_fallthru
          _
        // Predicated region
        $region21: #{tpu_custom_call.1} parent=11 // pred_check
          %p379 = pneg %p164
        $region22: #{tpu_custom_call.1} parent=11 // pred_check_branch
          %381 = sbr.rel (%p379) target = $region24
        $region23: #{tpu_custom_call.1} parent=11 // pred_region
          _
        $region24: #{tpu_custom_call.1} parent=11 // pred_fallthru
          _
        // Predicated region
        $region25: #{tpu_custom_call.1} parent=11 // pred_check
          %p382 = pneg %p185
        $region26: #{tpu_custom_call.1} parent=11 // pred_check_branch
          %384 = sbr.rel (%p382) target = $region28
        $region27: #{tpu_custom_call.1} parent=11 // pred_region
          _
        $region28: #{tpu_custom_call.1} parent=11 // pred_fallthru
          _
        // Predicated region
        $region29: #{tpu_custom_call.1} parent=11 // pred_check
          %p385 = pneg %p206
        $region30: #{tpu_custom_call.1} parent=11 // pred_check_branch
          %387 = sbr.rel (%p385) target = $region32
        $region31: #{tpu_custom_call.1} parent=11 // pred_region
          _
        $region32: #{tpu_custom_call.1} parent=11 // pred_fallthru
          _
        // Predicated region
        $region33: #{tpu_custom_call.1} parent=11 // pred_check
          %p388 = pneg %p227
        $region34: #{tpu_custom_call.1} parent=11 // pred_check_branch
          %390 = sbr.rel (%p388) target = $region36
        $region35: #{tpu_custom_call.1} parent=11 // pred_region
          _
        $region36: #{tpu_custom_call.1} parent=11 // pred_fallthru
          _
        // Predicated region
        $region37: #{tpu_custom_call.1} parent=11 // pred_check
          %p391 = pneg %p248
        $region38: #{tpu_custom_call.1} parent=11 // pred_check_branch
          %393 = sbr.rel (%p391) target = $region40
        $region39: #{tpu_custom_call.1} parent=11 // pred_region
          _
        $region40: #{tpu_custom_call.1} parent=11 // pred_fallthru
          _
        // Predicated region
        $region41: #{tpu_custom_call.1} parent=11 // pred_check
          %p394 = pneg %p269
        $region42: #{tpu_custom_call.1} parent=11 // pred_check_branch
          %396 = sbr.rel (%p394) target = $region44
        $region43: #{tpu_custom_call.1} parent=11 // pred_region
          _
        $region44: #{tpu_custom_call.1} parent=11 // pred_fallthru
          _
        // Predicated region
        $region45: #{tpu_custom_call.1} parent=11 // pred_check
          %p397 = pneg %p290
        $region46: #{tpu_custom_call.1} parent=11 // pred_check_branch
          %399 = sbr.rel (%p397) target = $region48
        $region47: #{tpu_custom_call.1} parent=11 // pred_region
          _
        $region48: #{tpu_custom_call.1} parent=11 // pred_fallthru
          _
        // Predicated region
        $region49: #{tpu_custom_call.1} parent=11 // pred_check
          %p400 = pneg %p311
        $region50: #{tpu_custom_call.1} parent=11 // pred_check_branch
          %402 = sbr.rel (%p400) target = $region52
        $region51: #{tpu_custom_call.1} parent=11 // pred_region
          _
        $region52: #{tpu_custom_call.1} parent=11 // pred_fallthru
          _
        // Predicated region
        $region53: #{tpu_custom_call.1} parent=11 // pred_check
          %p403 = pneg %p332
        $region54: #{tpu_custom_call.1} parent=11 // pred_check_branch
          %405 = sbr.rel (%p403) target = $region56
        $region55: #{tpu_custom_call.1} parent=11 // pred_region
          _
        $region56: #{tpu_custom_call.1} parent=11 // pred_fallthru
          _
      $region12: #{tpu_custom_call.1} parent=5 // pred_fallthru
        _
      %p406 = scmp.lt.s32.totalorder %s23, 2
      // Predicated region
      $region57: #{tpu_custom_call.1} parent=5 // pred_check
        %p407 = pneg %p406
      $region58: #{tpu_custom_call.1} parent=5 // pred_check_branch
        %409 = sbr.rel (%p407) target = $region60
      $region59: #{tpu_custom_call.1} parent=5 // pred_region
        // Predicated region
        $region61: #{tpu_custom_call.1} parent=59 // pred_check
          %p410 = pneg %p43
        $region62: #{tpu_custom_call.1} parent=59 // pred_check_branch
          %412 = sbr.rel (%p410) target = $region64
        $region63: #{tpu_custom_call.1} parent=59 // pred_region
          %p413 = scmp.lt.s32.totalorder %s23, 1
          %s414 = scalar_select %p413, %s23, 1
          %s415 = smul.addr %s414, 8
          %s416 = scalar_lea.vmem %s0, %s415
        $region64: #{tpu_custom_call.1} parent=59 // pred_fallthru
          _
        // Predicated region
        $region65: #{tpu_custom_call.1} parent=59 // pred_check
          %p417 = pneg %p69
        $region66: #{tpu_custom_call.1} parent=59 // pred_check_branch
          %419 = sbr.rel (%p417) target = $region68
        $region67: #{tpu_custom_call.1} parent=59 // pred_region
          %s420 = smul.u32 2, %s23
          %p421 = scmp.lt.s32.totalorder %s420, 3
          %s422 = scalar_select %p421, %s420, 3
          %s423 = smul.addr %s422, 8
          %s424 = scalar_lea.vmem %s1, %s423
          %s425 = smul.u32 2, %s23
        $region68: #{tpu_custom_call.1} parent=59 // pred_fallthru
          _
        // Predicated region
        $region69: #{tpu_custom_call.1} parent=59 // pred_check
          %p426 = pneg %p95
        $region70: #{tpu_custom_call.1} parent=59 // pred_check_branch
          %428 = sbr.rel (%p426) target = $region72
        $region71: #{tpu_custom_call.1} parent=59 // pred_region
          %p429 = scmp.lt.s32.totalorder %s23, 1
          %s430 = scalar_select %p429, %s23, 1
          %s431 = smul.addr %s430, 8
          %s432 = scalar_lea.vmem %s2, %s431
        $region72: #{tpu_custom_call.1} parent=59 // pred_fallthru
          _
      $region60: #{tpu_custom_call.1} parent=5 // pred_fallthru
        _
      %p433 = scmp.le.s32.totalorder 1, %s23
      %p434 = scmp.lt.s32.totalorder %s23, 3
      %p435 = pnand %p433, %p434
      %p436 = pneg %p435
      // Predicated region
      $region73: #{tpu_custom_call.1} parent=5 // pred_check
        _
      $region74: #{tpu_custom_call.1} parent=5 // pred_check_branch
        %438 = sbr.rel (%p435) target = $region76
      $region75: #{tpu_custom_call.1} parent=5 // pred_region
        %s439 = ssub.s32 %s23, 1
        %p440 = scmp.lt.s32.totalorder %s28, 1
        %s441 = scalar_select %p440, %s28, 1
        %s442 = smul.addr %s441, 8
        %s443 = scalar_lea.vmem %s0, %s442
        %p444 = pneg %p49
        %p445 = pneg %p46
        %s446 = smul.u32 2, %s28
        %p447 = scmp.lt.s32.totalorder %s446, 3
        %s448 = scalar_select %p447, %s446, 3
        %s449 = smul.addr %s448, 8
        %s450 = scalar_lea.vmem %s1, %s449
        %p451 = pneg %p75
        %p452 = pneg %p72
        %p453 = scmp.lt.s32.totalorder %s28, 1
        %s454 = scalar_select %p453, %s28, 1
        %s455 = smul.addr %s454, 8
        %s456 = scalar_lea.vmem %s2, %s455
        %p457 = pneg %p101
        %p458 = pneg %p98
        %p459 = pneg %p122
        %p460 = pneg %p119
        %p461 = pneg %p143
        %p462 = pneg %p140
        %p463 = pneg %p164
        %p464 = pneg %p161
        %p465 = pneg %p185
        %p466 = pneg %p182
        %p467 = pneg %p206
        %p468 = pneg %p203
        %p469 = pneg %p227
        %p470 = pneg %p224
        %p471 = pneg %p248
        %p472 = pneg %p245
        %p473 = pneg %p269
        %p474 = pneg %p266
        %p475 = pneg %p290
        %p476 = pneg %p287
        %p477 = pneg %p311
        %p478 = pneg %p308
        %p479 = pneg %p332
        %p480 = pneg %p329
        %p481 = pneg %p358
        %p482 = pneg %p355
        %s483 = sand.u32 %s345, 1
        %s484 = scalar_lea.sflag [#allocation3], %s483
        %s485 = sand.u32 %s345, 1
        %s486 = smul.addr %s485, 8
        %s487 = scalar_lea.vmem [#allocation2], %s486
        %p488 = scmp.lt.s32.totalorder %s28, 1
        %s489 = scalar_select %p488, %s28, 1
        %s490 = smul.addr %s489, 8
        %s491 = scalar_lea.vmem %s0, %s490
        %s492 = smul.u32 2, %s28
        %p493 = scmp.lt.s32.totalorder %s492, 3
        %s494 = scalar_select %p493, %s492, 3
        %s495 = smul.addr %s494, 8
        %s496 = scalar_lea.vmem %s1, %s495
        %s497 = smul.u32 2, %s28
        %p498 = scmp.lt.s32.totalorder %s28, 1
        %s499 = scalar_select %p498, %s28, 1
        %s500 = smul.addr %s499, 8
        %s501 = scalar_lea.vmem %s2, %s500
        %v503 = vld [vmem:[%s491] sm:$0xff]
        %v504 = vld [vmem:[%s496] sm:$0xff]
        %v505 = vld [vmem:[%s496 + $0x8] sm:$0xff]
        %v506 = vld [vmem:[%s501] sm:$0x1]
        %v507 = vld [vmem:[%s8] sm:$0x1]
        %v508 = vld [vmem:[%s8 + $0x1] sm:$0x1]
        %v509 = vld [vmem:[%s8 + $0x2] sm:$0x1]
        %v510 = vld [vmem:[%s8 + $0x3] sm:$0x1]
        %v511 = vld [vmem:[%s8 + $0x4] sm:$0x1]
        %v512 = vld [vmem:[%s8 + $0x5] sm:$0x1]
        %v513 = vld [vmem:[%s8 + $0x6] sm:$0x1]
        %v514 = vld [vmem:[%s8 + $0x7] sm:$0x1]
        %v515 = vld [vmem:[%s8 + $0x8] sm:$0x1]
        %v516 = vld [vmem:[%s8 + $0x9] sm:$0x1]
        %v517 = vpack.c.bf16 %v503, %v503
        %v518 = vpack.c.bf16 %v505, %v504
        %v519 = vld [vmem:[%s3] sm:$0xf]
        %v520 = vld [vmem:[%s3 + $0x4] sm:$0xf]
        %v521 = vld [vmem:[%s3 + $0x8] sm:$0xf]
        %v522 = vld [vmem:[%s3 + $0xc] sm:$0xf]
        %v523 = vld [vmem:[%s3 + $0x10] sm:$0xf]
        %v524 = vld [vmem:[%s3 + $0x14] sm:$0xf]
        %v525 = vld [vmem:[%s3 + $0x18] sm:$0xf]
        %v526 = vld [vmem:[%s3 + $0x1c] sm:$0xf]
        %v527 = vld [vmem:[%s3 + $0x20] sm:$0xf]
        %v528 = vld [vmem:[%s3 + $0x24] sm:$0xf]
        %v529 = vld [vmem:[%s3 + $0x28] sm:$0xf]
        %v530 = vld [vmem:[%s3 + $0x2c] sm:$0xf]
        %v531 = vld [vmem:[%s3 + $0x30] sm:$0xf]
        %v532 = vld [vmem:[%s3 + $0x34] sm:$0xf]
        %v533 = vld [vmem:[%s3 + $0x38] sm:$0xf]
        %v534 = vld [vmem:[%s3 + $0x3c] sm:$0xf]
        %v535 = vperm.slane %v507, 0
        %v552 = vunpack.c.l.b16 %v519
        %v553 = vunpack.c.l.b16 %v520
        %v554 = vunpack.c.l.b16 %v521
        %v555 = vunpack.c.l.b16 %v522
        %v556 = vunpack.c.l.b16 %v523
        %v557 = vunpack.c.l.b16 %v524
        %v558 = vunpack.c.l.b16 %v525
        %v559 = vunpack.c.l.b16 %v526
        %v560 = vunpack.c.l.b16 %v527
        %v561 = vunpack.c.l.b16 %v528
        %v562 = vunpack.c.l.b16 %v529
        %v563 = vunpack.c.l.b16 %v530
        %v564 = vunpack.c.l.b16 %v531
        %v565 = vunpack.c.l.b16 %v532
        %v566 = vunpack.c.l.b16 %v533
        %v567 = vunpack.c.l.b16 %v534
        %v568 = vpack.c.b16 %v553, %v552
        %v569 = vpack.c.b16 %v555, %v554
        %v570 = vpack.c.b16 %v557, %v556
        %v571 = vpack.c.b16 %v559, %v558
        %v572 = vpack.c.b16 %v561, %v560
        %v573 = vpack.c.b16 %v563, %v562
        %v574 = vpack.c.b16 %v565, %v564
        %v575 = vpack.c.b16 %v567, %v566
        %584 = vmatpush.bf16.msra.mxu0 %v575
        %585 = vmatpush.bf16.msra.mxu0 %v574
        %586 = vmatpush.bf16.msra.mxu0 %v573
        %587 = vmatpush.bf16.msra.mxu0 %v572
        %588 = vmatpush.bf16.msra.mxu0 %v571
        %589 = vmatpush.bf16.msra.mxu0 %v570
        %590 = vmatpush.bf16.msra.mxu0 %v569
        %591 = vmatpush.bf16.msra.mxu0 %v568
        %592 = vmatmul.bf16.gmra.mxu0 %v517
        %v593 = vpop.f32.mrf.mxu0
        %v594 = vadd.f32 %v535, %v593
        %v595 = vpop.f32.mrf.mxu0
        %596 = vdwg.mxu0
        %v597 = vld [vmem:[%s4] sm:$0xf]
        %v598 = vld [vmem:[%s4 + $0x4] sm:$0xf]
        %v599 = vld [vmem:[%s4 + $0x8] sm:$0xf]
        %v600 = vld [vmem:[%s4 + $0xc] sm:$0xf]
        %v601 = vld [vmem:[%s4 + $0x10] sm:$0xf]
        %v602 = vld [vmem:[%s4 + $0x14] sm:$0xf]
        %v603 = vld [vmem:[%s4 + $0x18] sm:$0xf]
        %v604 = vld [vmem:[%s4 + $0x1c] sm:$0xf]
        %v605 = vld [vmem:[%s4 + $0x20] sm:$0xf]
        %v606 = vld [vmem:[%s4 + $0x24] sm:$0xf]
        %v607 = vld [vmem:[%s4 + $0x28] sm:$0xf]
        %v608 = vld [vmem:[%s4 + $0x2c] sm:$0xf]
        %v609 = vld [vmem:[%s4 + $0x30] sm:$0xf]
        %v610 = vld [vmem:[%s4 + $0x34] sm:$0xf]
        %v611 = vld [vmem:[%s4 + $0x38] sm:$0xf]
        %v612 = vld [vmem:[%s4 + $0x3c] sm:$0xf]
        %v613 = vperm.slane %v508, 0
        %v630 = vunpack.c.l.b16 %v597
        %v631 = vunpack.c.l.b16 %v598
        %v632 = vunpack.c.l.b16 %v599
        %v633 = vunpack.c.l.b16 %v600
        %v634 = vunpack.c.l.b16 %v601
        %v635 = vunpack.c.l.b16 %v602
        %v636 = vunpack.c.l.b16 %v603
        %v637 = vunpack.c.l.b16 %v604
        %v638 = vunpack.c.l.b16 %v605
        %v639 = vunpack.c.l.b16 %v606
        %v640 = vunpack.c.l.b16 %v607
        %v641 = vunpack.c.l.b16 %v608
        %v642 = vunpack.c.l.b16 %v609
        %v643 = vunpack.c.l.b16 %v610
        %v644 = vunpack.c.l.b16 %v611
        %v645 = vunpack.c.l.b16 %v612
        %v646 = vpack.c.b16 %v631, %v630
        %v647 = vpack.c.b16 %v633, %v632
        %v648 = vpack.c.b16 %v635, %v634
        %v649 = vpack.c.b16 %v637, %v636
        %v650 = vpack.c.b16 %v639, %v638
        %v651 = vpack.c.b16 %v641, %v640
        %v652 = vpack.c.b16 %v643, %v642
        %v653 = vpack.c.b16 %v645, %v644
        %662 = vmatpush.bf16.msra.mxu0 %v653
        %663 = vmatpush.bf16.msra.mxu0 %v652
        %664 = vmatpush.bf16.msra.mxu0 %v651
        %665 = vmatpush.bf16.msra.mxu0 %v650
        %666 = vmatpush.bf16.msra.mxu0 %v649
        %667 = vmatpush.bf16.msra.mxu0 %v648
        %668 = vmatpush.bf16.msra.mxu0 %v647
        %669 = vmatpush.bf16.msra.mxu0 %v646
        %670 = vmatmul.bf16.gmra.mxu0 %v517
        %v671 = vpop.f32.mrf.mxu0
        %v672 = vadd.f32 %v613, %v671
        %v673 = vpop.f32.mrf.mxu0
        %674 = vdwg.mxu0
        %v675 = vld [vmem:[%s5] sm:$0xf]
        %v676 = vld [vmem:[%s5 + $0x4] sm:$0xf]
        %v677 = vld [vmem:[%s5 + $0x8] sm:$0xf]
        %v678 = vld [vmem:[%s5 + $0xc] sm:$0xf]
        %v679 = vld [vmem:[%s5 + $0x10] sm:$0xf]
        %v680 = vld [vmem:[%s5 + $0x14] sm:$0xf]
        %v681 = vld [vmem:[%s5 + $0x18] sm:$0xf]
        %v682 = vld [vmem:[%s5 + $0x1c] sm:$0xf]
        %v683 = vld [vmem:[%s5 + $0x20] sm:$0xf]
        %v684 = vld [vmem:[%s5 + $0x24] sm:$0xf]
        %v685 = vld [vmem:[%s5 + $0x28] sm:$0xf]
        %v686 = vld [vmem:[%s5 + $0x2c] sm:$0xf]
        %v687 = vld [vmem:[%s5 + $0x30] sm:$0xf]
        %v688 = vld [vmem:[%s5 + $0x34] sm:$0xf]
        %v689 = vld [vmem:[%s5 + $0x38] sm:$0xf]
        %v690 = vld [vmem:[%s5 + $0x3c] sm:$0xf]
        %v691 = vperm.slane %v509, 0
        %v708 = vunpack.c.l.b16 %v675
        %v709 = vunpack.c.l.b16 %v676
        %v710 = vunpack.c.l.b16 %v677
        %v711 = vunpack.c.l.b16 %v678
        %v712 = vunpack.c.l.b16 %v679
        %v713 = vunpack.c.l.b16 %v680
        %v714 = vunpack.c.l.b16 %v681
        %v715 = vunpack.c.l.b16 %v682
        %v716 = vunpack.c.l.b16 %v683
        %v717 = vunpack.c.l.b16 %v684
        %v718 = vunpack.c.l.b16 %v685
        %v719 = vunpack.c.l.b16 %v686
        %v720 = vunpack.c.l.b16 %v687
        %v721 = vunpack.c.l.b16 %v688
        %v722 = vunpack.c.l.b16 %v689
        %v723 = vunpack.c.l.b16 %v690
        %v724 = vpack.c.b16 %v709, %v708
        %v725 = vpack.c.b16 %v711, %v710
        %v726 = vpack.c.b16 %v713, %v712
        %v727 = vpack.c.b16 %v715, %v714
        %v728 = vpack.c.b16 %v717, %v716
        %v729 = vpack.c.b16 %v719, %v718
        %v730 = vpack.c.b16 %v721, %v720
        %v731 = vpack.c.b16 %v723, %v722
        %740 = vmatpush.bf16.msra.mxu0 %v731
        %741 = vmatpush.bf16.msra.mxu0 %v730
        %742 = vmatpush.bf16.msra.mxu0 %v729
        %743 = vmatpush.bf16.msra.mxu0 %v728
        %744 = vmatpush.bf16.msra.mxu0 %v727
        %745 = vmatpush.bf16.msra.mxu0 %v726
        %746 = vmatpush.bf16.msra.mxu0 %v725
        %747 = vmatpush.bf16.msra.mxu0 %v724
        %748 = vmatmul.bf16.gmra.mxu0 %v518
        %v749 = vpop.f32.mrf.mxu0
        %v750 = vadd.f32 %v691, %v749
        %v751 = vpop.f32.mrf.mxu0
        %v752 = vadd.f32 %v691, %v751
        %753 = vdwg.mxu0
        %v754 = vld [vmem:[%s6] sm:$0xf]
        %v755 = vld [vmem:[%s6 + $0x4] sm:$0xf]
        %v756 = vld [vmem:[%s6 + $0x8] sm:$0xf]
        %v757 = vld [vmem:[%s6 + $0xc] sm:$0xf]
        %v758 = vld [vmem:[%s6 + $0x10] sm:$0xf]
        %v759 = vld [vmem:[%s6 + $0x14] sm:$0xf]
        %v760 = vld [vmem:[%s6 + $0x18] sm:$0xf]
        %v761 = vld [vmem:[%s6 + $0x1c] sm:$0xf]
        %v762 = vld [vmem:[%s6 + $0x20] sm:$0xf]
        %v763 = vld [vmem:[%s6 + $0x24] sm:$0xf]
        %v764 = vld [vmem:[%s6 + $0x28] sm:$0xf]
        %v765 = vld [vmem:[%s6 + $0x2c] sm:$0xf]
        %v766 = vld [vmem:[%s6 + $0x30] sm:$0xf]
        %v767 = vld [vmem:[%s6 + $0x34] sm:$0xf]
        %v768 = vld [vmem:[%s6 + $0x38] sm:$0xf]
        %v769 = vld [vmem:[%s6 + $0x3c] sm:$0xf]
        %v770 = vperm.slane %v510, 0
        %v787 = vunpack.c.l.b16 %v754
        %v788 = vunpack.c.l.b16 %v755
        %v789 = vunpack.c.l.b16 %v756
        %v790 = vunpack.c.l.b16 %v757
        %v791 = vunpack.c.l.b16 %v758
        %v792 = vunpack.c.l.b16 %v759
        %v793 = vunpack.c.l.b16 %v760
        %v794 = vunpack.c.l.b16 %v761
        %v795 = vunpack.c.l.b16 %v762
        %v796 = vunpack.c.l.b16 %v763
        %v797 = vunpack.c.l.b16 %v764
        %v798 = vunpack.c.l.b16 %v765
        %v799 = vunpack.c.l.b16 %v766
        %v800 = vunpack.c.l.b16 %v767
        %v801 = vunpack.c.l.b16 %v768
        %v802 = vunpack.c.l.b16 %v769
        %v803 = vpack.c.b16 %v788, %v787
        %v804 = vpack.c.b16 %v790, %v789
        %v805 = vpack.c.b16 %v792, %v791
        %v806 = vpack.c.b16 %v794, %v793
        %v807 = vpack.c.b16 %v796, %v795
        %v808 = vpack.c.b16 %v798, %v797
        %v809 = vpack.c.b16 %v800, %v799
        %v810 = vpack.c.b16 %v802, %v801
        %819 = vmatpush.bf16.msra.mxu0 %v810
        %820 = vmatpush.bf16.msra.mxu0 %v809
        %821 = vmatpush.bf16.msra.mxu0 %v808
        %822 = vmatpush.bf16.msra.mxu0 %v807
        %823 = vmatpush.bf16.msra.mxu0 %v806
        %824 = vmatpush.bf16.msra.mxu0 %v805
        %825 = vmatpush.bf16.msra.mxu0 %v804
        %826 = vmatpush.bf16.msra.mxu0 %v803
        %827 = vmatmul.bf16.gmra.mxu0 %v518
        %v828 = vpop.f32.mrf.mxu0
        %v829 = vadd.f32 %v770, %v828
        %v830 = vpop.f32.mrf.mxu0
        %v831 = vadd.f32 %v770, %v830
        %832 = vdwg.mxu0
        %v833 = vlaneseq
        %v834 = vand.u32 %v833, 127
        %v835 = vpack.c.bf16 %v752, %v750
        %v836 = vpack.c.bf16 %v831, %v829
        %vm837 = vcmp.ge.s32.totalorder %v834, 0
        %vm838 = vcmp.lt.s32.totalorder %v834, 8
        %vm839 = vmand %vm837, %vm838
        %v840 = vsel %vm839, 1, 0
        %v841 = vcvt.s32.f32 %v840
        %v842 = vmul.f32 %v672, %v841
        %v843 = vpack.c.bf16 %v842, %v842
        %v844 = vperm.slane %v506, 0
        %vm845 = vcmask 261120
        %v847 = vsel %vm845, %v843, 0
        %v850 = vsel %vm845, %v835, 0
        %852 = vmatpush.bf16.xpose.msra.mxu0 0
        %853 = vmatpush.bf16.xpose.msra.mxu0 0
        %854 = vmatpush.bf16.xpose.msra.mxu0 0
        %855 = vmatpush.bf16.xpose.msra.mxu0 0
        %856 = vmatpush.bf16.xpose.msra.mxu0 0
        %857 = vmatpush.bf16.xpose.msra.mxu0 0
        %858 = vmatpush.bf16.xpose.msra.mxu0 0
        %859 = vmatpush.bf16.xpose.msra.mxu0 %v850
        %860 = vmatmul.bf16.gmra.mxu0 %v847
        %v861 = vpop.f32.mrf.mxu0
        %v862 = vadd.f32 %v844, %v861
        %v863 = vpop.f32.mrf.mxu0
        %864 = vdwg.mxu0
        %vm865 = vcmask 130048
        %v866 = vsel %vm865, %v862, -inf
        %867 = vmax.xlane.f32.xlu0 %v866
        %v868 = vpop.xlane.xlu0 %867
        %v869 = vsub.f32 %v862, %v868
        %v870 = vmul.f32 %v869, 1.442695
        %v871 = vpow.pop %v870
        %v872 = vsel %vm865, %v871, 0.0
        %873 = vadd.xlane.f32.xlu0 %v872
        %v874 = vpop.xlane.xlu0 %873
        %v875 = vrcp.pop %v874
        %v876 = vpack.c.bf16 %v871, %v871
        %v878 = vsel %vm865, %v876, 0
        %880 = vmatpush.bf16.msra.mxu0 0
        %881 = vmatpush.bf16.msra.mxu0 0
        %882 = vmatpush.bf16.msra.mxu0 0
        %883 = vmatpush.bf16.msra.mxu0 0
        %884 = vmatpush.bf16.msra.mxu0 0
        %885 = vmatpush.bf16.msra.mxu0 0
        %886 = vmatpush.bf16.msra.mxu0 0
        %887 = vmatpush.bf16.msra.mxu0 %v836
        %888 = vmatmul.bf16.gmra.mxu0 %v878
        %v889 = vpop.f32.mrf.mxu0
        %v890 = vadd.f32 0.0, %v889
        %v891 = vpop.f32.mrf.mxu0
        %892 = vdwg.mxu0
        %v893 = vmul.f32 %v841, %v875
        %v894 = vmul.f32 %v890, %v893
        %v895 = vadd.f32 %v894, 0.0
        %vm896 = vcmp.ge.s32.totalorder %v834, 8
        %vm897 = vcmp.lt.s32.totalorder %v834, 16
        %vm898 = vmand %vm896, %vm897
        %v899 = vsel %vm898, 1, 0
        %v900 = vcvt.s32.f32 %v899
        %v901 = vmul.f32 %v672, %v900
        %v902 = vpack.c.bf16 %v901, %v901
        %v904 = vsel %vm845, %v902, 0
        %906 = vmatpush.bf16.xpose.msra.mxu0 0
        %907 = vmatpush.bf16.xpose.msra.mxu0 0
        %908 = vmatpush.bf16.xpose.msra.mxu0 0
        %909 = vmatpush.bf16.xpose.msra.mxu0 0
        %910 = vmatpush.bf16.xpose.msra.mxu0 0
        %911 = vmatpush.bf16.xpose.msra.mxu0 0
        %912 = vmatpush.bf16.xpose.msra.mxu0 0
        %913 = vmatpush.bf16.xpose.msra.mxu0 %v850
        %914 = vmatmul.bf16.gmra.mxu0 %v904
        %v915 = vpop.f32.mrf.mxu0
        %v916 = vadd.f32 %v844, %v915
        %v917 = vpop.f32.mrf.mxu0
        %918 = vdwg.mxu0
        %v919 = vsel %vm865, %v916, -inf
        %920 = vmax.xlane.f32.xlu0 %v919
        %v921 = vpop.xlane.xlu0 %920
        %v922 = vsub.f32 %v916, %v921
        %v923 = vmul.f32 %v922, 1.442695
        %v924 = vpow.pop %v923
        %v925 = vsel %vm865, %v924, 0.0
        %926 = vadd.xlane.f32.xlu0 %v925
        %v927 = vpop.xlane.xlu0 %926
        %v928 = vrcp.pop %v927
        %v929 = vpack.c.bf16 %v924, %v924
        %v931 = vsel %vm865, %v929, 0
        %933 = vmatpush.bf16.msra.mxu0 0
        %934 = vmatpush.bf16.msra.mxu0 0
        %935 = vmatpush.bf16.msra.mxu0 0
        %936 = vmatpush.bf16.msra.mxu0 0
        %937 = vmatpush.bf16.msra.mxu0 0
        %938 = vmatpush.bf16.msra.mxu0 0
        %939 = vmatpush.bf16.msra.mxu0 0
        %940 = vmatpush.bf16.msra.mxu0 %v836
        %941 = vmatmul.bf16.gmra.mxu0 %v931
        %v942 = vpop.f32.mrf.mxu0
        %v943 = vadd.f32 0.0, %v942
        %v944 = vpop.f32.mrf.mxu0
        %945 = vdwg.mxu0
        %v946 = vmul.f32 %v900, %v928
        %v947 = vmul.f32 %v943, %v946
        %v948 = vadd.f32 %v895, %v947
        %vm949 = vcmp.ge.s32.totalorder %v834, 16
        %vm950 = vcmp.lt.s32.totalorder %v834, 24
        %vm951 = vmand %vm949, %vm950
        %v952 = vsel %vm951, 1, 0
        %v953 = vcvt.s32.f32 %v952
        %v954 = vmul.f32 %v672, %v953
        %v955 = vpack.c.bf16 %v954, %v954
        %v957 = vsel %vm845, %v955, 0
        %959 = vmatpush.bf16.xpose.msra.mxu0 0
        %960 = vmatpush.bf16.xpose.msra.mxu0 0
        %961 = vmatpush.bf16.xpose.msra.mxu0 0
        %962 = vmatpush.bf16.xpose.msra.mxu0 0
        %963 = vmatpush.bf16.xpose.msra.mxu0 0
        %964 = vmatpush.bf16.xpose.msra.mxu0 0
        %965 = vmatpush.bf16.xpose.msra.mxu0 0
        %966 = vmatpush.bf16.xpose.msra.mxu0 %v850
        %967 = vmatmul.bf16.gmra.mxu0 %v957
        %v968 = vpop.f32.mrf.mxu0
        %v969 = vadd.f32 %v844, %v968
        %v970 = vpop.f32.mrf.mxu0
        %971 = vdwg.mxu0
        %v972 = vsel %vm865, %v969, -inf
        %973 = vmax.xlane.f32.xlu0 %v972
        %v974 = vpop.xlane.xlu0 %973
        %v975 = vsub.f32 %v969, %v974
        %v976 = vmul.f32 %v975, 1.442695
        %v977 = vpow.pop %v976
        %v978 = vsel %vm865, %v977, 0.0
        %979 = vadd.xlane.f32.xlu0 %v978
        %v980 = vpop.xlane.xlu0 %979
        %v981 = vrcp.pop %v980
        %v982 = vpack.c.bf16 %v977, %v977
        %v984 = vsel %vm865, %v982, 0
        %986 = vmatpush.bf16.msra.mxu0 0
        %987 = vmatpush.bf16.msra.mxu0 0
        %988 = vmatpush.bf16.msra.mxu0 0
        %989 = vmatpush.bf16.msra.mxu0 0
        %990 = vmatpush.bf16.msra.mxu0 0
        %991 = vmatpush.bf16.msra.mxu0 0
        %992 = vmatpush.bf16.msra.mxu0 0
        %993 = vmatpush.bf16.msra.mxu0 %v836
        %994 = vmatmul.bf16.gmra.mxu0 %v984
        %v995 = vpop.f32.mrf.mxu0
        %v996 = vadd.f32 0.0, %v995
        %v997 = vpop.f32.mrf.mxu0
        %998 = vdwg.mxu0
        %v999 = vmul.f32 %v953, %v981
        %v1000 = vmul.f32 %v996, %v999
        %v1001 = vadd.f32 %v948, %v1000
        %vm1002 = vcmp.ge.s32.totalorder %v834, 24
        %vm1003 = vcmp.lt.s32.totalorder %v834, 32
        %vm1004 = vmand %vm1002, %vm1003
        %v1005 = vsel %vm1004, 1, 0
        %v1006 = vcvt.s32.f32 %v1005
        %v1007 = vmul.f32 %v672, %v1006
        %v1008 = vpack.c.bf16 %v1007, %v1007
        %v1010 = vsel %vm845, %v1008, 0
        %1012 = vmatpush.bf16.xpose.msra.mxu0 0
        %1013 = vmatpush.bf16.xpose.msra.mxu0 0
        %1014 = vmatpush.bf16.xpose.msra.mxu0 0
        %1015 = vmatpush.bf16.xpose.msra.mxu0 0
        %1016 = vmatpush.bf16.xpose.msra.mxu0 0
        %1017 = vmatpush.bf16.xpose.msra.mxu0 0
        %1018 = vmatpush.bf16.xpose.msra.mxu0 0
        %1019 = vmatpush.bf16.xpose.msra.mxu0 %v850
        %1020 = vmatmul.bf16.gmra.mxu0 %v1010
        %v1021 = vpop.f32.mrf.mxu0
        %v1022 = vadd.f32 %v844, %v1021
        %v1023 = vpop.f32.mrf.mxu0
        %1024 = vdwg.mxu0
        %v1025 = vsel %vm865, %v1022, -inf
        %1026 = vmax.xlane.f32.xlu0 %v1025
        %v1027 = vpop.xlane.xlu0 %1026
        %v1028 = vsub.f32 %v1022, %v1027
        %v1029 = vmul.f32 %v1028, 1.442695
        %v1030 = vpow.pop %v1029
        %v1031 = vsel %vm865, %v1030, 0.0
        %1032 = vadd.xlane.f32.xlu0 %v1031
        %v1033 = vpop.xlane.xlu0 %1032
        %v1034 = vrcp.pop %v1033
        %v1035 = vpack.c.bf16 %v1030, %v1030
        %v1037 = vsel %vm865, %v1035, 0
        %1039 = vmatpush.bf16.msra.mxu0 0
        %1040 = vmatpush.bf16.msra.mxu0 0
        %1041 = vmatpush.bf16.msra.mxu0 0
        %1042 = vmatpush.bf16.msra.mxu0 0
        %1043 = vmatpush.bf16.msra.mxu0 0
        %1044 = vmatpush.bf16.msra.mxu0 0
        %1045 = vmatpush.bf16.msra.mxu0 0
        %1046 = vmatpush.bf16.msra.mxu0 %v836
        %1047 = vmatmul.bf16.gmra.mxu0 %v1037
        %v1048 = vpop.f32.mrf.mxu0
        %v1049 = vadd.f32 0.0, %v1048
        %v1050 = vpop.f32.mrf.mxu0
        %1051 = vdwg.mxu0
        %v1052 = vmul.f32 %v1006, %v1034
        %v1053 = vmul.f32 %v1049, %v1052
        %v1054 = vadd.f32 %v1001, %v1053
        %v1055 = vpack.c.bf16 %v1054, %v1054
        %v1056 = vld [vmem:[%s7] sm:$0xf]
        %v1057 = vld [vmem:[%s7 + $0x4] sm:$0xf]
        %v1058 = vld [vmem:[%s7 + $0x8] sm:$0xf]
        %v1059 = vld [vmem:[%s7 + $0xc] sm:$0xf]
        %v1060 = vperm.slane %v511, 0
        %v1065 = vunpack.c.l.b16 %v1056
        %v1066 = vunpack.c.l.b16 %v1057
        %v1067 = vunpack.c.l.b16 %v1058
        %v1068 = vunpack.c.l.b16 %v1059
        %v1069 = vpack.c.b16 %v1066, %v1065
        %v1070 = vpack.c.b16 %v1068, %v1067
        %v1074 = vsel %vm845, %v1055, 0
        %1076 = vmatpush.bf16.msra.mxu0 0
        %1077 = vmatpush.bf16.msra.mxu0 0
        %1078 = vmatpush.bf16.msra.mxu0 0
        %1079 = vmatpush.bf16.msra.mxu0 0
        %1080 = vmatpush.bf16.msra.mxu0 0
        %1081 = vmatpush.bf16.msra.mxu0 0
        %1082 = vmatpush.bf16.msra.mxu0 %v1070
        %1083 = vmatpush.bf16.msra.mxu0 %v1069
        %1084 = vmatmul.bf16.gmra.mxu0 %v1074
        %v1085 = vpop.f32.mrf.mxu0
        %v1086 = vadd.f32 %v1060, %v1085
        %v1087 = vpop.f32.mrf.mxu0
        %1088 = vdwg.mxu0
        %v1089 = vadd.f32 %v594, %v1086
        %v1090 = vsel %vm845, %v1089, 0.0
        %1091 = vadd.xlane.f32.xlu0 %v1090
        %v1092 = vpop.xlane.xlu0 %1091
        %v1093 = vrcp.pop 32.0
        %v1094 = vmul.f32 32.0, %v1093
        %v1095 = vsub.f32 1.0, %v1094
        %v1096 = vmul.f32 %v1093, %v1095
        %v1097 = vadd.f32 %v1093, %v1096
        %vm1098 = vweird.f32 %v1093
        %v1099 = vsel %vm1098, %v1093, %v1097
        %v1100 = vmul.f32 %v1092, %v1099
        %v1101 = vsub.f32 %v1089, %v1100
        %v1102 = vmul.f32 %v1101, %v1101
        %v1103 = vsel %vm845, %v1102, 0.0
        %1104 = vadd.xlane.f32.xlu0 %v1103
        %v1105 = vpop.xlane.xlu0 %1104
        %v1106 = vmul.f32 %v1105, %v1099
        %v1107 = vadd.f32 %v1106, 1e-05
        %v1108 = vrsqrt.pop %v1107
        %v1109 = vmul.f32 %v1108, %v1107
        %v1110 = vmul.f32 %v1109, %v1108
        %v1111 = vmul.f32 0.5, %v1110
        %v1112 = vsub.f32 1.5, %v1111
        %v1113 = vmul.f32 %v1108, %v1112
        %vm1114 = vweird.f32 %v1107
        %vm1115 = vweird.f32 %v1108
        %vm1116 = vmor %vm1114, %vm1115
        %v1117 = vsel %vm1116, %v1108, %v1113
        %v1118 = vmul.f32 %v1101, %v1117
        %v1119 = vperm.slane %v512, 0
        %v1120 = vmul.f32 %v1118, %v1119
        %v1121 = vperm.slane %v513, 0
        %v1122 = vadd.f32 %v1120, %v1121
        %v1123 = vpack.c.bf16 %v1122, %v1122
        %v1124 = vld [vmem:[%s9] sm:$0xf]
        %v1125 = vld [vmem:[%s9 + $0x4] sm:$0xf]
        %v1126 = vld [vmem:[%s9 + $0x8] sm:$0xf]
        %v1127 = vld [vmem:[%s9 + $0xc] sm:$0xf]
        %v1128 = vld [vmem:[%s10] sm:$0x1]
        %v1130 = vperm.slane %v1128, 0
        %v1136 = vunpack.c.l.b16 %v1124
        %v1137 = vunpack.c.l.b16 %v1125
        %v1138 = vunpack.c.l.b16 %v1126
        %v1139 = vunpack.c.l.b16 %v1127
        %v1140 = vpack.c.b16 %v1137, %v1136
        %v1141 = vpack.c.b16 %v1139, %v1138
        %v1145 = vsel %vm845, %v1123, 0
        %1147 = vmatpush.bf16.msra.mxu0 0
        %1148 = vmatpush.bf16.msra.mxu0 0
        %1149 = vmatpush.bf16.msra.mxu0 0
        %1150 = vmatpush.bf16.msra.mxu0 0
        %1151 = vmatpush.bf16.msra.mxu0 0
        %1152 = vmatpush.bf16.msra.mxu0 0
        %1153 = vmatpush.bf16.msra.mxu0 %v1141
        %1154 = vmatpush.bf16.msra.mxu0 %v1140
        %1155 = vmatmul.bf16.gmra.mxu0 %v1145
        %v1156 = vpop.f32.mrf.mxu0
        %v1157 = vadd.f32 %v1130, %v1156
        %v1158 = vpop.f32.mrf.mxu0
        %1159 = vdwg.mxu0
        %v1160 = vmax.f32 %v1157, 0.0
        %v1161 = vpack.c.bf16 %v1160, %v1160
        %v1162 = vld [vmem:[%s11] sm:$0xf]
        %v1163 = vld [vmem:[%s11 + $0x4] sm:$0xf]
        %v1164 = vld [vmem:[%s11 + $0x8] sm:$0xf]
        %v1165 = vld [vmem:[%s11 + $0xc] sm:$0xf]
        %v1166 = vld [vmem:[%s11 + $0x10] sm:$0xf]
        %v1167 = vld [vmem:[%s11 + $0x14] sm:$0xf]
        %v1168 = vld [vmem:[%s11 + $0x18] sm:$0xf]
        %v1169 = vld [vmem:[%s11 + $0x1c] sm:$0xf]
        %v1170 = vld [vmem:[%s11 + $0x20] sm:$0xf]
        %v1171 = vld [vmem:[%s11 + $0x24] sm:$0xf]
        %v1172 = vld [vmem:[%s11 + $0x28] sm:$0xf]
        %v1173 = vld [vmem:[%s11 + $0x2c] sm:$0xf]
        %v1174 = vld [vmem:[%s11 + $0x30] sm:$0xf]
        %v1175 = vld [vmem:[%s11 + $0x34] sm:$0xf]
        %v1176 = vld [vmem:[%s11 + $0x38] sm:$0xf]
        %v1177 = vld [vmem:[%s11 + $0x3c] sm:$0xf]
        %v1178 = vperm.slane %v514, 0
        %v1195 = vunpack.c.l.b16 %v1162
        %v1196 = vunpack.c.l.b16 %v1163
        %v1197 = vunpack.c.l.b16 %v1164
        %v1198 = vunpack.c.l.b16 %v1165
        %v1199 = vunpack.c.l.b16 %v1166
        %v1200 = vunpack.c.l.b16 %v1167
        %v1201 = vunpack.c.l.b16 %v1168
        %v1202 = vunpack.c.l.b16 %v1169
        %v1203 = vunpack.c.l.b16 %v1170
        %v1204 = vunpack.c.l.b16 %v1171
        %v1205 = vunpack.c.l.b16 %v1172
        %v1206 = vunpack.c.l.b16 %v1173
        %v1207 = vunpack.c.l.b16 %v1174
        %v1208 = vunpack.c.l.b16 %v1175
        %v1209 = vunpack.c.l.b16 %v1176
        %v1210 = vunpack.c.l.b16 %v1177
        %v1211 = vpack.c.b16 %v1196, %v1195
        %v1212 = vpack.c.b16 %v1198, %v1197
        %v1213 = vpack.c.b16 %v1200, %v1199
        %v1214 = vpack.c.b16 %v1202, %v1201
        %v1215 = vpack.c.b16 %v1204, %v1203
        %v1216 = vpack.c.b16 %v1206, %v1205
        %v1217 = vpack.c.b16 %v1208, %v1207
        %v1218 = vpack.c.b16 %v1210, %v1209
        %1227 = vmatpush.bf16.msra.mxu0 %v1218
        %1228 = vmatpush.bf16.msra.mxu0 %v1217
        %1229 = vmatpush.bf16.msra.mxu0 %v1216
        %1230 = vmatpush.bf16.msra.mxu0 %v1215
        %1231 = vmatpush.bf16.msra.mxu0 %v1214
        %1232 = vmatpush.bf16.msra.mxu0 %v1213
        %1233 = vmatpush.bf16.msra.mxu0 %v1212
        %1234 = vmatpush.bf16.msra.mxu0 %v1211
        %1235 = vmatmul.bf16.gmra.mxu0 %v1161
        %v1236 = vpop.f32.mrf.mxu0
        %v1237 = vadd.f32 %v1178, %v1236
        %v1238 = vpop.f32.mrf.mxu0
        %1239 = vdwg.mxu0
        %v1240 = vadd.f32 %v1122, %v1237
        %v1241 = vsel %vm845, %v1240, 0.0
        %1242 = vadd.xlane.f32.xlu0 %v1241
        %v1243 = vpop.xlane.xlu0 %1242
        %v1244 = vmul.f32 %v1243, %v1099
        %v1245 = vsub.f32 %v1240, %v1244
        %v1246 = vmul.f32 %v1245, %v1245
        %v1247 = vsel %vm845, %v1246, 0.0
        %1248 = vadd.xlane.f32.xlu0 %v1247
        %v1249 = vpop.xlane.xlu0 %1248
        %v1250 = vmul.f32 %v1249, %v1099
        %v1251 = vadd.f32 %v1250, 1e-05
        %v1252 = vrsqrt.pop %v1251
        %v1253 = vmul.f32 %v1252, %v1251
        %v1254 = vmul.f32 %v1253, %v1252
        %v1255 = vmul.f32 0.5, %v1254
        %v1256 = vsub.f32 1.5, %v1255
        %v1257 = vmul.f32 %v1252, %v1256
        %vm1258 = vweird.f32 %v1251
        %vm1259 = vweird.f32 %v1252
        %vm1260 = vmor %vm1258, %vm1259
        %v1261 = vsel %vm1260, %v1252, %v1257
        %v1262 = vmul.f32 %v1245, %v1261
        %v1263 = vperm.slane %v515, 0
        %v1264 = vmul.f32 %v1262, %v1263
        %v1265 = vperm.slane %v516, 0
        %v1266 = vadd.f32 %v1264, %v1265
        %v1267 = vpack.c.bf16 %v1266, %v1266
        %v1268 = vld [vmem:[%s12] sm:$0xf]
        %v1269 = vld [vmem:[%s12 + $0x4] sm:$0xf]
        %v1270 = vld [vmem:[%s12 + $0x8] sm:$0xf]
        %v1271 = vld [vmem:[%s12 + $0xc] sm:$0xf]
        %v1272 = vld [vmem:[%s13] sm:$0x1]
        %v1274 = vperm.slane %v1272, 0
        %v1280 = vunpack.c.l.b16 %v1268
        %v1281 = vunpack.c.l.b16 %v1269
        %v1282 = vunpack.c.l.b16 %v1270
        %v1283 = vunpack.c.l.b16 %v1271
        %v1284 = vpack.c.b16 %v1281, %v1280
        %v1285 = vpack.c.b16 %v1283, %v1282
        %v1289 = vsel %vm845, %v1267, 0
        %1291 = vmatpush.bf16.msra.mxu0 0
        %1292 = vmatpush.bf16.msra.mxu0 0
        %1293 = vmatpush.bf16.msra.mxu0 0
        %1294 = vmatpush.bf16.msra.mxu0 0
        %1295 = vmatpush.bf16.msra.mxu0 0
        %1296 = vmatpush.bf16.msra.mxu0 0
        %1297 = vmatpush.bf16.msra.mxu0 %v1285
        %1298 = vmatpush.bf16.msra.mxu0 %v1284
        %1299 = vmatmul.bf16.gmra.mxu0 %v1289
        %v1300 = vpop.f32.mrf.mxu0
        %v1301 = vadd.f32 %v1274, %v1300
        %v1302 = vpop.f32.mrf.mxu0
        %1303 = vdwg.mxu0
        %v1304 = vadd.f32 %v1301, %v503
        %1305 = vst [vmem:[%s487] sm:$0xff] %v1304
        %s1306 = sand.u32 %s345, 1
        %s1307 = scalar_lea.sflag [#allocation3], %s1306
        %s1308 = sand.u32 %s345, 1
        %s1309 = smul.addr %s1308, 8
        %s1310 = scalar_lea.vmem [#allocation2], %s1309
        // Predicated region
        $region77: #{tpu_custom_call.1} parent=75 // pred_check
          %p1311 = pneg %p355
        $region78: #{tpu_custom_call.1} parent=75 // pred_check_branch
          %1313 = sbr.rel (%p1311) target = $region80
        $region79: #{tpu_custom_call.1} parent=75 // pred_region
          %1315 = vsyncadd %s1307, 0
          %s1316 = smul.addr %s28, 8
          %s1317 = scalar_lea.hbm %s14, %s1316
          %s1319 = sshll.u32 %s1310, 4
          %s1320 = int_to_ptr.vmem [resolvable:$true] %s1319
          %s1321 = sshll.u32 %s1317, 4
          %s1322 = int_to_ptr.hbm [resolvable:$true] %s1321
          %1324 = dma.vmem_to_hbm [thread:$0]  %s1320, 128, %s1322, %s1307
        $region80: #{tpu_custom_call.1} parent=75 // pred_fallthru
          _
      $region76: #{tpu_custom_call.1} parent=5 // pred_fallthru
        _
      %p1325 = scmp.le.s32.totalorder 2, %s23
      // Predicated region
      $region81: #{tpu_custom_call.1} parent=5 // pred_check
        %p1326 = pneg %p1325
      $region82: #{tpu_custom_call.1} parent=5 // pred_check_branch
        %1328 = sbr.rel (%p1326) target = $region84
      $region83: #{tpu_custom_call.1} parent=5 // pred_region
        %s1329 = ssub.s32 %s23, 2
        // Predicated region
        $region85: #{tpu_custom_call.1} parent=83 // pred_check
          %p1330 = pneg %p361
        $region86: #{tpu_custom_call.1} parent=83 // pred_check_branch
          %1332 = sbr.rel (%p1330) target = $region88
        $region87: #{tpu_custom_call.1} parent=83 // pred_region
          %s1333 = sand.u32 %s346, 1
          %s1334 = scalar_lea.sflag [#allocation3], %s1333
          %s1335 = sand.u32 %s346, 1
          %s1336 = smul.addr %s1335, 8
          %s1337 = scalar_lea.vmem [#allocation2], %s1336
          %1339 = dma.done %s1334, 128
        $region88: #{tpu_custom_call.1} parent=83 // pred_fallthru
          _
      $region84: #{tpu_custom_call.1} parent=5 // pred_fallthru
        _
    $region6: #{tpu_custom_call.1} parent=1 // loop_footer
      %s27 = sadd.s32 1, %s23
    $region7: #{tpu_custom_call.1} parent=1 // loop_footer_branch
      %22 = sbr.rel target = $region3
    $region8: #{tpu_custom_call.1} parent=1 // loop_exit
      _
    %1340 = vsyncpa [#allocation3], 1
    %s1341 = scalar_lea.sflag [#allocation3], 1
    %1342 = vsyncpa %s1341, 1

// kernel: tpu_custom_call.1
$region0: #{tpu_custom_call.1}
  #allocation0 [shape = 'u32[]', space=smem, size = 0x4, offset = 0x4, fixed_abs, tag = 'smem constant byte address 0x4 - core index']
  #allocation1 [shape = 'u32[72,128]{1,0:T(1,128)}', space=vmem, size = 0x9000, scoped, tag = 'internal scratch']
  %s0 = inlined_call_operand.vmem [shape: f32[16,128], index: 0, kind: input, shape index: {}]
  %s1 = inlined_call_operand.vmem [shape: f32[32,128], index: 1, kind: input, shape index: {}]
  %s2 = inlined_call_operand.vmem [shape: f32[16,16], index: 2, kind: input, shape index: {}]
  %s3 = inlined_call_operand.vmem [shape: bf16[128,32], index: 3, kind: input, shape index: {}]
  %s4 = inlined_call_operand.vmem [shape: bf16[128,32], index: 4, kind: input, shape index: {}]
  %s5 = inlined_call_operand.vmem [shape: bf16[128,32], index: 5, kind: input, shape index: {}]
  %s6 = inlined_call_operand.vmem [shape: bf16[128,32], index: 6, kind: input, shape index: {}]
  %s7 = inlined_call_operand.vmem [shape: bf16[32,32], index: 7, kind: input, shape index: {}]
  %s8 = inlined_call_operand.vmem [shape: f32[10,32], index: 8, kind: input, shape index: {}]
  %s9 = inlined_call_operand.vmem [shape: bf16[32,128], index: 9, kind: input, shape index: {}]
  %s10 = inlined_call_operand.vmem [shape: f32[1,128], index: 10, kind: input, shape index: {}]
  %s11 = inlined_call_operand.vmem [shape: bf16[128,32], index: 11, kind: input, shape index: {}]
  %s12 = inlined_call_operand.vmem [shape: bf16[32,128], index: 12, kind: input, shape index: {}]
  %s13 = inlined_call_operand.vmem [shape: f32[1,128], index: 13, kind: input, shape index: {}]
  %s14 = inlined_call_operand.hbm [shape: f32[16,128], index: 14, kind: output, shape index: {}]
  %s15 = sld [smem:[#allocation0]]
  $region89: #{tpu_custom_call.1} parent=0
    _
  %s17 = ssub.s32 1, %s15
  %s18 = scalar_select 0, %s17, %s15
  $region1: #{tpu_custom_call.1} parent=0
    #allocation2 [shape = 'u8[8192]{0}', space=vmem, size = 0x2000, scoped, tag = 'output window, operand 0']
    #allocation3 [shape = 's32[2]{0}', space=sflag, size = 0x8, scoped, tag = 'scoped memory for tpu_custom_call.1']
    %19 = vsyncpa [#allocation3], 0
    %s20 = scalar_lea.sflag [#allocation3], 1
    %21 = vsyncpa %s20, 0
    loop: start=0, step=1, limit=4
    $region2: #{tpu_custom_call.1} parent=1 // loop_pre_header
      _
    $region3: #{tpu_custom_call.1} parent=1 // loop_header
      %s23 = sphi 0, %s27
      %p24 = scmp.ge.s32.totalorder %s23, 4
      %s33 = sphi 0, %s35
      %s36 = sphi 0, %s33
      %s37 = sphi 0, %s36
      %s53 = sphi 0, %s37
      %s59 = sphi 0, %s61
      %s62 = sphi 0, %s59
      %s63 = sphi 0, %s62
      %s79 = sphi 0, %s63
      %s85 = sphi 0, %s87
      %s88 = sphi 0, %s85
      %s89 = sphi 0, %s88
      %s105 = sphi 0, %s89
      %s109 = sphi 0, %s109
      %s111 = sphi 0, %s109
      %s112 = sphi 0, %s111
      %s126 = sphi 0, %s112
      %s130 = sphi 0, %s130
      %s132 = sphi 0, %s130
      %s133 = sphi 0, %s132
      %s147 = sphi 0, %s133
      %s151 = sphi 0, %s151
      %s153 = sphi 0, %s151
      %s154 = sphi 0, %s153
      %s168 = sphi 0, %s154
      %s172 = sphi 0, %s172
      %s174 = sphi 0, %s172
      %s175 = sphi 0, %s174
      %s189 = sphi 0, %s175
      %s193 = sphi 0, %s193
      %s195 = sphi 0, %s193
      %s196 = sphi 0, %s195
      %s210 = sphi 0, %s196
      %s214 = sphi 0, %s214
      %s216 = sphi 0, %s214
      %s217 = sphi 0, %s216
      %s231 = sphi 0, %s217
      %s235 = sphi 0, %s235
      %s237 = sphi 0, %s235
      %s238 = sphi 0, %s237
      %s252 = sphi 0, %s238
      %s256 = sphi 0, %s256
      %s258 = sphi 0, %s256
      %s259 = sphi 0, %s258
      %s273 = sphi 0, %s259
      %s277 = sphi 0, %s277
      %s279 = sphi 0, %s277
      %s280 = sphi 0, %s279
      %s294 = sphi 0, %s280
      %s298 = sphi 0, %s298
      %s300 = sphi 0, %s298
      %s301 = sphi 0, %s300
      %s315 = sphi 0, %s301
      %s319 = sphi 0, %s319
      %s321 = sphi 0, %s319
      %s322 = sphi 0, %s321
      %s336 = sphi 0, %s322
      %s342 = sphi 0, %s344
      %s345 = sphi 0, %s342
      %s346 = sphi 0, %s345
      %s362 = sphi 0, %s346
    $region4: #{tpu_custom_call.1} parent=1 // loop_header_branch
      %26 = sbr.rel (%p24) target = $region8
    $region5: #{tpu_custom_call.1} parent=1 // loop_body
      %s28 = ssub.s32 %s23, 1
      %s29 = ssub.s32 %s23, 2
      %s30 = sadd.s32 %s23, 1
      %s31 = ssub.s32 %s23, %s30
      %p32 = scmp.eq.s32.totalorder %s31, 0
      %s34 = sadd.s32 %s33, 1
      %s35 = scalar_select %p32, %s33, %s34
      %p38 = pneg %p32
      %p39 = scmp.eq.s32.totalorder %s23, 1
      %p40 = por %p38, %p39
      %p41 = scmp.ne.s32.totalorder %s33, %s36
      %p42 = scmp.eq.s32.totalorder %s23, 0
      %p43 = por %p41, %p42
      %p44 = scmp.ne.s32.totalorder %s33, %s36
      %p45 = scmp.eq.s32.totalorder %s28, 1
      %p46 = por %p44, %p45
      %p47 = scmp.ne.s32.totalorder %s36, %s37
      %p48 = scmp.eq.s32.totalorder %s28, 0
      %p49 = por %p47, %p48
      %p50 = scmp.ne.s32.totalorder %s36, %s37
      %p51 = scmp.eq.s32.totalorder %s29, 1
      %p52 = por %p50, %p51
      %p54 = scmp.ne.s32.totalorder %s37, %s53
      %p55 = scmp.eq.s32.totalorder %s29, 0
      %p56 = por %p54, %p55
      %s57 = ssub.s32 %s23, %s30
      %p58 = scmp.eq.s32.totalorder %s57, 0
      %s60 = sadd.s32 %s59, 1
      %s61 = scalar_select %p58, %s59, %s60
      %p64 = pneg %p58
      %p65 = scmp.eq.s32.totalorder %s23, 1
      %p66 = por %p64, %p65
      %p67 = scmp.ne.s32.totalorder %s59, %s62
      %p68 = scmp.eq.s32.totalorder %s23, 0
      %p69 = por %p67, %p68
      %p70 = scmp.ne.s32.totalorder %s59, %s62
      %p71 = scmp.eq.s32.totalorder %s28, 1
      %p72 = por %p70, %p71
      %p73 = scmp.ne.s32.totalorder %s62, %s63
      %p74 = scmp.eq.s32.totalorder %s28, 0
      %p75 = por %p73, %p74
      %p76 = scmp.ne.s32.totalorder %s62, %s63
      %p77 = scmp.eq.s32.totalorder %s29, 1
      %p78 = por %p76, %p77
      %p80 = scmp.ne.s32.totalorder %s63, %s79
      %p81 = scmp.eq.s32.totalorder %s29, 0
      %p82 = por %p80, %p81
      %s83 = ssub.s32 %s23, %s30
      %p84 = scmp.eq.s32.totalorder %s83, 0
      %s86 = sadd.s32 %s85, 1
      %s87 = scalar_select %p84, %s85, %s86
      %p90 = pneg %p84
      %p91 = scmp.eq.s32.totalorder %s23, 1
      %p92 = por %p90, %p91
      %p93 = scmp.ne.s32.totalorder %s85, %s88
      %p94 = scmp.eq.s32.totalorder %s23, 0
      %p95 = por %p93, %p94
      %p96 = scmp.ne.s32.totalorder %s85, %s88
      %p97 = scmp.eq.s32.totalorder %s28, 1
      %p98 = por %p96, %p97
      %p99 = scmp.ne.s32.totalorder %s88, %s89
      %p100 = scmp.eq.s32.totalorder %s28, 0
      %p101 = por %p99, %p100
      %p102 = scmp.ne.s32.totalorder %s88, %s89
      %p103 = scmp.eq.s32.totalorder %s29, 1
      %p104 = por %p102, %p103
      %p106 = scmp.ne.s32.totalorder %s89, %s105
      %p107 = scmp.eq.s32.totalorder %s29, 0
      %p108 = por %p106, %p107
      %s110 = sadd.s32 %s109, 1
      %p113 = scmp.eq.s32.totalorder %s23, 1
      %p114 = scmp.ne.s32.totalorder %s109, %s111
      %p115 = scmp.eq.s32.totalorder %s23, 0
      %p116 = por %p114, %p115
      %p117 = scmp.ne.s32.totalorder %s109, %s111
      %p118 = scmp.eq.s32.totalorder %s28, 1
      %p119 = por %p117, %p118
      %p120 = scmp.ne.s32.totalorder %s111, %s112
      %p121 = scmp.eq.s32.totalorder %s28, 0
      %p122 = por %p120, %p121
      %p123 = scmp.ne.s32.totalorder %s111, %s112
      %p124 = scmp.eq.s32.totalorder %s29, 1
      %p125 = por %p123, %p124
      %p127 = scmp.ne.s32.totalorder %s112, %s126
      %p128 = scmp.eq.s32.totalorder %s29, 0
      %p129 = por %p127, %p128
      %s131 = sadd.s32 %s130, 1
      %p134 = scmp.eq.s32.totalorder %s23, 1
      %p135 = scmp.ne.s32.totalorder %s130, %s132
      %p136 = scmp.eq.s32.totalorder %s23, 0
      %p137 = por %p135, %p136
      %p138 = scmp.ne.s32.totalorder %s130, %s132
      %p139 = scmp.eq.s32.totalorder %s28, 1
      %p140 = por %p138, %p139
      %p141 = scmp.ne.s32.totalorder %s132, %s133
      %p142 = scmp.eq.s32.totalorder %s28, 0
      %p143 = por %p141, %p142
      %p144 = scmp.ne.s32.totalorder %s132, %s133
      %p145 = scmp.eq.s32.totalorder %s29, 1
      %p146 = por %p144, %p145
      %p148 = scmp.ne.s32.totalorder %s133, %s147
      %p149 = scmp.eq.s32.totalorder %s29, 0
      %p150 = por %p148, %p149
      %s152 = sadd.s32 %s151, 1
      %p155 = scmp.eq.s32.totalorder %s23, 1
      %p156 = scmp.ne.s32.totalorder %s151, %s153
      %p157 = scmp.eq.s32.totalorder %s23, 0
      %p158 = por %p156, %p157
      %p159 = scmp.ne.s32.totalorder %s151, %s153
      %p160 = scmp.eq.s32.totalorder %s28, 1
      %p161 = por %p159, %p160
      %p162 = scmp.ne.s32.totalorder %s153, %s154
      %p163 = scmp.eq.s32.totalorder %s28, 0
      %p164 = por %p162, %p163
      %p165 = scmp.ne.s32.totalorder %s153, %s154
      %p166 = scmp.eq.s32.totalorder %s29, 1
      %p167 = por %p165, %p166
      %p169 = scmp.ne.s32.totalorder %s154, %s168
      %p170 = scmp.eq.s32.totalorder %s29, 0
      %p171 = por %p169, %p170
      %s173 = sadd.s32 %s172, 1
      %p176 = scmp.eq.s32.totalorder %s23, 1
      %p177 = scmp.ne.s32.totalorder %s172, %s174
      %p178 = scmp.eq.s32.totalorder %s23, 0
      %p179 = por %p177, %p178
      %p180 = scmp.ne.s32.totalorder %s172, %s174
      %p181 = scmp.eq.s32.totalorder %s28, 1
      %p182 = por %p180, %p181
      %p183 = scmp.ne.s32.totalorder %s174, %s175
      %p184 = scmp.eq.s32.totalorder %s28, 0
      %p185 = por %p183, %p184
      %p186 = scmp.ne.s32.totalorder %s174, %s175
      %p187 = scmp.eq.s32.totalorder %s29, 1
      %p188 = por %p186, %p187
      %p190 = scmp.ne.s32.totalorder %s175, %s189
      %p191 = scmp.eq.s32.totalorder %s29, 0
      %p192 = por %p190, %p191
      %s194 = sadd.s32 %s193, 1
      %p197 = scmp.eq.s32.totalorder %s23, 1
      %p198 = scmp.ne.s32.totalorder %s193, %s195
      %p199 = scmp.eq.s32.totalorder %s23, 0
      %p200 = por %p198, %p199
      %p201 = scmp.ne.s32.totalorder %s193, %s195
      %p202 = scmp.eq.s32.totalorder %s28, 1
      %p203 = por %p201, %p202
      %p204 = scmp.ne.s32.totalorder %s195, %s196
      %p205 = scmp.eq.s32.totalorder %s28, 0
      %p206 = por %p204, %p205
      %p207 = scmp.ne.s32.totalorder %s195, %s196
      %p208 = scmp.eq.s32.totalorder %s29, 1
      %p209 = por %p207, %p208
      %p211 = scmp.ne.s32.totalorder %s196, %s210
      %p212 = scmp.eq.s32.totalorder %s29, 0
      %p213 = por %p211, %p212
      %s215 = sadd.s32 %s214, 1
      %p218 = scmp.eq.s32.totalorder %s23, 1
      %p219 = scmp.ne.s32.totalorder %s214, %s216
      %p220 = scmp.eq.s32.totalorder %s23, 0
      %p221 = por %p219, %p220
      %p222 = scmp.ne.s32.totalorder %s214, %s216
      %p223 = scmp.eq.s32.totalorder %s28, 1
      %p224 = por %p222, %p223
      %p225 = scmp.ne.s32.totalorder %s216, %s217
      %p226 = scmp.eq.s32.totalorder %s28, 0
      %p227 = por %p225, %p226
      %p228 = scmp.ne.s32.totalorder %s216, %s217
      %p229 = scmp.eq.s32.totalorder %s29, 1
      %p230 = por %p228, %p229
      %p232 = scmp.ne.s32.totalorder %s217, %s231
      %p233 = scmp.eq.s32.totalorder %s29, 0
      %p234 = por %p232, %p233
      %s236 = sadd.s32 %s235, 1
      %p239 = scmp.eq.s32.totalorder %s23, 1
      %p240 = scmp.ne.s32.totalorder %s235, %s237
      %p241 = scmp.eq.s32.totalorder %s23, 0
      %p242 = por %p240, %p241
      %p243 = scmp.ne.s32.totalorder %s235, %s237
      %p244 = scmp.eq.s32.totalorder %s28, 1
      %p245 = por %p243, %p244
      %p246 = scmp.ne.s32.totalorder %s237, %s238
      %p247 = scmp.eq.s32.totalorder %s28, 0
      %p248 = por %p246, %p247
      %p249 = scmp.ne.s32.totalorder %s237, %s238
      %p250 = scmp.eq.s32.totalorder %s29, 1
      %p251 = por %p249, %p250
      %p253 = scmp.ne.s32.totalorder %s238, %s252
      %p254 = scmp.eq.s32.totalorder %s29, 0
      %p255 = por %p253, %p254
      %s257 = sadd.s32 %s256, 1
      %p260 = scmp.eq.s32.totalorder %s23, 1
      %p261 = scmp.ne.s32.totalorder %s256, %s258
      %p262 = scmp.eq.s32.totalorder %s23, 0
      %p263 = por %p261, %p262
      %p264 = scmp.ne.s32.totalorder %s256, %s258
      %p265 = scmp.eq.s32.totalorder %s28, 1
      %p266 = por %p264, %p265
      %p267 = scmp.ne.s32.totalorder %s258, %s259
      %p268 = scmp.eq.s32.totalorder %s28, 0
      %p269 = por %p267, %p268
      %p270 = scmp.ne.s32.totalorder %s258, %s259
      %p271 = scmp.eq.s32.totalorder %s29, 1
      %p272 = por %p270, %p271
      %p274 = scmp.ne.s32.totalorder %s259, %s273
      %p275 = scmp.eq.s32.totalorder %s29, 0
      %p276 = por %p274, %p275
      %s278 = sadd.s32 %s277, 1
      %p281 = scmp.eq.s32.totalorder %s23, 1
      %p282 = scmp.ne.s32.totalorder %s277, %s279
      %p283 = scmp.eq.s32.totalorder %s23, 0
      %p284 = por %p282, %p283
      %p285 = scmp.ne.s32.totalorder %s277, %s279
      %p286 = scmp.eq.s32.totalorder %s28, 1
      %p287 = por %p285, %p286
      %p288 = scmp.ne.s32.totalorder %s279, %s280
      %p289 = scmp.eq.s32.totalorder %s28, 0
      %p290 = por %p288, %p289
      %p291 = scmp.ne.s32.totalorder %s279, %s280
      %p292 = scmp.eq.s32.totalorder %s29, 1
      %p293 = por %p291, %p292
      %p295 = scmp.ne.s32.totalorder %s280, %s294
      %p296 = scmp.eq.s32.totalorder %s29, 0
      %p297 = por %p295, %p296
      %s299 = sadd.s32 %s298, 1
      %p302 = scmp.eq.s32.totalorder %s23, 1
      %p303 = scmp.ne.s32.totalorder %s298, %s300
      %p304 = scmp.eq.s32.totalorder %s23, 0
      %p305 = por %p303, %p304
      %p306 = scmp.ne.s32.totalorder %s298, %s300
      %p307 = scmp.eq.s32.totalorder %s28, 1
      %p308 = por %p306, %p307
      %p309 = scmp.ne.s32.totalorder %s300, %s301
      %p310 = scmp.eq.s32.totalorder %s28, 0
      %p311 = por %p309, %p310
      %p312 = scmp.ne.s32.totalorder %s300, %s301
      %p313 = scmp.eq.s32.totalorder %s29, 1
      %p314 = por %p312, %p313
      %p316 = scmp.ne.s32.totalorder %s301, %s315
      %p317 = scmp.eq.s32.totalorder %s29, 0
      %p318 = por %p316, %p317
      %s320 = sadd.s32 %s319, 1
      %p323 = scmp.eq.s32.totalorder %s23, 1
      %p324 = scmp.ne.s32.totalorder %s319, %s321
      %p325 = scmp.eq.s32.totalorder %s23, 0
      %p326 = por %p324, %p325
      %p327 = scmp.ne.s32.totalorder %s319, %s321
      %p328 = scmp.eq.s32.totalorder %s28, 1
      %p329 = por %p327, %p328
      %p330 = scmp.ne.s32.totalorder %s321, %s322
      %p331 = scmp.eq.s32.totalorder %s28, 0
      %p332 = por %p330, %p331
      %p333 = scmp.ne.s32.totalorder %s321, %s322
      %p334 = scmp.eq.s32.totalorder %s29, 1
      %p335 = por %p333, %p334
      %p337 = scmp.ne.s32.totalorder %s322, %s336
      %p338 = scmp.eq.s32.totalorder %s29, 0
      %p339 = por %p337, %p338
      %s340 = ssub.s32 %s23, %s30
      %p341 = scmp.eq.s32.totalorder %s340, 0
      %s343 = sadd.s32 %s342, 1
      %s344 = scalar_select %p341, %s342, %s343
      %p347 = pneg %p341
      %p348 = scmp.eq.s32.totalorder %s23, 1
      %p349 = por %p347, %p348
      %p350 = scmp.ne.s32.totalorder %s342, %s345
      %p351 = scmp.eq.s32.totalorder %s23, 0
      %p352 = por %p350, %p351
      %p353 = scmp.ne.s32.totalorder %s342, %s345
      %p354 = scmp.eq.s32.totalorder %s28, 1
      %p355 = por %p353, %p354
      %p356 = scmp.ne.s32.totalorder %s345, %s346
      %p357 = scmp.eq.s32.totalorder %s28, 0
      %p358 = por %p356, %p357
      %p359 = scmp.ne.s32.totalorder %s345, %s346
      %p360 = scmp.eq.s32.totalorder %s29, 1
      %p361 = por %p359, %p360
      %p363 = scmp.ne.s32.totalorder %s346, %s362
      %p364 = scmp.eq.s32.totalorder %s29, 0
      %p365 = por %p363, %p364
      %p366 = scmp.le.s32.totalorder 1, %s23
      %p367 = scmp.lt.s32.totalorder %s23, 3
      %p368 = pnand %p366, %p367
      %p369 = pneg %p368
      // Predicated region
      $region9: #{tpu_custom_call.1} parent=5 // pred_check
        _
      $region10: #{tpu_custom_call.1} parent=5 // pred_check_branch
        %371 = sbr.rel (%p368) target = $region12
      $region11: #{tpu_custom_call.1} parent=5 // pred_region
        %s372 = ssub.s32 %s23, 1
        // Predicated region
        $region13: #{tpu_custom_call.1} parent=11 // pred_check
          %p373 = pneg %p122
        $region14: #{tpu_custom_call.1} parent=11 // pred_check_branch
          %375 = sbr.rel (%p373) target = $region16
        $region15: #{tpu_custom_call.1} parent=11 // pred_region
          _
        $region16: #{tpu_custom_call.1} parent=11 // pred_fallthru
          _
        // Predicated region
        $region17: #{tpu_custom_call.1} parent=11 // pred_check
          %p376 = pneg %p143
        $region18: #{tpu_custom_call.1} parent=11 // pred_check_branch
          %378 = sbr.rel (%p376) target = $region20
        $region19: #{tpu_custom_call.1} parent=11 // pred_region
          _
        $region20: #{tpu_custom_call.1} parent=11 // pred_fallthru
          _
        // Predicated region
        $region21: #{tpu_custom_call.1} parent=11 // pred_check
          %p379 = pneg %p164
        $region22: #{tpu_custom_call.1} parent=11 // pred_check_branch
          %381 = sbr.rel (%p379) target = $region24
        $region23: #{tpu_custom_call.1} parent=11 // pred_region
          _
        $region24: #{tpu_custom_call.1} parent=11 // pred_fallthru
          _
        // Predicated region
        $region25: #{tpu_custom_call.1} parent=11 // pred_check
          %p382 = pneg %p185
        $region26: #{tpu_custom_call.1} parent=11 // pred_check_branch
          %384 = sbr.rel (%p382) target = $region28
        $region27: #{tpu_custom_call.1} parent=11 // pred_region
          _
        $region28: #{tpu_custom_call.1} parent=11 // pred_fallthru
          _
        // Predicated region
        $region29: #{tpu_custom_call.1} parent=11 // pred_check
          %p385 = pneg %p206
        $region30: #{tpu_custom_call.1} parent=11 // pred_check_branch
          %387 = sbr.rel (%p385) target = $region32
        $region31: #{tpu_custom_call.1} parent=11 // pred_region
          _
        $region32: #{tpu_custom_call.1} parent=11 // pred_fallthru
          _
        // Predicated region
        $region33: #{tpu_custom_call.1} parent=11 // pred_check
          %p388 = pneg %p227
        $region34: #{tpu_custom_call.1} parent=11 // pred_check_branch
          %390 = sbr.rel (%p388) target = $region36
        $region35: #{tpu_custom_call.1} parent=11 // pred_region
          _
        $region36: #{tpu_custom_call.1} parent=11 // pred_fallthru
          _
        // Predicated region
        $region37: #{tpu_custom_call.1} parent=11 // pred_check
          %p391 = pneg %p248
        $region38: #{tpu_custom_call.1} parent=11 // pred_check_branch
          %393 = sbr.rel (%p391) target = $region40
        $region39: #{tpu_custom_call.1} parent=11 // pred_region
          _
        $region40: #{tpu_custom_call.1} parent=11 // pred_fallthru
          _
        // Predicated region
        $region41: #{tpu_custom_call.1} parent=11 // pred_check
          %p394 = pneg %p269
        $region42: #{tpu_custom_call.1} parent=11 // pred_check_branch
          %396 = sbr.rel (%p394) target = $region44
        $region43: #{tpu_custom_call.1} parent=11 // pred_region
          _
        $region44: #{tpu_custom_call.1} parent=11 // pred_fallthru
          _
        // Predicated region
        $region45: #{tpu_custom_call.1} parent=11 // pred_check
          %p397 = pneg %p290
        $region46: #{tpu_custom_call.1} parent=11 // pred_check_branch
          %399 = sbr.rel (%p397) target = $region48
        $region47: #{tpu_custom_call.1} parent=11 // pred_region
          _
        $region48: #{tpu_custom_call.1} parent=11 // pred_fallthru
          _
        // Predicated region
        $region49: #{tpu_custom_call.1} parent=11 // pred_check
          %p400 = pneg %p311
        $region50: #{tpu_custom_call.1} parent=11 // pred_check_branch
          %402 = sbr.rel (%p400) target = $region52
        $region51: #{tpu_custom_call.1} parent=11 // pred_region
          _
        $region52: #{tpu_custom_call.1} parent=11 // pred_fallthru
          _
        // Predicated region
        $region53: #{tpu_custom_call.1} parent=11 // pred_check
          %p403 = pneg %p332
        $region54: #{tpu_custom_call.1} parent=11 // pred_check_branch
          %405 = sbr.rel (%p403) target = $region56
        $region55: #{tpu_custom_call.1} parent=11 // pred_region
          _
        $region56: #{tpu_custom_call.1} parent=11 // pred_fallthru
          _
      $region12: #{tpu_custom_call.1} parent=5 // pred_fallthru
        _
      %p406 = scmp.lt.s32.totalorder %s23, 2
      // Predicated region
      $region57: #{tpu_custom_call.1} parent=5 // pred_check
        %p407 = pneg %p406
      $region58: #{tpu_custom_call.1} parent=5 // pred_check_branch
        %409 = sbr.rel (%p407) target = $region60
      $region59: #{tpu_custom_call.1} parent=5 // pred_region
        // Predicated region
        $region61: #{tpu_custom_call.1} parent=59 // pred_check
          %p410 = pneg %p43
        $region62: #{tpu_custom_call.1} parent=59 // pred_check_branch
          %412 = sbr.rel (%p410) target = $region64
        $region63: #{tpu_custom_call.1} parent=59 // pred_region
          %p413 = scmp.lt.s32.totalorder %s23, 1
          %s414 = scalar_select %p413, %s23, 1
          %s415 = smul.addr %s414, 8
          %s416 = scalar_lea.vmem %s0, %s415
        $region64: #{tpu_custom_call.1} parent=59 // pred_fallthru
          _
        // Predicated region
        $region65: #{tpu_custom_call.1} parent=59 // pred_check
          %p417 = pneg %p69
        $region66: #{tpu_custom_call.1} parent=59 // pred_check_branch
          %419 = sbr.rel (%p417) target = $region68
        $region67: #{tpu_custom_call.1} parent=59 // pred_region
          %s420 = smul.u32 2, %s23
          %p421 = scmp.lt.s32.totalorder %s420, 3
          %s422 = scalar_select %p421, %s420, 3
          %s423 = smul.addr %s422, 8
          %s424 = scalar_lea.vmem %s1, %s423
          %s425 = smul.u32 2, %s23
        $region68: #{tpu_custom_call.1} parent=59 // pred_fallthru
          _
        // Predicated region
        $region69: #{tpu_custom_call.1} parent=59 // pred_check
          %p426 = pneg %p95
        $region70: #{tpu_custom_call.1} parent=59 // pred_check_branch
          %428 = sbr.rel (%p426) target = $region72
        $region71: #{tpu_custom_call.1} parent=59 // pred_region
          %p429 = scmp.lt.s32.totalorder %s23, 1
          %s430 = scalar_select %p429, %s23, 1
          %s431 = smul.addr %s430, 8
          %s432 = scalar_lea.vmem %s2, %s431
        $region72: #{tpu_custom_call.1} parent=59 // pred_fallthru
          _
      $region60: #{tpu_custom_call.1} parent=5 // pred_fallthru
        _
      %p433 = scmp.le.s32.totalorder 1, %s23
      %p434 = scmp.lt.s32.totalorder %s23, 3
      %p435 = pnand %p433, %p434
      %p436 = pneg %p435
      // Predicated region
      $region73: #{tpu_custom_call.1} parent=5 // pred_check
        _
      $region74: #{tpu_custom_call.1} parent=5 // pred_check_branch
        %438 = sbr.rel (%p435) target = $region76
      $region75: #{tpu_custom_call.1} parent=5 // pred_region
        %s439 = ssub.s32 %s23, 1
        %p440 = scmp.lt.s32.totalorder %s28, 1
        %s441 = scalar_select %p440, %s28, 1
        %s442 = smul.addr %s441, 8
        %s443 = scalar_lea.vmem %s0, %s442
        %p444 = pneg %p49
        %p445 = pneg %p46
        %s446 = smul.u32 2, %s28
        %p447 = scmp.lt.s32.totalorder %s446, 3
        %s448 = scalar_select %p447, %s446, 3
        %s449 = smul.addr %s448, 8
        %s450 = scalar_lea.vmem %s1, %s449
        %p451 = pneg %p75
        %p452 = pneg %p72
        %p453 = scmp.lt.s32.totalorder %s28, 1
        %s454 = scalar_select %p453, %s28, 1
        %s455 = smul.addr %s454, 8
        %s456 = scalar_lea.vmem %s2, %s455
        %p457 = pneg %p101
        %p458 = pneg %p98
        %p459 = pneg %p122
        %p460 = pneg %p119
        %p461 = pneg %p143
        %p462 = pneg %p140
        %p463 = pneg %p164
        %p464 = pneg %p161
        %p465 = pneg %p185
        %p466 = pneg %p182
        %p467 = pneg %p206
        %p468 = pneg %p203
        %p469 = pneg %p227
        %p470 = pneg %p224
        %p471 = pneg %p248
        %p472 = pneg %p245
        %p473 = pneg %p269
        %p474 = pneg %p266
        %p475 = pneg %p290
        %p476 = pneg %p287
        %p477 = pneg %p311
        %p478 = pneg %p308
        %p479 = pneg %p332
        %p480 = pneg %p329
        %p481 = pneg %p358
        %p482 = pneg %p355
        %s483 = sand.u32 %s345, 1
        %s484 = scalar_lea.sflag [#allocation3], %s483
        %s485 = sand.u32 %s345, 1
        %s486 = smul.addr %s485, 8
        %s487 = scalar_lea.vmem [#allocation2], %s486
        %p488 = scmp.lt.s32.totalorder %s28, 1
        %s489 = scalar_select %p488, %s28, 1
        %s490 = smul.addr %s489, 8
        %s491 = scalar_lea.vmem %s0, %s490
        %s492 = smul.u32 2, %s28
        %p493 = scmp.lt.s32.totalorder %s492, 3
        %s494 = scalar_select %p493, %s492, 3
        %s495 = smul.addr %s494, 8
        %s496 = scalar_lea.vmem %s1, %s495
        %s497 = smul.u32 2, %s28
        %p498 = scmp.lt.s32.totalorder %s28, 1
        %s499 = scalar_select %p498, %s28, 1
        %s500 = smul.addr %s499, 8
        %s501 = scalar_lea.vmem %s2, %s500
        %v503 = vld [vmem:[%s491] sm:$0xff]
        %v504 = vld [vmem:[%s496] sm:$0xff]
        %v505 = vld [vmem:[%s496 + $0x8] sm:$0xff]
        %v506 = vld [vmem:[%s501] sm:$0x1]
        %v507 = vld [vmem:[%s8] sm:$0x1]
        %v508 = vld [vmem:[%s8 + $0x1] sm:$0x1]
        %v509 = vld [vmem:[%s8 + $0x2] sm:$0x1]
        %v510 = vld [vmem:[%s8 + $0x3] sm:$0x1]
        %v511 = vld [vmem:[%s8 + $0x4] sm:$0x1]
        %v512 = vld [vmem:[%s8 + $0x5] sm:$0x1]
        %v513 = vld [vmem:[%s8 + $0x6] sm:$0x1]
        %v514 = vld [vmem:[%s8 + $0x7] sm:$0x1]
        %v515 = vld [vmem:[%s8 + $0x8] sm:$0x1]
        %v516 = vld [vmem:[%s8 + $0x9] sm:$0x1]
        %v517 = vpack.c.bf16 %v503, %v503
        %v518 = vpack.c.bf16 %v505, %v504
        %v519 = vld [vmem:[%s3] sm:$0xf]
        %v520 = vld [vmem:[%s3 + $0x4] sm:$0xf]
        %v521 = vld [vmem:[%s3 + $0x8] sm:$0xf]
        %v522 = vld [vmem:[%s3 + $0xc] sm:$0xf]
        %v523 = vld [vmem:[%s3 + $0x10] sm:$0xf]
        %v524 = vld [vmem:[%s3 + $0x14] sm:$0xf]
        %v525 = vld [vmem:[%s3 + $0x18] sm:$0xf]
        %v526 = vld [vmem:[%s3 + $0x1c] sm:$0xf]
        %v527 = vld [vmem:[%s3 + $0x20] sm:$0xf]
        %v528 = vld [vmem:[%s3 + $0x24] sm:$0xf]
        %v529 = vld [vmem:[%s3 + $0x28] sm:$0xf]
        %v530 = vld [vmem:[%s3 + $0x2c] sm:$0xf]
        %v531 = vld [vmem:[%s3 + $0x30] sm:$0xf]
        %v532 = vld [vmem:[%s3 + $0x34] sm:$0xf]
        %v533 = vld [vmem:[%s3 + $0x38] sm:$0xf]
        %v534 = vld [vmem:[%s3 + $0x3c] sm:$0xf]
        %v535 = vperm.slane %v507, 0
        %v552 = vunpack.c.l.b16 %v519
        %v553 = vunpack.c.l.b16 %v520
        %v554 = vunpack.c.l.b16 %v521
        %v555 = vunpack.c.l.b16 %v522
        %v556 = vunpack.c.l.b16 %v523
        %v557 = vunpack.c.l.b16 %v524
        %v558 = vunpack.c.l.b16 %v525
        %v559 = vunpack.c.l.b16 %v526
        %v560 = vunpack.c.l.b16 %v527
        %v561 = vunpack.c.l.b16 %v528
        %v562 = vunpack.c.l.b16 %v529
        %v563 = vunpack.c.l.b16 %v530
        %v564 = vunpack.c.l.b16 %v531
        %v565 = vunpack.c.l.b16 %v532
        %v566 = vunpack.c.l.b16 %v533
        %v567 = vunpack.c.l.b16 %v534
        %v568 = vpack.c.b16 %v553, %v552
        %v569 = vpack.c.b16 %v555, %v554
        %v570 = vpack.c.b16 %v557, %v556
        %v571 = vpack.c.b16 %v559, %v558
        %v572 = vpack.c.b16 %v561, %v560
        %v573 = vpack.c.b16 %v563, %v562
        %v574 = vpack.c.b16 %v565, %v564
        %v575 = vpack.c.b16 %v567, %v566
        %584 = vmatpush.bf16.msra.mxu0 %v575
        %585 = vmatpush.bf16.msra.mxu0 %v574
        %586 = vmatpush.bf16.msra.mxu0 %v573
        %587 = vmatpush.bf16.msra.mxu0 %v572
        %588 = vmatpush.bf16.msra.mxu0 %v571
        %589 = vmatpush.bf16.msra.mxu0 %v570
        %590 = vmatpush.bf16.msra.mxu0 %v569
        %591 = vmatpush.bf16.msra.mxu0 %v568
        %592 = vmatmul.bf16.gmra.mxu0 %v517
        %v593 = vpop.f32.mrf.mxu0
        %v594 = vadd.f32 %v535, %v593
        %v595 = vpop.f32.mrf.mxu0
        %596 = vdwg.mxu0
        %v597 = vld [vmem:[%s4] sm:$0xf]
        %v598 = vld [vmem:[%s4 + $0x4] sm:$0xf]
        %v599 = vld [vmem:[%s4 + $0x8] sm:$0xf]
        %v600 = vld [vmem:[%s4 + $0xc] sm:$0xf]
        %v601 = vld [vmem:[%s4 + $0x10] sm:$0xf]
        %v602 = vld [vmem:[%s4 + $0x14] sm:$0xf]
        %v603 = vld [vmem:[%s4 + $0x18] sm:$0xf]
        %v604 = vld [vmem:[%s4 + $0x1c] sm:$0xf]
        %v605 = vld [vmem:[%s4 + $0x20] sm:$0xf]
        %v606 = vld [vmem:[%s4 + $0x24] sm:$0xf]
        %v607 = vld [vmem:[%s4 + $0x28] sm:$0xf]
        %v608 = vld [vmem:[%s4 + $0x2c] sm:$0xf]
        %v609 = vld [vmem:[%s4 + $0x30] sm:$0xf]
        %v610 = vld [vmem:[%s4 + $0x34] sm:$0xf]
        %v611 = vld [vmem:[%s4 + $0x38] sm:$0xf]
        %v612 = vld [vmem:[%s4 + $0x3c] sm:$0xf]
        %v613 = vperm.slane %v508, 0
        %v630 = vunpack.c.l.b16 %v597
        %v631 = vunpack.c.l.b16 %v598
        %v632 = vunpack.c.l.b16 %v599
        %v633 = vunpack.c.l.b16 %v600
        %v634 = vunpack.c.l.b16 %v601
        %v635 = vunpack.c.l.b16 %v602
        %v636 = vunpack.c.l.b16 %v603
        %v637 = vunpack.c.l.b16 %v604
        %v638 = vunpack.c.l.b16 %v605
        %v639 = vunpack.c.l.b16 %v606
        %v640 = vunpack.c.l.b16 %v607
        %v641 = vunpack.c.l.b16 %v608
        %v642 = vunpack.c.l.b16 %v609
        %v643 = vunpack.c.l.b16 %v610
        %v644 = vunpack.c.l.b16 %v611
        %v645 = vunpack.c.l.b16 %v612
        %v646 = vpack.c.b16 %v631, %v630
        %v647 = vpack.c.b16 %v633, %v632
        %v648 = vpack.c.b16 %v635, %v634
        %v649 = vpack.c.b16 %v637, %v636
        %v650 = vpack.c.b16 %v639, %v638
        %v651 = vpack.c.b16 %v641, %v640
        %v652 = vpack.c.b16 %v643, %v642
        %v653 = vpack.c.b16 %v645, %v644
        %662 = vmatpush.bf16.msra.mxu0 %v653
        %663 = vmatpush.bf16.msra.mxu0 %v652
        %664 = vmatpush.bf16.msra.mxu0 %v651
        %665 = vmatpush.bf16.msra.mxu0 %v650
        %666 = vmatpush.bf16.msra.mxu0 %v649
        %667 = vmatpush.bf16.msra.mxu0 %v648
        %668 = vmatpush.bf16.msra.mxu0 %v647
        %669 = vmatpush.bf16.msra.mxu0 %v646
        %670 = vmatmul.bf16.gmra.mxu0 %v517
        %v671 = vpop.f32.mrf.mxu0
        %v672 = vadd.f32 %v613, %v671
        %v673 = vpop.f32.mrf.mxu0
        %674 = vdwg.mxu0
        %v675 = vld [vmem:[%s5] sm:$0xf]
        %v676 = vld [vmem:[%s5 + $0x4] sm:$0xf]
        %v677 = vld [vmem:[%s5 + $0x8] sm:$0xf]
        %v678 = vld [vmem:[%s5 + $0xc] sm:$0xf]
        %v679 = vld [vmem:[%s5 + $0x10] sm:$0xf]
        %v680 = vld [vmem:[%s5 + $0x14] sm:$0xf]
        %v681 = vld [vmem:[%s5 + $0x18] sm:$0xf]
        %v682 = vld [vmem:[%s5 + $0x1c] sm:$0xf]
        %v683 = vld [vmem:[%s5 + $0x20] sm:$0xf]
        %v684 = vld [vmem:[%s5 + $0x24] sm:$0xf]
        %v685 = vld [vmem:[%s5 + $0x28] sm:$0xf]
        %v686 = vld [vmem:[%s5 + $0x2c] sm:$0xf]
        %v687 = vld [vmem:[%s5 + $0x30] sm:$0xf]
        %v688 = vld [vmem:[%s5 + $0x34] sm:$0xf]
        %v689 = vld [vmem:[%s5 + $0x38] sm:$0xf]
        %v690 = vld [vmem:[%s5 + $0x3c] sm:$0xf]
        %v691 = vperm.slane %v509, 0
        %v708 = vunpack.c.l.b16 %v675
        %v709 = vunpack.c.l.b16 %v676
        %v710 = vunpack.c.l.b16 %v677
        %v711 = vunpack.c.l.b16 %v678
        %v712 = vunpack.c.l.b16 %v679
        %v713 = vunpack.c.l.b16 %v680
        %v714 = vunpack.c.l.b16 %v681
        %v715 = vunpack.c.l.b16 %v682
        %v716 = vunpack.c.l.b16 %v683
        %v717 = vunpack.c.l.b16 %v684
        %v718 = vunpack.c.l.b16 %v685
        %v719 = vunpack.c.l.b16 %v686
        %v720 = vunpack.c.l.b16 %v687
        %v721 = vunpack.c.l.b16 %v688
        %v722 = vunpack.c.l.b16 %v689
        %v723 = vunpack.c.l.b16 %v690
        %v724 = vpack.c.b16 %v709, %v708
        %v725 = vpack.c.b16 %v711, %v710
        %v726 = vpack.c.b16 %v713, %v712
        %v727 = vpack.c.b16 %v715, %v714
        %v728 = vpack.c.b16 %v717, %v716
        %v729 = vpack.c.b16 %v719, %v718
        %v730 = vpack.c.b16 %v721, %v720
        %v731 = vpack.c.b16 %v723, %v722
        %740 = vmatpush.bf16.msra.mxu0 %v731
        %741 = vmatpush.bf16.msra.mxu0 %v730
        %742 = vmatpush.bf16.msra.mxu0 %v729
        %743 = vmatpush.bf16.msra.mxu0 %v728
        %744 = vmatpush.bf16.msra.mxu0 %v727
        %745 = vmatpush.bf16.msra.mxu0 %v726
        %746 = vmatpush.bf16.msra.mxu0 %v725
        %747 = vmatpush.bf16.msra.mxu0 %v724
        %748 = vmatmul.bf16.gmra.mxu0 %v518
        %v749 = vpop.f32.mrf.mxu0
        %v750 = vadd.f32 %v691, %v749
        %v751 = vpop.f32.mrf.mxu0
        %v752 = vadd.f32 %v691, %v751
        %753 = vdwg.mxu0
        %v754 = vld [vmem:[%s6] sm:$0xf]
        %v755 = vld [vmem:[%s6 + $0x4] sm:$0xf]
        %v756 = vld [vmem:[%s6 + $0x8] sm:$0xf]
        %v757 = vld [vmem:[%s6 + $0xc] sm:$0xf]
        %v758 = vld [vmem:[%s6 + $0x10] sm:$0xf]
        %v759 = vld [vmem:[%s6 + $0x14] sm:$0xf]
        %v760 = vld [vmem:[%s6 + $0x18] sm:$0xf]
        %v761 = vld [vmem:[%s6 + $0x1c] sm:$0xf]
        %v762 = vld [vmem:[%s6 + $0x20] sm:$0xf]
        %v763 = vld [vmem:[%s6 + $0x24] sm:$0xf]
        %v764 = vld [vmem:[%s6 + $0x28] sm:$0xf]
        %v765 = vld [vmem:[%s6 + $0x2c] sm:$0xf]
        %v766 = vld [vmem:[%s6 + $0x30] sm:$0xf]
        %v767 = vld [vmem:[%s6 + $0x34] sm:$0xf]
        %v768 = vld [vmem:[%s6 + $0x38] sm:$0xf]
        %v769 = vld [vmem:[%s6 + $0x3c] sm:$0xf]
        %v770 = vperm.slane %v510, 0
        %v787 = vunpack.c.l.b16 %v754
        %v788 = vunpack.c.l.b16 %v755
        %v789 = vunpack.c.l.b16 %v756
        %v790 = vunpack.c.l.b16 %v757
        %v791 = vunpack.c.l.b16 %v758
        %v792 = vunpack.c.l.b16 %v759
        %v793 = vunpack.c.l.b16 %v760
        %v794 = vunpack.c.l.b16 %v761
        %v795 = vunpack.c.l.b16 %v762
        %v796 = vunpack.c.l.b16 %v763
        %v797 = vunpack.c.l.b16 %v764
        %v798 = vunpack.c.l.b16 %v765
        %v799 = vunpack.c.l.b16 %v766
        %v800 = vunpack.c.l.b16 %v767
        %v801 = vunpack.c.l.b16 %v768
        %v802 = vunpack.c.l.b16 %v769
        %v803 = vpack.c.b16 %v788, %v787
        %v804 = vpack.c.b16 %v790, %v789
        %v805 = vpack.c.b16 %v792, %v791
        %v806 = vpack.c.b16 %v794, %v793
        %v807 = vpack.c.b16 %v796, %v795
        %v808 = vpack.c.b16 %v798, %v797
        %v809 = vpack.c.b16 %v800, %v799
        %v810 = vpack.c.b16 %v802, %v801
        %819 = vmatpush.bf16.msra.mxu0 %v810
        %820 = vmatpush.bf16.msra.mxu0 %v809
        %821 = vmatpush.bf16.msra.mxu0 %v808
        %822 = vmatpush.bf16.msra.mxu0 %v807
        %823 = vmatpush.bf16.msra.mxu0 %v806
        %824 = vmatpush.bf16.msra.mxu0 %v805
        %825 = vmatpush.bf16.msra.mxu0 %v804
        %826 = vmatpush.bf16.msra.mxu0 %v803
        %827 = vmatmul.bf16.gmra.mxu0 %v518
        %v828 = vpop.f32.mrf.mxu0
        %v829 = vadd.f32 %v770, %v828
        %v830 = vpop.f32.mrf.mxu0
        %v831 = vadd.f32 %v770, %v830
        %832 = vdwg.mxu0
        %v833 = vlaneseq
        %v834 = vand.u32 %v833, 127
        %v835 = vpack.c.bf16 %v752, %v750
        %v836 = vpack.c.bf16 %v831, %v829
        %vm837 = vcmp.ge.s32.totalorder %v834, 0
        %vm838 = vcmp.lt.s32.totalorder %v834, 8
        %vm839 = vmand %vm837, %vm838
        %v840 = vsel %vm839, 1, 0
        %v841 = vcvt.s32.f32 %v840
        %v842 = vmul.f32 %v672, %v841
        %v843 = vpack.c.bf16 %v842, %v842
        %v844 = vperm.slane %v506, 0
        %vm845 = vcmask 261120
        %v847 = vsel %vm845, %v843, 0
        %v850 = vsel %vm845, %v835, 0
        %852 = vmatpush.bf16.xpose.msra.mxu0 0
        %853 = vmatpush.bf16.xpose.msra.mxu0 0
        %854 = vmatpush.bf16.xpose.msra.mxu0 0
        %855 = vmatpush.bf16.xpose.msra.mxu0 0
        %856 = vmatpush.bf16.xpose.msra.mxu0 0
        %857 = vmatpush.bf16.xpose.msra.mxu0 0
        %858 = vmatpush.bf16.xpose.msra.mxu0 0
        %859 = vmatpush.bf16.xpose.msra.mxu0 %v850
        %860 = vmatmul.bf16.gmra.mxu0 %v847
        %v861 = vpop.f32.mrf.mxu0
        %v862 = vadd.f32 %v844, %v861
        %v863 = vpop.f32.mrf.mxu0
        %864 = vdwg.mxu0
        %vm865 = vcmask 130048
        %v866 = vsel %vm865, %v862, -inf
        %867 = vmax.xlane.f32.xlu0 %v866
        %v868 = vpop.xlane.xlu0 %867
        %v869 = vsub.f32 %v862, %v868
        %v870 = vmul.f32 %v869, 1.442695
        %v871 = vpow.pop %v870
        %v872 = vsel %vm865, %v871, 0.0
        %873 = vadd.xlane.f32.xlu0 %v872
        %v874 = vpop.xlane.xlu0 %873
        %v875 = vrcp.pop %v874
        %v876 = vpack.c.bf16 %v871, %v871
        %v878 = vsel %vm865, %v876, 0
        %880 = vmatpush.bf16.msra.mxu0 0
        %881 = vmatpush.bf16.msra.mxu0 0
        %882 = vmatpush.bf16.msra.mxu0 0
        %883 = vmatpush.bf16.msra.mxu0 0
        %884 = vmatpush.bf16.msra.mxu0 0
        %885 = vmatpush.bf16.msra.mxu0 0
        %886 = vmatpush.bf16.msra.mxu0 0
        %887 = vmatpush.bf16.msra.mxu0 %v836
        %888 = vmatmul.bf16.gmra.mxu0 %v878
        %v889 = vpop.f32.mrf.mxu0
        %v890 = vadd.f32 0.0, %v889
        %v891 = vpop.f32.mrf.mxu0
        %892 = vdwg.mxu0
        %v893 = vmul.f32 %v841, %v875
        %v894 = vmul.f32 %v890, %v893
        %v895 = vadd.f32 %v894, 0.0
        %vm896 = vcmp.ge.s32.totalorder %v834, 8
        %vm897 = vcmp.lt.s32.totalorder %v834, 16
        %vm898 = vmand %vm896, %vm897
        %v899 = vsel %vm898, 1, 0
        %v900 = vcvt.s32.f32 %v899
        %v901 = vmul.f32 %v672, %v900
        %v902 = vpack.c.bf16 %v901, %v901
        %v904 = vsel %vm845, %v902, 0
        %906 = vmatpush.bf16.xpose.msra.mxu0 0
        %907 = vmatpush.bf16.xpose.msra.mxu0 0
        %908 = vmatpush.bf16.xpose.msra.mxu0 0
        %909 = vmatpush.bf16.xpose.msra.mxu0 0
        %910 = vmatpush.bf16.xpose.msra.mxu0 0
        %911 = vmatpush.bf16.xpose.msra.mxu0 0
        %912 = vmatpush.bf16.xpose.msra.mxu0 0
        %913 = vmatpush.bf16.xpose.msra.mxu0 %v850
        %914 = vmatmul.bf16.gmra.mxu0 %v904
        %v915 = vpop.f32.mrf.mxu0
        %v916 = vadd.f32 %v844, %v915
        %v917 = vpop.f32.mrf.mxu0
        %918 = vdwg.mxu0
        %v919 = vsel %vm865, %v916, -inf
        %920 = vmax.xlane.f32.xlu0 %v919
        %v921 = vpop.xlane.xlu0 %920
        %v922 = vsub.f32 %v916, %v921
        %v923 = vmul.f32 %v922, 1.442695
        %v924 = vpow.pop %v923
        %v925 = vsel %vm865, %v924, 0.0
        %926 = vadd.xlane.f32.xlu0 %v925
        %v927 = vpop.xlane.xlu0 %926
        %v928 = vrcp.pop %v927
        %v929 = vpack.c.bf16 %v924, %v924
        %v931 = vsel %vm865, %v929, 0
        %933 = vmatpush.bf16.msra.mxu0 0
        %934 = vmatpush.bf16.msra.mxu0 0
        %935 = vmatpush.bf16.msra.mxu0 0
        %936 = vmatpush.bf16.msra.mxu0 0
        %937 = vmatpush.bf16.msra.mxu0 0
        %938 = vmatpush.bf16.msra.mxu0 0
        %939 = vmatpush.bf16.msra.mxu0 0
        %940 = vmatpush.bf16.msra.mxu0 %v836
        %941 = vmatmul.bf16.gmra.mxu0 %v931
        %v942 = vpop.f32.mrf.mxu0
        %v943 = vadd.f32 0.0, %v942
        %v944 = vpop.f32.mrf.mxu0
        %945 = vdwg.mxu0
        %v946 = vmul.f32 %v900, %v928
        %v947 = vmul.f32 %v943, %v946
        %v948 = vadd.f32 %v895, %v947
        %vm949 = vcmp.ge.s32.totalorder %v834, 16
        %vm950 = vcmp.lt.s32.totalorder %v834, 24
        %vm951 = vmand %vm949, %vm950
        %v952 = vsel %vm951, 1, 0
        %v953 = vcvt.s32.f32 %v952
        %v954 = vmul.f32 %v672, %v953
        %v955 = vpack.c.bf16 %v954, %v954
        %v957 = vsel %vm845, %v955, 0
        %959 = vmatpush.bf16.xpose.msra.mxu0 0
        %960 = vmatpush.bf16.xpose.msra.mxu0 0
        %961 = vmatpush.bf16.xpose.msra.mxu0 0
        %962 = vmatpush.bf16.xpose.msra.mxu0 0
        %963 = vmatpush.bf16.xpose.msra.mxu0 0
        %964 = vmatpush.bf16.xpose.msra.mxu0 0
        %965 = vmatpush.bf16.xpose.msra.mxu0 0
        %966 = vmatpush.bf16.xpose.msra.mxu0 %v850
        %967 = vmatmul.bf16.gmra.mxu0 %v957
        %v968 = vpop.f32.mrf.mxu0
        %v969 = vadd.f32 %v844, %v968
        %v970 = vpop.f32.mrf.mxu0
        %971 = vdwg.mxu0
        %v972 = vsel %vm865, %v969, -inf
        %973 = vmax.xlane.f32.xlu0 %v972
        %v974 = vpop.xlane.xlu0 %973
        %v975 = vsub.f32 %v969, %v974
        %v976 = vmul.f32 %v975, 1.442695
        %v977 = vpow.pop %v976
        %v978 = vsel %vm865, %v977, 0.0
        %979 = vadd.xlane.f32.xlu0 %v978
        %v980 = vpop.xlane.xlu0 %979
        %v981 = vrcp.pop %v980
        %v982 = vpack.c.bf16 %v977, %v977
        %v984 = vsel %vm865, %v982, 0
        %986 = vmatpush.bf16.msra.mxu0 0
        %987 = vmatpush.bf16.msra.mxu0 0
        %988 = vmatpush.bf16.msra.mxu0 0
        %989 = vmatpush.bf16.msra.mxu0 0
        %990 = vmatpush.bf16.msra.mxu0 0
        %991 = vmatpush.bf16.msra.mxu0 0
        %992 = vmatpush.bf16.msra.mxu0 0
        %993 = vmatpush.bf16.msra.mxu0 %v836
        %994 = vmatmul.bf16.gmra.mxu0 %v984
        %v995 = vpop.f32.mrf.mxu0
        %v996 = vadd.f32 0.0, %v995
        %v997 = vpop.f32.mrf.mxu0
        %998 = vdwg.mxu0
        %v999 = vmul.f32 %v953, %v981
        %v1000 = vmul.f32 %v996, %v999
        %v1001 = vadd.f32 %v948, %v1000
        %vm1002 = vcmp.ge.s32.totalorder %v834, 24
        %vm1003 = vcmp.lt.s32.totalorder %v834, 32
        %vm1004 = vmand %vm1002, %vm1003
        %v1005 = vsel %vm1004, 1, 0
        %v1006 = vcvt.s32.f32 %v1005
        %v1007 = vmul.f32 %v672, %v1006
        %v1008 = vpack.c.bf16 %v1007, %v1007
        %v1010 = vsel %vm845, %v1008, 0
        %1012 = vmatpush.bf16.xpose.msra.mxu0 0
        %1013 = vmatpush.bf16.xpose.msra.mxu0 0
        %1014 = vmatpush.bf16.xpose.msra.mxu0 0
        %1015 = vmatpush.bf16.xpose.msra.mxu0 0
        %1016 = vmatpush.bf16.xpose.msra.mxu0 0
        %1017 = vmatpush.bf16.xpose.msra.mxu0 0
        %1018 = vmatpush.bf16.xpose.msra.mxu0 0
        %1019 = vmatpush.bf16.xpose.msra.mxu0 %v850
        %1020 = vmatmul.bf16.gmra.mxu0 %v1010
        %v1021 = vpop.f32.mrf.mxu0
        %v1022 = vadd.f32 %v844, %v1021
        %v1023 = vpop.f32.mrf.mxu0
        %1024 = vdwg.mxu0
        %v1025 = vsel %vm865, %v1022, -inf
        %1026 = vmax.xlane.f32.xlu0 %v1025
        %v1027 = vpop.xlane.xlu0 %1026
        %v1028 = vsub.f32 %v1022, %v1027
        %v1029 = vmul.f32 %v1028, 1.442695
        %v1030 = vpow.pop %v1029
        %v1031 = vsel %vm865, %v1030, 0.0
        %1032 = vadd.xlane.f32.xlu0 %v1031
        %v1033 = vpop.xlane.xlu0 %1032
        %v1034 = vrcp.pop %v1033
        %v1035 = vpack.c.bf16 %v1030, %v1030
        %v1037 = vsel %vm865, %v1035, 0
        %1039 = vmatpush.bf16.msra.mxu0 0
        %1040 = vmatpush.bf16.msra.mxu0 0
        %1041 = vmatpush.bf16.msra.mxu0 0
        %1042 = vmatpush.bf16.msra.mxu0 0
        %1043 = vmatpush.bf16.msra.mxu0 0
        %1044 = vmatpush.bf16.msra.mxu0 0
        %1045 = vmatpush.bf16.msra.mxu0 0
        %1046 = vmatpush.bf16.msra.mxu0 %v836
        %1047 = vmatmul.bf16.gmra.mxu0 %v1037
        %v1048 = vpop.f32.mrf.mxu0
        %v1049 = vadd.f32 0.0, %v1048
        %v1050 = vpop.f32.mrf.mxu0
        %1051 = vdwg.mxu0
        %v1052 = vmul.f32 %v1006, %v1034
        %v1053 = vmul.f32 %v1049, %v1052
        %v1054 = vadd.f32 %v1001, %v1053
        %v1055 = vpack.c.bf16 %v1054, %v1054
        %v1056 = vld [vmem:[%s7] sm:$0xf]
        %v1057 = vld [vmem:[%s7 + $0x4] sm:$0xf]
        %v1058 = vld [vmem:[%s7 + $0x8] sm:$0xf]
        %v1059 = vld [vmem:[%s7 + $0xc] sm:$0xf]
        %v1060 = vperm.slane %v511, 0
        %v1065 = vunpack.c.l.b16 %v1056
        %v1066 = vunpack.c.l.b16 %v1057
        %v1067 = vunpack.c.l.b16 %v1058
        %v1068 = vunpack.c.l.b16 %v1059
        %v1069 = vpack.c.b16 %v1066, %v1065
        %v1070 = vpack.c.b16 %v1068, %v1067
        %v1074 = vsel %vm845, %v1055, 0
        %1076 = vmatpush.bf16.msra.mxu0 0
        %1077 = vmatpush.bf16.msra.mxu0 0
        %1078 = vmatpush.bf16.msra.mxu0 0
        %1079 = vmatpush.bf16.msra.mxu0 0
        %1080 = vmatpush.bf16.msra.mxu0 0
        %1081 = vmatpush.bf16.msra.mxu0 0
        %1082 = vmatpush.bf16.msra.mxu0 %v1070
        %1083 = vmatpush.bf16.msra.mxu0 %v1069
        %1084 = vmatmul.bf16.gmra.mxu0 %v1074
        %v1085 = vpop.f32.mrf.mxu0
        %v1086 = vadd.f32 %v1060, %v1085
        %v1087 = vpop.f32.mrf.mxu0
        %1088 = vdwg.mxu0
        %v1089 = vadd.f32 %v594, %v1086
        %v1090 = vsel %vm845, %v1089, 0.0
        %1091 = vadd.xlane.f32.xlu0 %v1090
        %v1092 = vpop.xlane.xlu0 %1091
        %v1093 = vrcp.pop 32.0
        %v1094 = vmul.f32 32.0, %v1093
        %v1095 = vsub.f32 1.0, %v1094
        %v1096 = vmul.f32 %v1093, %v1095
        %v1097 = vadd.f32 %v1093, %v1096
        %vm1098 = vweird.f32 %v1093
        %v1099 = vsel %vm1098, %v1093, %v1097
        %v1100 = vmul.f32 %v1092, %v1099
        %v1101 = vsub.f32 %v1089, %v1100
        %v1102 = vmul.f32 %v1101, %v1101
        %v1103 = vsel %vm845, %v1102, 0.0
        %1104 = vadd.xlane.f32.xlu0 %v1103
        %v1105 = vpop.xlane.xlu0 %1104
        %v1106 = vmul.f32 %v1105, %v1099
        %v1107 = vadd.f32 %v1106, 1e-05
        %v1108 = vrsqrt.pop %v1107
        %v1109 = vmul.f32 %v1108, %v1107
        %v1110 = vmul.f32 %v1109, %v1108
        %v1111 = vmul.f32 0.5, %v1110
        %v1112 = vsub.f32 1.5, %v1111
        %v1113 = vmul.f32 %v1108, %v1112
        %vm1114 = vweird.f32 %v1107
        %vm1115 = vweird.f32 %v1108
        %vm1116 = vmor %vm1114, %vm1115
        %v1117 = vsel %vm1116, %v1108, %v1113
        %v1118 = vmul.f32 %v1101, %v1117
        %v1119 = vperm.slane %v512, 0
        %v1120 = vmul.f32 %v1118, %v1119
        %v1121 = vperm.slane %v513, 0
        %v1122 = vadd.f32 %v1120, %v1121
        %v1123 = vpack.c.bf16 %v1122, %v1122
        %v1124 = vld [vmem:[%s9] sm:$0xf]
        %v1125 = vld [vmem:[%s9 + $0x4] sm:$0xf]
        %v1126 = vld [vmem:[%s9 + $0x8] sm:$0xf]
        %v1127 = vld [vmem:[%s9 + $0xc] sm:$0xf]
        %v1128 = vld [vmem:[%s10] sm:$0x1]
        %v1130 = vperm.slane %v1128, 0
        %v1136 = vunpack.c.l.b16 %v1124
        %v1137 = vunpack.c.l.b16 %v1125
        %v1138 = vunpack.c.l.b16 %v1126
        %v1139 = vunpack.c.l.b16 %v1127
        %v1140 = vpack.c.b16 %v1137, %v1136
        %v1141 = vpack.c.b16 %v1139, %v1138
        %v1145 = vsel %vm845, %v1123, 0
        %1147 = vmatpush.bf16.msra.mxu0 0
        %1148 = vmatpush.bf16.msra.mxu0 0
        %1149 = vmatpush.bf16.msra.mxu0 0
        %1150 = vmatpush.bf16.msra.mxu0 0
        %1151 = vmatpush.bf16.msra.mxu0 0
        %1152 = vmatpush.bf16.msra.mxu0 0
        %1153 = vmatpush.bf16.msra.mxu0 %v1141
        %1154 = vmatpush.bf16.msra.mxu0 %v1140
        %1155 = vmatmul.bf16.gmra.mxu0 %v1145
        %v1156 = vpop.f32.mrf.mxu0
        %v1157 = vadd.f32 %v1130, %v1156
        %v1158 = vpop.f32.mrf.mxu0
        %1159 = vdwg.mxu0
        %v1160 = vmax.f32 %v1157, 0.0
        %v1161 = vpack.c.bf16 %v1160, %v1160
        %v1162 = vld [vmem:[%s11] sm:$0xf]
        %v1163 = vld [vmem:[%s11 + $0x4] sm:$0xf]
        %v1164 = vld [vmem:[%s11 + $0x8] sm:$0xf]
        %v1165 = vld [vmem:[%s11 + $0xc] sm:$0xf]
        %v1166 = vld [vmem:[%s11 + $0x10] sm:$0xf]
        %v1167 = vld [vmem:[%s11 + $0x14] sm:$0xf]
        %v1168 = vld [vmem:[%s11 + $0x18] sm:$0xf]
        %v1169 = vld [vmem:[%s11 + $0x1c] sm:$0xf]
        %v1170 = vld [vmem:[%s11 + $0x20] sm:$0xf]
        %v1171 = vld [vmem:[%s11 + $0x24] sm:$0xf]
        %v1172 = vld [vmem:[%s11 + $0x28] sm:$0xf]
        %v1173 = vld [vmem:[%s11 + $0x2c] sm:$0xf]
        %v1174 = vld [vmem:[%s11 + $0x30] sm:$0xf]
        %v1175 = vld [vmem:[%s11 + $0x34] sm:$0xf]
        %v1176 = vld [vmem:[%s11 + $0x38] sm:$0xf]
        %v1177 = vld [vmem:[%s11 + $0x3c] sm:$0xf]
        %v1178 = vperm.slane %v514, 0
        %v1195 = vunpack.c.l.b16 %v1162
        %v1196 = vunpack.c.l.b16 %v1163
        %v1197 = vunpack.c.l.b16 %v1164
        %v1198 = vunpack.c.l.b16 %v1165
        %v1199 = vunpack.c.l.b16 %v1166
        %v1200 = vunpack.c.l.b16 %v1167
        %v1201 = vunpack.c.l.b16 %v1168
        %v1202 = vunpack.c.l.b16 %v1169
        %v1203 = vunpack.c.l.b16 %v1170
        %v1204 = vunpack.c.l.b16 %v1171
        %v1205 = vunpack.c.l.b16 %v1172
        %v1206 = vunpack.c.l.b16 %v1173
        %v1207 = vunpack.c.l.b16 %v1174
        %v1208 = vunpack.c.l.b16 %v1175
        %v1209 = vunpack.c.l.b16 %v1176
        %v1210 = vunpack.c.l.b16 %v1177
        %v1211 = vpack.c.b16 %v1196, %v1195
        %v1212 = vpack.c.b16 %v1198, %v1197
        %v1213 = vpack.c.b16 %v1200, %v1199
        %v1214 = vpack.c.b16 %v1202, %v1201
        %v1215 = vpack.c.b16 %v1204, %v1203
        %v1216 = vpack.c.b16 %v1206, %v1205
        %v1217 = vpack.c.b16 %v1208, %v1207
        %v1218 = vpack.c.b16 %v1210, %v1209
        %1227 = vmatpush.bf16.msra.mxu0 %v1218
        %1228 = vmatpush.bf16.msra.mxu0 %v1217
        %1229 = vmatpush.bf16.msra.mxu0 %v1216
        %1230 = vmatpush.bf16.msra.mxu0 %v1215
        %1231 = vmatpush.bf16.msra.mxu0 %v1214
        %1232 = vmatpush.bf16.msra.mxu0 %v1213
        %1233 = vmatpush.bf16.msra.mxu0 %v1212
        %1234 = vmatpush.bf16.msra.mxu0 %v1211
        %1235 = vmatmul.bf16.gmra.mxu0 %v1161
        %v1236 = vpop.f32.mrf.mxu0
        %v1237 = vadd.f32 %v1178, %v1236
        %v1238 = vpop.f32.mrf.mxu0
        %1239 = vdwg.mxu0
        %v1240 = vadd.f32 %v1122, %v1237
        %v1241 = vsel %vm845, %v1240, 0.0
        %1242 = vadd.xlane.f32.xlu0 %v1241
        %v1243 = vpop.xlane.xlu0 %1242
        %v1244 = vmul.f32 %v1243, %v1099
        %v1245 = vsub.f32 %v1240, %v1244
        %v1246 = vmul.f32 %v1245, %v1245
        %v1247 = vsel %vm845, %v1246, 0.0
        %1248 = vadd.xlane.f32.xlu0 %v1247
        %v1249 = vpop.xlane.xlu0 %1248
        %v1250 = vmul.f32 %v1249, %v1099
        %v1251 = vadd.f32 %v1250, 1e-05
        %v1252 = vrsqrt.pop %v1251
        %v1253 = vmul.f32 %v1252, %v1251
        %v1254 = vmul.f32 %v1253, %v1252
        %v1255 = vmul.f32 0.5, %v1254
        %v1256 = vsub.f32 1.5, %v1255
        %v1257 = vmul.f32 %v1252, %v1256
        %vm1258 = vweird.f32 %v1251
        %vm1259 = vweird.f32 %v1252
        %vm1260 = vmor %vm1258, %vm1259
        %v1261 = vsel %vm1260, %v1252, %v1257
        %v1262 = vmul.f32 %v1245, %v1261
        %v1263 = vperm.slane %v515, 0
        %v1264 = vmul.f32 %v1262, %v1263
        %v1265 = vperm.slane %v516, 0
        %v1266 = vadd.f32 %v1264, %v1265
        %v1267 = vpack.c.bf16 %v1266, %v1266
        %v1268 = vld [vmem:[%s12] sm:$0xf]
        %v1269 = vld [vmem:[%s12 + $0x4] sm:$0xf]
        %v1270 = vld [vmem:[%s12 + $0x8] sm:$0xf]
        %v1271 = vld [vmem:[%s12 + $0xc] sm:$0xf]
        %v1272 = vld [vmem:[%s13] sm:$0x1]
        %v1274 = vperm.slane %v1272, 0
        %v1280 = vunpack.c.l.b16 %v1268
        %v1281 = vunpack.c.l.b16 %v1269
        %v1282 = vunpack.c.l.b16 %v1270
        %v1283 = vunpack.c.l.b16 %v1271
        %v1284 = vpack.c.b16 %v1281, %v1280
        %v1285 = vpack.c.b16 %v1283, %v1282
        %v1289 = vsel %vm845, %v1267, 0
        %1291 = vmatpush.bf16.msra.mxu0 0
        %1292 = vmatpush.bf16.msra.mxu0 0
        %1293 = vmatpush.bf16.msra.mxu0 0
        %1294 = vmatpush.bf16.msra.mxu0 0
        %1295 = vmatpush.bf16.msra.mxu0 0
        %1296 = vmatpush.bf16.msra.mxu0 0
        %1297 = vmatpush.bf16.msra.mxu0 %v1285
        %1298 = vmatpush.bf16.msra.mxu0 %v1284
        %1299 = vmatmul.bf16.gmra.mxu0 %v1289
        %v1300 = vpop.f32.mrf.mxu0
        %v1301 = vadd.f32 %v1274, %v1300
        %v1302 = vpop.f32.mrf.mxu0
        %1303 = vdwg.mxu0
        %v1304 = vadd.f32 %v1301, %v503
        %1305 = vst [vmem:[%s487] sm:$0xff] %v1304
        %s1306 = sand.u32 %s345, 1
        %s1307 = scalar_lea.sflag [#allocation3], %s1306
        %s1308 = sand.u32 %s345, 1
        %s1309 = smul.addr %s1308, 8
        %s1310 = scalar_lea.vmem [#allocation2], %s1309
        // Predicated region
        $region77: #{tpu_custom_call.1} parent=75 // pred_check
          %p1311 = pneg %p355
        $region78: #{tpu_custom_call.1} parent=75 // pred_check_branch
          %1313 = sbr.rel (%p1311) target = $region80
        $region79: #{tpu_custom_call.1} parent=75 // pred_region
          %1315 = vsyncadd %s1307, 0
          %s1316 = smul.addr %s28, 8
          %s1317 = scalar_lea.hbm %s14, %s1316
          %s1319 = sshll.u32 %s1310, 4
          %s1320 = int_to_ptr.vmem [resolvable:$true] %s1319
          %s1321 = sshll.u32 %s1317, 4
          %s1322 = int_to_ptr.hbm [resolvable:$true] %s1321
          %1324 = dma.vmem_to_hbm [thread:$0]  %s1320, 128, %s1322, %s1307
        $region80: #{tpu_custom_call.1} parent=75 // pred_fallthru
          _
      $region76: #{tpu_custom_call.1} parent=5 // pred_fallthru
        _
      %p1325 = scmp.le.s32.totalorder 2, %s23
      // Predicated region
      $region81: #{tpu_custom_call.1} parent=5 // pred_check
        %p1326 = pneg %p1325
      $region82: #{tpu_custom_call.1} parent=5 // pred_check_branch
        %1328 = sbr.rel (%p1326) target = $region84
      $region83: #{tpu_custom_call.1} parent=5 // pred_region
        %s1329 = ssub.s32 %s23, 2
        // Predicated region
        $region85: #{tpu_custom_call.1} parent=83 // pred_check
          %p1330 = pneg %p361
        $region86: #{tpu_custom_call.1} parent=83 // pred_check_branch
          %1332 = sbr.rel (%p1330) target = $region88
        $region87: #{tpu_custom_call.1} parent=83 // pred_region
          %s1333 = sand.u32 %s346, 1
          %s1334 = scalar_lea.sflag [#allocation3], %s1333
          %s1335 = sand.u32 %s346, 1
          %s1336 = smul.addr %s1335, 8
          %s1337 = scalar_lea.vmem [#allocation2], %s1336
          %1339 = dma.done %s1334, 128
        $region88: #{tpu_custom_call.1} parent=83 // pred_fallthru
          _
      $region84: #{tpu_custom_call.1} parent=5 // pred_fallthru
        _
    $region6: #{tpu_custom_call.1} parent=1 // loop_footer
      %s27 = sadd.s32 1, %s23
    $region7: #{tpu_custom_call.1} parent=1 // loop_footer_branch
      %22 = sbr.rel target = $region3
    $region8: #{tpu_custom_call.1} parent=1 // loop_exit
      _
    %1340 = vsyncpa [#allocation3], 1
    %s1341 = scalar_lea.sflag [#allocation3], 1
    %1342 = vsyncpa %s1341, 1

</llo_original>
